<compile_context>
chip_gen: v7x
topology: tpu7x:2x2x1
jax: 0.10.0
libtpu: 0.0.40
codegen_flags: <defaults>
</compile_context>

<pallas_src>
import jax
import jax.numpy as jnp
from jax.experimental import pallas as pl
from jax.experimental.pallas import tpu as pltpu  # noqa: F401  (TPU backend / memory spaces)


def _hfm_kernel(x_ref, mt_ref, c_ref, s_ref, o_ref):
    """Single-step kernel: Y = Re( G (M . (F X F)) G ) / (H*W) for all images."""
    X = x_ref[...]                       # (N, H, W)  real images, N = B*C
    Mt = mt_ref[...]                     # (N, W, H)  static mask, (v, u) layout
    Cm = c_ref[...]                      # (H, H)     cos(2*pi*u*h/H), symmetric
    Sm = s_ref[...]                      # (H, H)     sin(2*pi*u*h/H), symmetric
    n_img, h_dim, w_dim = X.shape
    inv_n = 1.0 / float(h_dim * w_dim)

    def rmm(z, a):
        # (N, R, K) @ (K, M) -> (N, R, M): collapse leading dims so the MXU sees
        # a plain rank-2 matmul (R is a multiple of 8 -> reshape is layout-free).
        n, r, k = z.shape
        out = jnp.dot(z.reshape(n * r, k), a, preferred_element_type=jnp.float32)
        return out.reshape(n, r, a.shape[1])

    def swap(z):
        return jnp.swapaxes(z, 1, 2)     # minor-dim transpose (XLU), tiny data

    # ---- forward 2-D DFT of real X (separable): A = F X F, F = Cm - i*Sm ----
    Ur = rmm(X, Cm)                      # Re(X @ F)          (N, H, V)
    Ui = -rmm(X, Sm)                     # Im(X @ F)
    Urt, Uit = swap(Ur), swap(Ui)        # (N, V, H)
    Art = rmm(Urt, Cm) + rmm(Uit, Sm)    # Re(A)^T            (N, V, U)
    Ait = rmm(Uit, Cm) - rmm(Urt, Sm)    # Im(A)^T
    # ---- static frequency-domain mask (err_rate > bound), (v, u) layout ----
    Brt = Mt * Art
    Bit = Mt * Ait
    # ---- inverse 2-D DFT, real part only: Y = Re(G B G)/(H*W), G = Cm + i*Sm ----
    Vrt = rmm(Brt, Cm) - rmm(Bit, Sm)    # Re(G @ B)^T        (N, V, H)
    Vit = rmm(Bit, Cm) + rmm(Brt, Sm)    # Im(G @ B)^T
    Vr, Vi = swap(Vrt), swap(Vit)        # (N, H, V)
    Y = (rmm(Vr, Cm) - rmm(Vi, Sm)) * inv_n
    o_ref[...] = Y.astype(o_ref.dtype)


def high_frequence_mask(x: jax.Array, err_mask: jax.Array) -> jax.Array:
    """x: (B, C, H, W) f32; err_mask: (C, H, W) {0,1} f32 -> (B, C, H, W) f32."""
    B, C, H, W = x.shape
    assert err_mask.shape == (C, H, W)
    assert H == W, "HighFrequenceMask hardcodes square 32x32 images"
    N = B * C

    # Init-time constants (the mask is static in the module): 32-point DFT
    # cos/sin matrices (~8 KiB) and the frequency mask pre-transposed to the
    # (v, u) layout used inside the kernel and tiled over batch (n = b*C + c).
    k = jnp.arange(H, dtype=jnp.int32)
    phase = (2.0 * jnp.pi / H) * ((k[:, None] * k[None, :]) % H).astype(jnp.float32)
    cmat = jnp.cos(phase)                                    # (H, H), symmetric
    smat = jnp.sin(phase)                                    # (H, H), symmetric
    m_t = jnp.tile(jnp.swapaxes(err_mask.astype(jnp.float32), 1, 2), (B, 1, 1))

    x_nhw = x.reshape(N, H, W)

    y = pl.pallas_call(
        _hfm_kernel,
        out_shape=jax.ShapeDtypeStruct((N, H, W), jnp.float32),
        grid=(1,),  # single step: whole problem (~0.2 MiB) fits VMEM on every generation
        in_specs=[
            pl.BlockSpec((N, H, W), lambda i: (0, 0, 0)),    # images
            pl.BlockSpec((N, W, H), lambda i: (0, 0, 0)),    # mask^T (static, ~24 KiB)
            pl.BlockSpec((H, H), lambda i: (0, 0)),          # cos DFT matrix (4 KiB)
            pl.BlockSpec((H, H), lambda i: (0, 0)),          # sin DFT matrix (4 KiB)
        ],
        out_specs=pl.BlockSpec((N, H, W), lambda i: (0, 0, 0)),
    )(x_nhw, m_t, cmat, smat)

    return y.reshape(B, C, H, W)


if __name__ == "__main__":
    # Module hardcodes CIFAR-like size [3, 32, 32]; use batch=2.
    B, C, H, W = 2, 3, 32, 32
    ERR_RATE_BOUND = 0.4183

    key = jax.random.PRNGKey(0)
    kx, ke = jax.random.split(key)
    x = jax.random.uniform(kx, (B, C, H, W), dtype=jnp.float32)

    # TODO(synk): the real module loads err_rate from '/data/.../err_c100.pt';
    # synthesize a deterministic stand-in here and threshold it like forward().
    err_rate = jax.random.uniform(ke, (C, H, W), dtype=jnp.float32)
    err_mask = (err_rate > ERR_RATE_BOUND).astype(jnp.float32)

    y = high_frequence_mask(x, err_mask)
    y = jax.block_until_ready(y)

    # Cross-check against a plain-JAX FFT reference of the module's forward().
    ref = jnp.real(jnp.fft.ifft2(jnp.fft.fft2(x) * err_mask[None])).astype(jnp.float32)
    assert y.shape == (B, C, H, W)
    assert jnp.allclose(y, ref, atol=2e-3, rtol=2e-3), "mismatch vs FFT reference"

    print("KERNEL_OK")
</pallas_src>

<mosaic_0001>
module attributes {stable_mosaic.version = 11 : i64} {
  func.func @_hfm_kernel(%arg0: i32, %arg1: memref<6x32x32xf32, #tpu.memory_space<vmem>>, %arg2: memref<6x32x32xf32, #tpu.memory_space<vmem>>, %arg3: memref<32x32xf32, #tpu.memory_space<vmem>>, %arg4: memref<32x32xf32, #tpu.memory_space<vmem>>, %arg5: memref<6x32x32xf32, #tpu.memory_space<vmem>>) attributes {dimension_semantics = [#tpu.dimension_semantics<arbitrary>], iteration_bounds = array<i64: 1>, scalar_prefetch = 0 : i64, scratch_operands = 0 : i64, tpu.core_type = #tpu.core_type<tc>, window_params = [{pipeline_mode = #tpu.pipeline_mode<synchronous>, transform_indices = @transform_0, window_bounds = array<i64: 6, 32, 32>}, {pipeline_mode = #tpu.pipeline_mode<synchronous>, transform_indices = @transform_1, window_bounds = array<i64: 6, 32, 32>}, {pipeline_mode = #tpu.pipeline_mode<synchronous>, transform_indices = @transform_2, window_bounds = array<i64: 32, 32>}, {pipeline_mode = #tpu.pipeline_mode<synchronous>, transform_indices = @transform_3, window_bounds = array<i64: 32, 32>}, {pipeline_mode = #tpu.pipeline_mode<synchronous>, transform_indices = @transform_4, window_bounds = array<i64: 6, 32, 32>}]} {
    %c0 = arith.constant 0 : index
    %c0_0 = arith.constant 0 : index
    %c0_1 = arith.constant 0 : index
    %0 = vector.load %arg1[%c0, %c0_0, %c0_1] : memref<6x32x32xf32, #tpu.memory_space<vmem>>, vector<6x32x32xf32>
    %c0_2 = arith.constant 0 : index
    %c0_3 = arith.constant 0 : index
    %c0_4 = arith.constant 0 : index
    %1 = vector.load %arg2[%c0_2, %c0_3, %c0_4] : memref<6x32x32xf32, #tpu.memory_space<vmem>>, vector<6x32x32xf32>
    %c0_5 = arith.constant 0 : index
    %c0_6 = arith.constant 0 : index
    %2 = vector.load %arg3[%c0_5, %c0_6] : memref<32x32xf32, #tpu.memory_space<vmem>>, vector<32x32xf32>
    %c0_7 = arith.constant 0 : index
    %c0_8 = arith.constant 0 : index
    %3 = vector.load %arg4[%c0_7, %c0_8] : memref<32x32xf32, #tpu.memory_space<vmem>>, vector<32x32xf32>
    %4 = vector.shape_cast %0 : vector<6x32x32xf32> to vector<192x32xf32>
    %cst = arith.constant dense<0.000000e+00> : vector<192x32xf32>
    %5 = tpu.matmul %4, %2, %cst {dimension_numbers = #tpu.dot_dimension_numbers<[1], [0], [0], [1], [0, 0, 1, 1], [], []>} : vector<192x32xf32>, vector<32x32xf32>, vector<192x32xf32> -> vector<192x32xf32>
    %6 = vector.shape_cast %5 : vector<192x32xf32> to vector<6x32x32xf32>
    %7 = vector.shape_cast %0 : vector<6x32x32xf32> to vector<192x32xf32>
    %cst_9 = arith.constant dense<0.000000e+00> : vector<192x32xf32>
    %8 = tpu.matmul %7, %3, %cst_9 {dimension_numbers = #tpu.dot_dimension_numbers<[1], [0], [0], [1], [0, 0, 1, 1], [], []>} : vector<192x32xf32>, vector<32x32xf32>, vector<192x32xf32> -> vector<192x32xf32>
    %9 = vector.shape_cast %8 : vector<192x32xf32> to vector<6x32x32xf32>
    %cst_10 = arith.constant 0.000000e+00 : f32
    %10 = vector.broadcast %cst_10 : f32 to vector<6x32x32xf32>
    %11 = arith.subf %10, %9 : vector<6x32x32xf32>
    %12 = tpu.transpose %6, [0, 2, 1] : vector<6x32x32xf32> -> vector<6x32x32xf32>
    %13 = tpu.transpose %11, [0, 2, 1] : vector<6x32x32xf32> -> vector<6x32x32xf32>
    %14 = vector.shape_cast %12 : vector<6x32x32xf32> to vector<192x32xf32>
    %cst_11 = arith.constant dense<0.000000e+00> : vector<192x32xf32>
    %15 = tpu.matmul %14, %2, %cst_11 {dimension_numbers = #tpu.dot_dimension_numbers<[1], [0], [0], [1], [0, 0, 1, 1], [], []>} : vector<192x32xf32>, vector<32x32xf32>, vector<192x32xf32> -> vector<192x32xf32>
    %16 = vector.shape_cast %15 : vector<192x32xf32> to vector<6x32x32xf32>
    %17 = vector.shape_cast %13 : vector<6x32x32xf32> to vector<192x32xf32>
    %cst_12 = arith.constant dense<0.000000e+00> : vector<192x32xf32>
    %18 = tpu.matmul %17, %3, %cst_12 {dimension_numbers = #tpu.dot_dimension_numbers<[1], [0], [0], [1], [0, 0, 1, 1], [], []>} : vector<192x32xf32>, vector<32x32xf32>, vector<192x32xf32> -> vector<192x32xf32>
    %19 = vector.shape_cast %18 : vector<192x32xf32> to vector<6x32x32xf32>
    %20 = arith.addf %16, %19 : vector<6x32x32xf32>
    %21 = vector.shape_cast %13 : vector<6x32x32xf32> to vector<192x32xf32>
    %cst_13 = arith.constant dense<0.000000e+00> : vector<192x32xf32>
    %22 = tpu.matmul %21, %2, %cst_13 {dimension_numbers = #tpu.dot_dimension_numbers<[1], [0], [0], [1], [0, 0, 1, 1], [], []>} : vector<192x32xf32>, vector<32x32xf32>, vector<192x32xf32> -> vector<192x32xf32>
    %23 = vector.shape_cast %22 : vector<192x32xf32> to vector<6x32x32xf32>
    %24 = vector.shape_cast %12 : vector<6x32x32xf32> to vector<192x32xf32>
    %cst_14 = arith.constant dense<0.000000e+00> : vector<192x32xf32>
    %25 = tpu.matmul %24, %3, %cst_14 {dimension_numbers = #tpu.dot_dimension_numbers<[1], [0], [0], [1], [0, 0, 1, 1], [], []>} : vector<192x32xf32>, vector<32x32xf32>, vector<192x32xf32> -> vector<192x32xf32>
    %26 = vector.shape_cast %25 : vector<192x32xf32> to vector<6x32x32xf32>
    %27 = arith.subf %23, %26 : vector<6x32x32xf32>
    %28 = arith.mulf %1, %20 : vector<6x32x32xf32>
    %29 = arith.mulf %1, %27 : vector<6x32x32xf32>
    %30 = vector.shape_cast %28 : vector<6x32x32xf32> to vector<192x32xf32>
    %cst_15 = arith.constant dense<0.000000e+00> : vector<192x32xf32>
    %31 = tpu.matmul %30, %2, %cst_15 {dimension_numbers = #tpu.dot_dimension_numbers<[1], [0], [0], [1], [0, 0, 1, 1], [], []>} : vector<192x32xf32>, vector<32x32xf32>, vector<192x32xf32> -> vector<192x32xf32>
    %32 = vector.shape_cast %31 : vector<192x32xf32> to vector<6x32x32xf32>
    %33 = vector.shape_cast %29 : vector<6x32x32xf32> to vector<192x32xf32>
    %cst_16 = arith.constant dense<0.000000e+00> : vector<192x32xf32>
    %34 = tpu.matmul %33, %3, %cst_16 {dimension_numbers = #tpu.dot_dimension_numbers<[1], [0], [0], [1], [0, 0, 1, 1], [], []>} : vector<192x32xf32>, vector<32x32xf32>, vector<192x32xf32> -> vector<192x32xf32>
    %35 = vector.shape_cast %34 : vector<192x32xf32> to vector<6x32x32xf32>
    %36 = arith.subf %32, %35 : vector<6x32x32xf32>
    %37 = vector.shape_cast %29 : vector<6x32x32xf32> to vector<192x32xf32>
    %cst_17 = arith.constant dense<0.000000e+00> : vector<192x32xf32>
    %38 = tpu.matmul %37, %2, %cst_17 {dimension_numbers = #tpu.dot_dimension_numbers<[1], [0], [0], [1], [0, 0, 1, 1], [], []>} : vector<192x32xf32>, vector<32x32xf32>, vector<192x32xf32> -> vector<192x32xf32>
    %39 = vector.shape_cast %38 : vector<192x32xf32> to vector<6x32x32xf32>
    %40 = vector.shape_cast %28 : vector<6x32x32xf32> to vector<192x32xf32>
    %cst_18 = arith.constant dense<0.000000e+00> : vector<192x32xf32>
    %41 = tpu.matmul %40, %3, %cst_18 {dimension_numbers = #tpu.dot_dimension_numbers<[1], [0], [0], [1], [0, 0, 1, 1], [], []>} : vector<192x32xf32>, vector<32x32xf32>, vector<192x32xf32> -> vector<192x32xf32>
    %42 = vector.shape_cast %41 : vector<192x32xf32> to vector<6x32x32xf32>
    %43 = arith.addf %39, %42 : vector<6x32x32xf32>
    %44 = tpu.transpose %36, [0, 2, 1] : vector<6x32x32xf32> -> vector<6x32x32xf32>
    %45 = tpu.transpose %43, [0, 2, 1] : vector<6x32x32xf32> -> vector<6x32x32xf32>
    %46 = vector.shape_cast %44 : vector<6x32x32xf32> to vector<192x32xf32>
    %cst_19 = arith.constant dense<0.000000e+00> : vector<192x32xf32>
    %47 = tpu.matmul %46, %2, %cst_19 {dimension_numbers = #tpu.dot_dimension_numbers<[1], [0], [0], [1], [0, 0, 1, 1], [], []>} : vector<192x32xf32>, vector<32x32xf32>, vector<192x32xf32> -> vector<192x32xf32>
    %48 = vector.shape_cast %47 : vector<192x32xf32> to vector<6x32x32xf32>
    %49 = vector.shape_cast %45 : vector<6x32x32xf32> to vector<192x32xf32>
    %cst_20 = arith.constant dense<0.000000e+00> : vector<192x32xf32>
    %50 = tpu.matmul %49, %3, %cst_20 {dimension_numbers = #tpu.dot_dimension_numbers<[1], [0], [0], [1], [0, 0, 1, 1], [], []>} : vector<192x32xf32>, vector<32x32xf32>, vector<192x32xf32> -> vector<192x32xf32>
    %51 = vector.shape_cast %50 : vector<192x32xf32> to vector<6x32x32xf32>
    %52 = arith.subf %48, %51 : vector<6x32x32xf32>
    %cst_21 = arith.constant 9.765625E-4 : f32
    %53 = vector.broadcast %cst_21 : f32 to vector<6x32x32xf32>
    %54 = arith.mulf %52, %53 : vector<6x32x32xf32>
    %c0_22 = arith.constant 0 : index
    %c0_23 = arith.constant 0 : index
    %c0_24 = arith.constant 0 : index
    %55 = vector.load %arg5[%c0_22, %c0_23, %c0_24] : memref<6x32x32xf32, #tpu.memory_space<vmem>>, vector<6x32x32xf32>
    tpu.vector_store %arg5[%c0_22, %c0_23, %c0_24], %54 {strides = array<i32>} : memref<6x32x32xf32, #tpu.memory_space<vmem>>, vector<6x32x32xf32>,
    return
  }
  func.func @transform_0(%arg0: i32) -> (i32, i32, i32) {
    %c0_i32 = arith.constant 0 : i32
    %c0_i32_0 = arith.constant 0 : i32
    %c0_i32_1 = arith.constant 0 : i32
    %c0_i32_2 = arith.constant 0 : i32
    return %c0_i32, %c0_i32_0, %c0_i32_1 : i32, i32, i32
  }
  func.func @transform_1(%arg0: i32) -> (i32, i32, i32) {
    %c0_i32 = arith.constant 0 : i32
    %c0_i32_0 = arith.constant 0 : i32
    %c0_i32_1 = arith.constant 0 : i32
    %c0_i32_2 = arith.constant 0 : i32
    return %c0_i32, %c0_i32_0, %c0_i32_1 : i32, i32, i32
  }
  func.func @transform_2(%arg0: i32) -> (i32, i32) {
    %c0_i32 = arith.constant 0 : i32
    %c0_i32_0 = arith.constant 0 : i32
    %c0_i32_1 = arith.constant 0 : i32
    return %c0_i32, %c0_i32_0 : i32, i32
  }
  func.func @transform_3(%arg0: i32) -> (i32, i32) {
    %c0_i32 = arith.constant 0 : i32
    %c0_i32_0 = arith.constant 0 : i32
    %c0_i32_1 = arith.constant 0 : i32
    return %c0_i32, %c0_i32_0 : i32, i32
  }
  func.func @transform_4(%arg0: i32) -> (i32, i32, i32) {
    %c0_i32 = arith.constant 0 : i32
    %c0_i32_0 = arith.constant 0 : i32
    %c0_i32_1 = arith.constant 0 : i32
    %c0_i32_2 = arith.constant 0 : i32
    return %c0_i32, %c0_i32_0, %c0_i32_1 : i32, i32, i32
  }
}

</mosaic_0001>

<llo_original>
// kernel: tpu_custom_call.1
$region0: #{tpu_custom_call.1}
  #allocation0 [shape = 'u32[]', space=smem, size = 0x4, offset = 0x4, fixed_abs, tag = 'smem constant byte address 0x4 - core index']
  #allocation1 [shape = 'u32[144,128]{1,0:T(1,128)}', space=vmem, size = 0x12000, scoped, tag = 'internal scratch']
  %s0 = inlined_call_operand.hbm [shape: f32[6,32,32], index: 0, kind: input, shape index: {}]
  %s1 = inlined_call_operand.hbm [shape: f32[6,32,32], index: 1, kind: input, shape index: {}]
  %s2 = inlined_call_operand.hbm [shape: f32[32,32], index: 2, kind: input, shape index: {}]
  %s3 = inlined_call_operand.hbm [shape: f32[32,32], index: 3, kind: input, shape index: {}]
  %s4 = inlined_call_operand.hbm [shape: f32[6,32,32], index: 4, kind: output, shape index: {}]
  %s5 = sld [smem:[#allocation0]]
  $region42: #{tpu_custom_call.1} parent=0
    _
  %s7 = ssub.s32 1, %s5
  %s8 = scalar_select 0, %s7, %s5
  $region1: #{tpu_custom_call.1} parent=0
    #allocation2 [shape = 'u8[98304]{0}', space=vmem, size = 0x18000, scoped, tag = 'input window, operand 0, single buffered']
    #allocation3 [shape = 's32[1]{0}', space=sflag, size = 0x4, scoped, tag = 'scoped memory for tpu_custom_call.1']
    #allocation4 [shape = 's32[1]{0}', space=sflag, size = 0x4, scoped, tag = 'scoped memory for tpu_custom_call.1']
    #allocation5 [shape = 'u8[98304]{0}', space=vmem, size = 0x18000, scoped, tag = 'input window, operand 1, single buffered']
    #allocation6 [shape = 's32[1]{0}', space=sflag, size = 0x4, scoped, tag = 'scoped memory for tpu_custom_call.1']
    #allocation7 [shape = 'u8[16384]{0}', space=vmem, size = 0x4000, scoped, tag = 'input window, operand 2, single buffered']
    #allocation8 [shape = 'u8[16384]{0}', space=vmem, size = 0x4000, scoped, tag = 'input window, operand 3, single buffered']
    #allocation9 [shape = 's32[1]{0}', space=sflag, size = 0x4, scoped, tag = 'scoped memory for tpu_custom_call.1']
    #allocation10 [shape = 'u8[98304]{0}', space=vmem, size = 0x18000, scoped, tag = 'output window, operand 0, single buffered']
    %9 = vsyncpa [#allocation3], 0
    %10 = vsyncpa [#allocation6], 0
    %11 = vsyncpa [#allocation9], 0
    %12 = vsyncpa [#allocation4], 0
    // Predicated region
    $region2: #{tpu_custom_call.1} parent=1 // pred_check
      _
    $region3: #{tpu_custom_call.1} parent=1 // pred_check_branch
      %14 = sbr.rel (0) target = $region5
    $region4: #{tpu_custom_call.1} parent=1 // pred_region
      %s16 = ssub.s32 3072, 3072
      %17 = vsyncadd [#allocation3], %s16
      %s18 = sshll.u32 [#allocation2], 4
      %s19 = int_to_ptr.vmem [resolvable:$true] %s18
      %24 = dma.hbm_to_vmem [thread:$0]  %s0, 3072, %s19, [#allocation3], 128, 128, 8
    $region5: #{tpu_custom_call.1} parent=1 // pred_fallthru
      _
    // Predicated region
    $region6: #{tpu_custom_call.1} parent=1 // pred_check
      _
    $region7: #{tpu_custom_call.1} parent=1 // pred_check_branch
      %26 = sbr.rel (0) target = $region9
    $region8: #{tpu_custom_call.1} parent=1 // pred_region
      %s28 = ssub.s32 3072, 3072
      %29 = vsyncadd [#allocation6], %s28
      %s30 = sshll.u32 [#allocation5], 4
      %s31 = int_to_ptr.vmem [resolvable:$true] %s30
      %36 = dma.hbm_to_vmem [thread:$0]  %s1, 3072, %s31, [#allocation6], 128, 128, 8
    $region9: #{tpu_custom_call.1} parent=1 // pred_fallthru
      _
    // Predicated region
    $region10: #{tpu_custom_call.1} parent=1 // pred_check
      _
    $region11: #{tpu_custom_call.1} parent=1 // pred_check_branch
      %38 = sbr.rel (0) target = $region13
    $region12: #{tpu_custom_call.1} parent=1 // pred_region
      %s40 = ssub.s32 512, 512
      %41 = vsyncadd [#allocation6], %s40
      %s42 = sshll.u32 [#allocation7], 4
      %s43 = int_to_ptr.vmem [resolvable:$true] %s42
      %48 = dma.hbm_to_vmem [thread:$0]  %s2, 512, %s43, [#allocation6], 128, 128, 8
    $region13: #{tpu_custom_call.1} parent=1 // pred_fallthru
      _
    // Predicated region
    $region14: #{tpu_custom_call.1} parent=1 // pred_check
      _
    $region15: #{tpu_custom_call.1} parent=1 // pred_check_branch
      %50 = sbr.rel (0) target = $region17
    $region16: #{tpu_custom_call.1} parent=1 // pred_region
      %s52 = ssub.s32 512, 512
      %53 = vsyncadd [#allocation9], %s52
      %s54 = sshll.u32 [#allocation8], 4
      %s55 = int_to_ptr.vmem [resolvable:$true] %s54
      %60 = dma.hbm_to_vmem [thread:$0]  %s3, 512, %s55, [#allocation9], 128, 128, 8
    $region17: #{tpu_custom_call.1} parent=1 // pred_fallthru
      _
    // Predicated region
    $region18: #{tpu_custom_call.1} parent=1 // pred_check
      _
    $region19: #{tpu_custom_call.1} parent=1 // pred_check_branch
      %62 = sbr.rel (0) target = $region21
    $region20: #{tpu_custom_call.1} parent=1 // pred_region
      %63 = dma.done [#allocation3], 3072
    $region21: #{tpu_custom_call.1} parent=1 // pred_fallthru
      _
    // Predicated region
    $region22: #{tpu_custom_call.1} parent=1 // pred_check
      _
    $region23: #{tpu_custom_call.1} parent=1 // pred_check_branch
      %65 = sbr.rel (0) target = $region25
    $region24: #{tpu_custom_call.1} parent=1 // pred_region
      %66 = dma.done [#allocation6], 3072
    $region25: #{tpu_custom_call.1} parent=1 // pred_fallthru
      _
    // Predicated region
    $region26: #{tpu_custom_call.1} parent=1 // pred_check
      _
    $region27: #{tpu_custom_call.1} parent=1 // pred_check_branch
      %68 = sbr.rel (0) target = $region29
    $region28: #{tpu_custom_call.1} parent=1 // pred_region
      %69 = dma.done [#allocation6], 512
    $region29: #{tpu_custom_call.1} parent=1 // pred_fallthru
      _
    // Predicated region
    $region30: #{tpu_custom_call.1} parent=1 // pred_check
      _
    $region31: #{tpu_custom_call.1} parent=1 // pred_check_branch
      %71 = sbr.rel (0) target = $region33
    $region32: #{tpu_custom_call.1} parent=1 // pred_region
      %72 = dma.done [#allocation9], 512
    $region33: #{tpu_custom_call.1} parent=1 // pred_fallthru
      _
    %v73 = vld [vmem:[#allocation2] sm:$0xff]
    %v74 = vld [vmem:[#allocation2 + $0x8] sm:$0xff]
    %v75 = vld [vmem:[#allocation2 + $0x10] sm:$0xff]
    %v76 = vld [vmem:[#allocation2 + $0x18] sm:$0xff]
    %v77 = vld [vmem:[#allocation2 + $0x20] sm:$0xff]
    %v78 = vld [vmem:[#allocation2 + $0x28] sm:$0xff]
    %v79 = vld [vmem:[#allocation2 + $0x30] sm:$0xff]
    %v80 = vld [vmem:[#allocation2 + $0x38] sm:$0xff]
    %v81 = vld [vmem:[#allocation2 + $0x40] sm:$0xff]
    %v82 = vld [vmem:[#allocation2 + $0x48] sm:$0xff]
    %v83 = vld [vmem:[#allocation2 + $0x50] sm:$0xff]
    %v84 = vld [vmem:[#allocation2 + $0x58] sm:$0xff]
    %v85 = vld [vmem:[#allocation2 + $0x60] sm:$0xff]
    %v86 = vld [vmem:[#allocation2 + $0x68] sm:$0xff]
    %v87 = vld [vmem:[#allocation2 + $0x70] sm:$0xff]
    %v88 = vld [vmem:[#allocation2 + $0x78] sm:$0xff]
    %v89 = vld [vmem:[#allocation2 + $0x80] sm:$0xff]
    %v90 = vld [vmem:[#allocation2 + $0x88] sm:$0xff]
    %v91 = vld [vmem:[#allocation2 + $0x90] sm:$0xff]
    %v92 = vld [vmem:[#allocation2 + $0x98] sm:$0xff]
    %v93 = vld [vmem:[#allocation2 + $0xa0] sm:$0xff]
    %v94 = vld [vmem:[#allocation2 + $0xa8] sm:$0xff]
    %v95 = vld [vmem:[#allocation2 + $0xb0] sm:$0xff]
    %v96 = vld [vmem:[#allocation2 + $0xb8] sm:$0xff]
    %v97 = vld [vmem:[#allocation5] sm:$0xff]
    %v98 = vld [vmem:[#allocation5 + $0x8] sm:$0xff]
    %v99 = vld [vmem:[#allocation5 + $0x10] sm:$0xff]
    %v100 = vld [vmem:[#allocation5 + $0x18] sm:$0xff]
    %v101 = vld [vmem:[#allocation5 + $0x20] sm:$0xff]
    %v102 = vld [vmem:[#allocation5 + $0x28] sm:$0xff]
    %v103 = vld [vmem:[#allocation5 + $0x30] sm:$0xff]
    %v104 = vld [vmem:[#allocation5 + $0x38] sm:$0xff]
    %v105 = vld [vmem:[#allocation5 + $0x40] sm:$0xff]
    %v106 = vld [vmem:[#allocation5 + $0x48] sm:$0xff]
    %v107 = vld [vmem:[#allocation5 + $0x50] sm:$0xff]
    %v108 = vld [vmem:[#allocation5 + $0x58] sm:$0xff]
    %v109 = vld [vmem:[#allocation5 + $0x60] sm:$0xff]
    %v110 = vld [vmem:[#allocation5 + $0x68] sm:$0xff]
    %v111 = vld [vmem:[#allocation5 + $0x70] sm:$0xff]
    %v112 = vld [vmem:[#allocation5 + $0x78] sm:$0xff]
    %v113 = vld [vmem:[#allocation5 + $0x80] sm:$0xff]
    %v114 = vld [vmem:[#allocation5 + $0x88] sm:$0xff]
    %v115 = vld [vmem:[#allocation5 + $0x90] sm:$0xff]
    %v116 = vld [vmem:[#allocation5 + $0x98] sm:$0xff]
    %v117 = vld [vmem:[#allocation5 + $0xa0] sm:$0xff]
    %v118 = vld [vmem:[#allocation5 + $0xa8] sm:$0xff]
    %v119 = vld [vmem:[#allocation5 + $0xb0] sm:$0xff]
    %v120 = vld [vmem:[#allocation5 + $0xb8] sm:$0xff]
    %v121 = vld [vmem:[#allocation7] sm:$0xff]
    %v122 = vld [vmem:[#allocation7 + $0x8] sm:$0xff]
    %v123 = vld [vmem:[#allocation7 + $0x10] sm:$0xff]
    %v124 = vld [vmem:[#allocation7 + $0x18] sm:$0xff]
    %v125 = vld [vmem:[#allocation8] sm:$0xff]
    %v126 = vld [vmem:[#allocation8 + $0x8] sm:$0xff]
    %v127 = vld [vmem:[#allocation8 + $0x10] sm:$0xff]
    %v128 = vld [vmem:[#allocation8 + $0x18] sm:$0xff]
    %vm129 = vcmask 261120
    %v131 = vsel %vm129, %v73, 0
    %v134 = vsel %vm129, %v74, 0
    %v137 = vsel %vm129, %v75, 0
    %v140 = vsel %vm129, %v76, 0
    %v143 = vsel %vm129, %v77, 0
    %v146 = vsel %vm129, %v78, 0
    %v149 = vsel %vm129, %v79, 0
    %v152 = vsel %vm129, %v80, 0
    %v155 = vsel %vm129, %v81, 0
    %v158 = vsel %vm129, %v82, 0
    %v161 = vsel %vm129, %v83, 0
    %v164 = vsel %vm129, %v84, 0
    %v167 = vsel %vm129, %v85, 0
    %v170 = vsel %vm129, %v86, 0
    %v173 = vsel %vm129, %v87, 0
    %v176 = vsel %vm129, %v88, 0
    %v179 = vsel %vm129, %v89, 0
    %v182 = vsel %vm129, %v90, 0
    %v185 = vsel %vm129, %v91, 0
    %v188 = vsel %vm129, %v92, 0
    %v191 = vsel %vm129, %v93, 0
    %v194 = vsel %vm129, %v94, 0
    %v197 = vsel %vm129, %v95, 0
    %v200 = vsel %vm129, %v96, 0
    %202 = vmatprep.subr.mxu0 0.0
    %203 = vmatpush1.msra.mxu0 %v121
    %204 = vmatprep.subr.mxu0 0.0
    %205 = vmatpush1.msra.mxu0 %v122
    %206 = vmatprep.subr.mxu0 0.0
    %207 = vmatpush1.msra.mxu0 %v123
    %208 = vmatprep.subr.mxu0 0.0
    %209 = vmatpush1.msra.mxu0 %v124
    %210 = vmatprep.subr.mxu0 0.0
    %211 = vmatpush1.msra.mxu0 0.0
    %212 = vmatprep.subr.mxu0 0.0
    %213 = vmatpush1.msra.mxu0 0.0
    %214 = vmatprep.subr.mxu0 0.0
    %215 = vmatpush1.msra.mxu0 0.0
    %216 = vmatprep.subr.mxu0 0.0
    %217 = vmatpush1.msra.mxu0 0.0
    %218 = vmatprep.subr.mxu0 0.0
    %219 = vmatpush1.msra.mxu0 0.0
    %220 = vmatprep.subr.mxu0 0.0
    %221 = vmatpush1.msra.mxu0 0.0
    %222 = vmatprep.subr.mxu0 0.0
    %223 = vmatpush1.msra.mxu0 0.0
    %224 = vmatprep.subr.mxu0 0.0
    %225 = vmatpush1.msra.mxu0 0.0
    %226 = vmatprep.subr.mxu0 0.0
    %227 = vmatpush1.msra.mxu0 0.0
    %228 = vmatprep.subr.mxu0 0.0
    %229 = vmatpush1.msra.mxu0 0.0
    %230 = vmatprep.subr.mxu0 0.0
    %231 = vmatpush1.msra.mxu0 0.0
    %232 = vmatprep.subr.mxu0 0.0
    %233 = vmatpush1.msra.mxu0 0.0
    %234 = vmatprep.subr.mxu0 0.0
    %235 = vmatpush1.msra.mxu0 0.0
    %236 = vmatprep.subr.mxu0 0.0
    %237 = vmatpush1.msra.mxu0 0.0
    %238 = vmatprep.subr.mxu0 0.0
    %239 = vmatpush1.msra.mxu0 0.0
    %240 = vmatprep.subr.mxu0 0.0
    %241 = vmatpush1.msra.mxu0 0.0
    %242 = vmatprep.subr.mxu0 0.0
    %243 = vmatpush1.msra.mxu0 0.0
    %244 = vmatprep.subr.mxu0 0.0
    %245 = vmatpush1.msra.mxu0 0.0
    %246 = vmatprep.subr.mxu0 0.0
    %247 = vmatpush1.msra.mxu0 0.0
    %248 = vmatprep.subr.mxu0 0.0
    %249 = vmatpush1.msra.mxu0 0.0
    %250 = vmatprep.subr.mxu0 0.0
    %251 = vmatpush1.msra.mxu0 0.0
    %252 = vmatprep.subr.mxu0 0.0
    %253 = vmatpush1.msra.mxu0 0.0
    %254 = vmatprep.subr.mxu0 0.0
    %255 = vmatpush1.msra.mxu0 0.0
    %256 = vmatprep.subr.mxu0 0.0
    %257 = vmatpush1.msra.mxu0 0.0
    %258 = vmatprep.subr.mxu0 0.0
    %259 = vmatpush1.msra.mxu0 0.0
    %260 = vmatprep.subr.mxu0 0.0
    %261 = vmatpush1.msra.mxu0 0.0
    %262 = vmatprep.subr.mxu0 0.0
    %263 = vmatpush1.msra.mxu0 0.0
    %264 = vmatprep.subr.mxu0 0.0
    %265 = vmatpush1.msra.mxu0 0.0
    %266 = vmatprep.mubr.f32.mxu0 0.0
    %267 = vmatmul.mubr.f32.gmra.mrb[0].mxu0 %v131
    %v268 = vpop.f32.mrb[0].mxu0
    %v269 = vadd.f32 0.0, %v268
    %v270 = vpop.f32.mrb[0].mxu0
    %271 = vmatprep.mubr.f32.mxu0 0.0
    %272 = vmatmul.mubr.f32.gmra.mrb[0].mxu0 %v134
    %v273 = vpop.f32.mrb[0].mxu0
    %v274 = vadd.f32 0.0, %v273
    %v275 = vpop.f32.mrb[0].mxu0
    %276 = vmatprep.mubr.f32.mxu0 0.0
    %277 = vmatmul.mubr.f32.gmra.mrb[0].mxu0 %v137
    %v278 = vpop.f32.mrb[0].mxu0
    %v279 = vadd.f32 0.0, %v278
    %v280 = vpop.f32.mrb[0].mxu0
    %281 = vmatprep.mubr.f32.mxu0 0.0
    %282 = vmatmul.mubr.f32.gmra.mrb[0].mxu0 %v140
    %v283 = vpop.f32.mrb[0].mxu0
    %v284 = vadd.f32 0.0, %v283
    %v285 = vpop.f32.mrb[0].mxu0
    %286 = vmatprep.mubr.f32.mxu0 0.0
    %287 = vmatmul.mubr.f32.gmra.mrb[0].mxu0 %v143
    %v288 = vpop.f32.mrb[0].mxu0
    %v289 = vadd.f32 0.0, %v288
    %v290 = vpop.f32.mrb[0].mxu0
    %291 = vmatprep.mubr.f32.mxu0 0.0
    %292 = vmatmul.mubr.f32.gmra.mrb[0].mxu0 %v146
    %v293 = vpop.f32.mrb[0].mxu0
    %v294 = vadd.f32 0.0, %v293
    %v295 = vpop.f32.mrb[0].mxu0
    %296 = vmatprep.mubr.f32.mxu0 0.0
    %297 = vmatmul.mubr.f32.gmra.mrb[0].mxu0 %v149
    %v298 = vpop.f32.mrb[0].mxu0
    %v299 = vadd.f32 0.0, %v298
    %v300 = vpop.f32.mrb[0].mxu0
    %301 = vmatprep.mubr.f32.mxu0 0.0
    %302 = vmatmul.mubr.f32.gmra.mrb[0].mxu0 %v152
    %v303 = vpop.f32.mrb[0].mxu0
    %v304 = vadd.f32 0.0, %v303
    %v305 = vpop.f32.mrb[0].mxu0
    %306 = vmatprep.mubr.f32.mxu0 0.0
    %307 = vmatmul.mubr.f32.gmra.mrb[0].mxu0 %v155
    %v308 = vpop.f32.mrb[0].mxu0
    %v309 = vadd.f32 0.0, %v308
    %v310 = vpop.f32.mrb[0].mxu0
    %311 = vmatprep.mubr.f32.mxu0 0.0
    %312 = vmatmul.mubr.f32.gmra.mrb[0].mxu0 %v158
    %v313 = vpop.f32.mrb[0].mxu0
    %v314 = vadd.f32 0.0, %v313
    %v315 = vpop.f32.mrb[0].mxu0
    %316 = vmatprep.mubr.f32.mxu0 0.0
    %317 = vmatmul.mubr.f32.gmra.mrb[0].mxu0 %v161
    %v318 = vpop.f32.mrb[0].mxu0
    %v319 = vadd.f32 0.0, %v318
    %v320 = vpop.f32.mrb[0].mxu0
    %321 = vmatprep.mubr.f32.mxu0 0.0
    %322 = vmatmul.mubr.f32.gmra.mrb[0].mxu0 %v164
    %v323 = vpop.f32.mrb[0].mxu0
    %v324 = vadd.f32 0.0, %v323
    %v325 = vpop.f32.mrb[0].mxu0
    %326 = vmatprep.mubr.f32.mxu0 0.0
    %327 = vmatmul.mubr.f32.gmra.mrb[0].mxu0 %v167
    %v328 = vpop.f32.mrb[0].mxu0
    %v329 = vadd.f32 0.0, %v328
    %v330 = vpop.f32.mrb[0].mxu0
    %331 = vmatprep.mubr.f32.mxu0 0.0
    %332 = vmatmul.mubr.f32.gmra.mrb[0].mxu0 %v170
    %v333 = vpop.f32.mrb[0].mxu0
    %v334 = vadd.f32 0.0, %v333
    %v335 = vpop.f32.mrb[0].mxu0
    %336 = vmatprep.mubr.f32.mxu0 0.0
    %337 = vmatmul.mubr.f32.gmra.mrb[0].mxu0 %v173
    %v338 = vpop.f32.mrb[0].mxu0
    %v339 = vadd.f32 0.0, %v338
    %v340 = vpop.f32.mrb[0].mxu0
    %341 = vmatprep.mubr.f32.mxu0 0.0
    %342 = vmatmul.mubr.f32.gmra.mrb[0].mxu0 %v176
    %v343 = vpop.f32.mrb[0].mxu0
    %v344 = vadd.f32 0.0, %v343
    %v345 = vpop.f32.mrb[0].mxu0
    %346 = vmatprep.mubr.f32.mxu0 0.0
    %347 = vmatmul.mubr.f32.gmra.mrb[0].mxu0 %v179
    %v348 = vpop.f32.mrb[0].mxu0
    %v349 = vadd.f32 0.0, %v348
    %v350 = vpop.f32.mrb[0].mxu0
    %351 = vmatprep.mubr.f32.mxu0 0.0
    %352 = vmatmul.mubr.f32.gmra.mrb[0].mxu0 %v182
    %v353 = vpop.f32.mrb[0].mxu0
    %v354 = vadd.f32 0.0, %v353
    %v355 = vpop.f32.mrb[0].mxu0
    %356 = vmatprep.mubr.f32.mxu0 0.0
    %357 = vmatmul.mubr.f32.gmra.mrb[0].mxu0 %v185
    %v358 = vpop.f32.mrb[0].mxu0
    %v359 = vadd.f32 0.0, %v358
    %v360 = vpop.f32.mrb[0].mxu0
    %361 = vmatprep.mubr.f32.mxu0 0.0
    %362 = vmatmul.mubr.f32.gmra.mrb[0].mxu0 %v188
    %v363 = vpop.f32.mrb[0].mxu0
    %v364 = vadd.f32 0.0, %v363
    %v365 = vpop.f32.mrb[0].mxu0
    %366 = vmatprep.mubr.f32.mxu0 0.0
    %367 = vmatmul.mubr.f32.gmra.mrb[0].mxu0 %v191
    %v368 = vpop.f32.mrb[0].mxu0
    %v369 = vadd.f32 0.0, %v368
    %v370 = vpop.f32.mrb[0].mxu0
    %371 = vmatprep.mubr.f32.mxu0 0.0
    %372 = vmatmul.mubr.f32.gmra.mrb[0].mxu0 %v194
    %v373 = vpop.f32.mrb[0].mxu0
    %v374 = vadd.f32 0.0, %v373
    %v375 = vpop.f32.mrb[0].mxu0
    %376 = vmatprep.mubr.f32.mxu0 0.0
    %377 = vmatmul.mubr.f32.gmra.mrb[0].mxu0 %v197
    %v378 = vpop.f32.mrb[0].mxu0
    %v379 = vadd.f32 0.0, %v378
    %v380 = vpop.f32.mrb[0].mxu0
    %381 = vmatprep.mubr.f32.mxu0 0.0
    %382 = vmatmul.mubr.f32.gmra.mrb[0].mxu0 %v200
    %v383 = vpop.f32.mrb[0].mxu0
    %v384 = vadd.f32 0.0, %v383
    %v385 = vpop.f32.mrb[0].mxu0
    %386 = vdwg.mxu0
    %387 = vmatprep.subr.mxu0 0.0
    %388 = vmatpush1.msra.mxu0 %v125
    %389 = vmatprep.subr.mxu0 0.0
    %390 = vmatpush1.msra.mxu0 %v126
    %391 = vmatprep.subr.mxu0 0.0
    %392 = vmatpush1.msra.mxu0 %v127
    %393 = vmatprep.subr.mxu0 0.0
    %394 = vmatpush1.msra.mxu0 %v128
    %395 = vmatprep.subr.mxu0 0.0
    %396 = vmatpush1.msra.mxu0 0.0
    %397 = vmatprep.subr.mxu0 0.0
    %398 = vmatpush1.msra.mxu0 0.0
    %399 = vmatprep.subr.mxu0 0.0
    %400 = vmatpush1.msra.mxu0 0.0
    %401 = vmatprep.subr.mxu0 0.0
    %402 = vmatpush1.msra.mxu0 0.0
    %403 = vmatprep.subr.mxu0 0.0
    %404 = vmatpush1.msra.mxu0 0.0
    %405 = vmatprep.subr.mxu0 0.0
    %406 = vmatpush1.msra.mxu0 0.0
    %407 = vmatprep.subr.mxu0 0.0
    %408 = vmatpush1.msra.mxu0 0.0
    %409 = vmatprep.subr.mxu0 0.0
    %410 = vmatpush1.msra.mxu0 0.0
    %411 = vmatprep.subr.mxu0 0.0
    %412 = vmatpush1.msra.mxu0 0.0
    %413 = vmatprep.subr.mxu0 0.0
    %414 = vmatpush1.msra.mxu0 0.0
    %415 = vmatprep.subr.mxu0 0.0
    %416 = vmatpush1.msra.mxu0 0.0
    %417 = vmatprep.subr.mxu0 0.0
    %418 = vmatpush1.msra.mxu0 0.0
    %419 = vmatprep.subr.mxu0 0.0
    %420 = vmatpush1.msra.mxu0 0.0
    %421 = vmatprep.subr.mxu0 0.0
    %422 = vmatpush1.msra.mxu0 0.0
    %423 = vmatprep.subr.mxu0 0.0
    %424 = vmatpush1.msra.mxu0 0.0
    %425 = vmatprep.subr.mxu0 0.0
    %426 = vmatpush1.msra.mxu0 0.0
    %427 = vmatprep.subr.mxu0 0.0
    %428 = vmatpush1.msra.mxu0 0.0
    %429 = vmatprep.subr.mxu0 0.0
    %430 = vmatpush1.msra.mxu0 0.0
    %431 = vmatprep.subr.mxu0 0.0
    %432 = vmatpush1.msra.mxu0 0.0
    %433 = vmatprep.subr.mxu0 0.0
    %434 = vmatpush1.msra.mxu0 0.0
    %435 = vmatprep.subr.mxu0 0.0
    %436 = vmatpush1.msra.mxu0 0.0
    %437 = vmatprep.subr.mxu0 0.0
    %438 = vmatpush1.msra.mxu0 0.0
    %439 = vmatprep.subr.mxu0 0.0
    %440 = vmatpush1.msra.mxu0 0.0
    %441 = vmatprep.subr.mxu0 0.0
    %442 = vmatpush1.msra.mxu0 0.0
    %443 = vmatprep.subr.mxu0 0.0
    %444 = vmatpush1.msra.mxu0 0.0
    %445 = vmatprep.subr.mxu0 0.0
    %446 = vmatpush1.msra.mxu0 0.0
    %447 = vmatprep.subr.mxu0 0.0
    %448 = vmatpush1.msra.mxu0 0.0
    %449 = vmatprep.subr.mxu0 0.0
    %450 = vmatpush1.msra.mxu0 0.0
    %451 = vmatprep.mubr.f32.mxu0 0.0
    %452 = vmatmul.mubr.f32.gmra.mrb[0].mxu0 %v131
    %v453 = vpop.f32.mrb[0].mxu0
    %v454 = vadd.f32 0.0, %v453
    %v455 = vpop.f32.mrb[0].mxu0
    %456 = vmatprep.mubr.f32.mxu0 0.0
    %457 = vmatmul.mubr.f32.gmra.mrb[0].mxu0 %v134
    %v458 = vpop.f32.mrb[0].mxu0
    %v459 = vadd.f32 0.0, %v458
    %v460 = vpop.f32.mrb[0].mxu0
    %461 = vmatprep.mubr.f32.mxu0 0.0
    %462 = vmatmul.mubr.f32.gmra.mrb[0].mxu0 %v137
    %v463 = vpop.f32.mrb[0].mxu0
    %v464 = vadd.f32 0.0, %v463
    %v465 = vpop.f32.mrb[0].mxu0
    %466 = vmatprep.mubr.f32.mxu0 0.0
    %467 = vmatmul.mubr.f32.gmra.mrb[0].mxu0 %v140
    %v468 = vpop.f32.mrb[0].mxu0
    %v469 = vadd.f32 0.0, %v468
    %v470 = vpop.f32.mrb[0].mxu0
    %471 = vmatprep.mubr.f32.mxu0 0.0
    %472 = vmatmul.mubr.f32.gmra.mrb[0].mxu0 %v143
    %v473 = vpop.f32.mrb[0].mxu0
    %v474 = vadd.f32 0.0, %v473
    %v475 = vpop.f32.mrb[0].mxu0
    %476 = vmatprep.mubr.f32.mxu0 0.0
    %477 = vmatmul.mubr.f32.gmra.mrb[0].mxu0 %v146
    %v478 = vpop.f32.mrb[0].mxu0
    %v479 = vadd.f32 0.0, %v478
    %v480 = vpop.f32.mrb[0].mxu0
    %481 = vmatprep.mubr.f32.mxu0 0.0
    %482 = vmatmul.mubr.f32.gmra.mrb[0].mxu0 %v149
    %v483 = vpop.f32.mrb[0].mxu0
    %v484 = vadd.f32 0.0, %v483
    %v485 = vpop.f32.mrb[0].mxu0
    %486 = vmatprep.mubr.f32.mxu0 0.0
    %487 = vmatmul.mubr.f32.gmra.mrb[0].mxu0 %v152
    %v488 = vpop.f32.mrb[0].mxu0
    %v489 = vadd.f32 0.0, %v488
    %v490 = vpop.f32.mrb[0].mxu0
    %491 = vmatprep.mubr.f32.mxu0 0.0
    %492 = vmatmul.mubr.f32.gmra.mrb[0].mxu0 %v155
    %v493 = vpop.f32.mrb[0].mxu0
    %v494 = vadd.f32 0.0, %v493
    %v495 = vpop.f32.mrb[0].mxu0
    %496 = vmatprep.mubr.f32.mxu0 0.0
    %497 = vmatmul.mubr.f32.gmra.mrb[0].mxu0 %v158
    %v498 = vpop.f32.mrb[0].mxu0
    %v499 = vadd.f32 0.0, %v498
    %v500 = vpop.f32.mrb[0].mxu0
    %501 = vmatprep.mubr.f32.mxu0 0.0
    %502 = vmatmul.mubr.f32.gmra.mrb[0].mxu0 %v161
    %v503 = vpop.f32.mrb[0].mxu0
    %v504 = vadd.f32 0.0, %v503
    %v505 = vpop.f32.mrb[0].mxu0
    %506 = vmatprep.mubr.f32.mxu0 0.0
    %507 = vmatmul.mubr.f32.gmra.mrb[0].mxu0 %v164
    %v508 = vpop.f32.mrb[0].mxu0
    %v509 = vadd.f32 0.0, %v508
    %v510 = vpop.f32.mrb[0].mxu0
    %511 = vmatprep.mubr.f32.mxu0 0.0
    %512 = vmatmul.mubr.f32.gmra.mrb[0].mxu0 %v167
    %v513 = vpop.f32.mrb[0].mxu0
    %v514 = vadd.f32 0.0, %v513
    %v515 = vpop.f32.mrb[0].mxu0
    %516 = vmatprep.mubr.f32.mxu0 0.0
    %517 = vmatmul.mubr.f32.gmra.mrb[0].mxu0 %v170
    %v518 = vpop.f32.mrb[0].mxu0
    %v519 = vadd.f32 0.0, %v518
    %v520 = vpop.f32.mrb[0].mxu0
    %521 = vmatprep.mubr.f32.mxu0 0.0
    %522 = vmatmul.mubr.f32.gmra.mrb[0].mxu0 %v173
    %v523 = vpop.f32.mrb[0].mxu0
    %v524 = vadd.f32 0.0, %v523
    %v525 = vpop.f32.mrb[0].mxu0
    %526 = vmatprep.mubr.f32.mxu0 0.0
    %527 = vmatmul.mubr.f32.gmra.mrb[0].mxu0 %v176
    %v528 = vpop.f32.mrb[0].mxu0
    %v529 = vadd.f32 0.0, %v528
    %v530 = vpop.f32.mrb[0].mxu0
    %531 = vmatprep.mubr.f32.mxu0 0.0
    %532 = vmatmul.mubr.f32.gmra.mrb[0].mxu0 %v179
    %v533 = vpop.f32.mrb[0].mxu0
    %v534 = vadd.f32 0.0, %v533
    %v535 = vpop.f32.mrb[0].mxu0
    %536 = vmatprep.mubr.f32.mxu0 0.0
    %537 = vmatmul.mubr.f32.gmra.mrb[0].mxu0 %v182
    %v538 = vpop.f32.mrb[0].mxu0
    %v539 = vadd.f32 0.0, %v538
    %v540 = vpop.f32.mrb[0].mxu0
    %541 = vmatprep.mubr.f32.mxu0 0.0
    %542 = vmatmul.mubr.f32.gmra.mrb[0].mxu0 %v185
    %v543 = vpop.f32.mrb[0].mxu0
    %v544 = vadd.f32 0.0, %v543
    %v545 = vpop.f32.mrb[0].mxu0
    %546 = vmatprep.mubr.f32.mxu0 0.0
    %547 = vmatmul.mubr.f32.gmra.mrb[0].mxu0 %v188
    %v548 = vpop.f32.mrb[0].mxu0
    %v549 = vadd.f32 0.0, %v548
    %v550 = vpop.f32.mrb[0].mxu0
    %551 = vmatprep.mubr.f32.mxu0 0.0
    %552 = vmatmul.mubr.f32.gmra.mrb[0].mxu0 %v191
    %v553 = vpop.f32.mrb[0].mxu0
    %v554 = vadd.f32 0.0, %v553
    %v555 = vpop.f32.mrb[0].mxu0
    %556 = vmatprep.mubr.f32.mxu0 0.0
    %557 = vmatmul.mubr.f32.gmra.mrb[0].mxu0 %v194
    %v558 = vpop.f32.mrb[0].mxu0
    %v559 = vadd.f32 0.0, %v558
    %v560 = vpop.f32.mrb[0].mxu0
    %561 = vmatprep.mubr.f32.mxu0 0.0
    %562 = vmatmul.mubr.f32.gmra.mrb[0].mxu0 %v197
    %v563 = vpop.f32.mrb[0].mxu0
    %v564 = vadd.f32 0.0, %v563
    %v565 = vpop.f32.mrb[0].mxu0
    %566 = vmatprep.mubr.f32.mxu0 0.0
    %567 = vmatmul.mubr.f32.gmra.mrb[0].mxu0 %v200
    %v568 = vpop.f32.mrb[0].mxu0
    %v569 = vadd.f32 0.0, %v568
    %v570 = vpop.f32.mrb[0].mxu0
    %571 = vdwg.mxu0
    %v572 = vsub.f32 0.0, %v454
    %v573 = vsub.f32 0.0, %v459
    %v574 = vsub.f32 0.0, %v464
    %v575 = vsub.f32 0.0, %v469
    %v576 = vsub.f32 0.0, %v474
    %v577 = vsub.f32 0.0, %v479
    %v578 = vsub.f32 0.0, %v484
    %v579 = vsub.f32 0.0, %v489
    %v580 = vsub.f32 0.0, %v494
    %v581 = vsub.f32 0.0, %v499
    %v582 = vsub.f32 0.0, %v504
    %v583 = vsub.f32 0.0, %v509
    %v584 = vsub.f32 0.0, %v514
    %v585 = vsub.f32 0.0, %v519
    %v586 = vsub.f32 0.0, %v524
    %v587 = vsub.f32 0.0, %v529
    %v588 = vsub.f32 0.0, %v534
    %v589 = vsub.f32 0.0, %v539
    %v590 = vsub.f32 0.0, %v544
    %v591 = vsub.f32 0.0, %v549
    %v592 = vsub.f32 0.0, %v554
    %v593 = vsub.f32 0.0, %v559
    %v594 = vsub.f32 0.0, %v564
    %v595 = vsub.f32 0.0, %v569
    %596 = vxpose.xlu0.b32.start [1/16] %v269, 128
    %597 = vxpose.xlu0.b32.cont [2/16] %v274, 128
    %598 = vxpose.xlu0.b32.cont [3/16] %v279, 128
    %599 = vxpose.xlu0.b32.cont [4/16] %v284, 128
    %600 = vxpose.xlu0.b32.cont [5/16] 0.0, 128
    %601 = vxpose.xlu0.b32.cont [6/16] 0.0, 128
    %602 = vxpose.xlu0.b32.cont [7/16] 0.0, 128
    %603 = vxpose.xlu0.b32.cont [8/16] 0.0, 128
    %604 = vxpose.xlu0.b32.cont [9/16] 0.0, 128
    %605 = vxpose.xlu0.b32.cont [10/16] 0.0, 128
    %606 = vxpose.xlu0.b32.cont [11/16] 0.0, 128
    %607 = vxpose.xlu0.b32.cont [12/16] 0.0, 128
    %608 = vxpose.xlu0.b32.cont [13/16] 0.0, 128
    %609 = vxpose.xlu0.b32.cont [14/16] 0.0, 128
    %610 = vxpose.xlu0.b32.cont [15/16] 0.0, 128
    %611 = vxpose.xlu0.b32.end [16/16] 0.0, 128
    %v612 = vpop.trf.xlu0
    %v613 = vpop.trf.xlu0
    %v614 = vpop.trf.xlu0
    %v615 = vpop.trf.xlu0
    %v616 = vpop.trf.xlu0
    %v617 = vpop.trf.xlu0
    %v618 = vpop.trf.xlu0
    %v619 = vpop.trf.xlu0
    %v620 = vpop.trf.xlu0
    %v621 = vpop.trf.xlu0
    %v622 = vpop.trf.xlu0
    %v623 = vpop.trf.xlu0
    %v624 = vpop.trf.xlu0
    %v625 = vpop.trf.xlu0
    %v626 = vpop.trf.xlu0
    %v627 = vpop.trf.xlu0
    %628 = vxpose.xlu0.b32.start [1/16] %v289, 128
    %629 = vxpose.xlu0.b32.cont [2/16] %v294, 128
    %630 = vxpose.xlu0.b32.cont [3/16] %v299, 128
    %631 = vxpose.xlu0.b32.cont [4/16] %v304, 128
    %632 = vxpose.xlu0.b32.cont [5/16] 0.0, 128
    %633 = vxpose.xlu0.b32.cont [6/16] 0.0, 128
    %634 = vxpose.xlu0.b32.cont [7/16] 0.0, 128
    %635 = vxpose.xlu0.b32.cont [8/16] 0.0, 128
    %636 = vxpose.xlu0.b32.cont [9/16] 0.0, 128
    %637 = vxpose.xlu0.b32.cont [10/16] 0.0, 128
    %638 = vxpose.xlu0.b32.cont [11/16] 0.0, 128
    %639 = vxpose.xlu0.b32.cont [12/16] 0.0, 128
    %640 = vxpose.xlu0.b32.cont [13/16] 0.0, 128
    %641 = vxpose.xlu0.b32.cont [14/16] 0.0, 128
    %642 = vxpose.xlu0.b32.cont [15/16] 0.0, 128
    %643 = vxpose.xlu0.b32.end [16/16] 0.0, 128
    %v644 = vpop.trf.xlu0
    %v645 = vpop.trf.xlu0
    %v646 = vpop.trf.xlu0
    %v647 = vpop.trf.xlu0
    %v648 = vpop.trf.xlu0
    %v649 = vpop.trf.xlu0
    %v650 = vpop.trf.xlu0
    %v651 = vpop.trf.xlu0
    %v652 = vpop.trf.xlu0
    %v653 = vpop.trf.xlu0
    %v654 = vpop.trf.xlu0
    %v655 = vpop.trf.xlu0
    %v656 = vpop.trf.xlu0
    %v657 = vpop.trf.xlu0
    %v658 = vpop.trf.xlu0
    %v659 = vpop.trf.xlu0
    %660 = vxpose.xlu0.b32.start [1/16] %v309, 128
    %661 = vxpose.xlu0.b32.cont [2/16] %v314, 128
    %662 = vxpose.xlu0.b32.cont [3/16] %v319, 128
    %663 = vxpose.xlu0.b32.cont [4/16] %v324, 128
    %664 = vxpose.xlu0.b32.cont [5/16] 0.0, 128
    %665 = vxpose.xlu0.b32.cont [6/16] 0.0, 128
    %666 = vxpose.xlu0.b32.cont [7/16] 0.0, 128
    %667 = vxpose.xlu0.b32.cont [8/16] 0.0, 128
    %668 = vxpose.xlu0.b32.cont [9/16] 0.0, 128
    %669 = vxpose.xlu0.b32.cont [10/16] 0.0, 128
    %670 = vxpose.xlu0.b32.cont [11/16] 0.0, 128
    %671 = vxpose.xlu0.b32.cont [12/16] 0.0, 128
    %672 = vxpose.xlu0.b32.cont [13/16] 0.0, 128
    %673 = vxpose.xlu0.b32.cont [14/16] 0.0, 128
    %674 = vxpose.xlu0.b32.cont [15/16] 0.0, 128
    %675 = vxpose.xlu0.b32.end [16/16] 0.0, 128
    %v676 = vpop.trf.xlu0
    %v677 = vpop.trf.xlu0
    %v678 = vpop.trf.xlu0
    %v679 = vpop.trf.xlu0
    %v680 = vpop.trf.xlu0
    %v681 = vpop.trf.xlu0
    %v682 = vpop.trf.xlu0
    %v683 = vpop.trf.xlu0
    %v684 = vpop.trf.xlu0
    %v685 = vpop.trf.xlu0
    %v686 = vpop.trf.xlu0
    %v687 = vpop.trf.xlu0
    %v688 = vpop.trf.xlu0
    %v689 = vpop.trf.xlu0
    %v690 = vpop.trf.xlu0
    %v691 = vpop.trf.xlu0
    %692 = vxpose.xlu0.b32.start [1/16] %v329, 128
    %693 = vxpose.xlu0.b32.cont [2/16] %v334, 128
    %694 = vxpose.xlu0.b32.cont [3/16] %v339, 128
    %695 = vxpose.xlu0.b32.cont [4/16] %v344, 128
    %696 = vxpose.xlu0.b32.cont [5/16] 0.0, 128
    %697 = vxpose.xlu0.b32.cont [6/16] 0.0, 128
    %698 = vxpose.xlu0.b32.cont [7/16] 0.0, 128
    %699 = vxpose.xlu0.b32.cont [8/16] 0.0, 128
    %700 = vxpose.xlu0.b32.cont [9/16] 0.0, 128
    %701 = vxpose.xlu0.b32.cont [10/16] 0.0, 128
    %702 = vxpose.xlu0.b32.cont [11/16] 0.0, 128
    %703 = vxpose.xlu0.b32.cont [12/16] 0.0, 128
    %704 = vxpose.xlu0.b32.cont [13/16] 0.0, 128
    %705 = vxpose.xlu0.b32.cont [14/16] 0.0, 128
    %706 = vxpose.xlu0.b32.cont [15/16] 0.0, 128
    %707 = vxpose.xlu0.b32.end [16/16] 0.0, 128
    %v708 = vpop.trf.xlu0
    %v709 = vpop.trf.xlu0
    %v710 = vpop.trf.xlu0
    %v711 = vpop.trf.xlu0
    %v712 = vpop.trf.xlu0
    %v713 = vpop.trf.xlu0
    %v714 = vpop.trf.xlu0
    %v715 = vpop.trf.xlu0
    %v716 = vpop.trf.xlu0
    %v717 = vpop.trf.xlu0
    %v718 = vpop.trf.xlu0
    %v719 = vpop.trf.xlu0
    %v720 = vpop.trf.xlu0
    %v721 = vpop.trf.xlu0
    %v722 = vpop.trf.xlu0
    %v723 = vpop.trf.xlu0
    %724 = vxpose.xlu0.b32.start [1/16] %v349, 128
    %725 = vxpose.xlu0.b32.cont [2/16] %v354, 128
    %726 = vxpose.xlu0.b32.cont [3/16] %v359, 128
    %727 = vxpose.xlu0.b32.cont [4/16] %v364, 128
    %728 = vxpose.xlu0.b32.cont [5/16] 0.0, 128
    %729 = vxpose.xlu0.b32.cont [6/16] 0.0, 128
    %730 = vxpose.xlu0.b32.cont [7/16] 0.0, 128
    %731 = vxpose.xlu0.b32.cont [8/16] 0.0, 128
    %732 = vxpose.xlu0.b32.cont [9/16] 0.0, 128
    %733 = vxpose.xlu0.b32.cont [10/16] 0.0, 128
    %734 = vxpose.xlu0.b32.cont [11/16] 0.0, 128
    %735 = vxpose.xlu0.b32.cont [12/16] 0.0, 128
    %736 = vxpose.xlu0.b32.cont [13/16] 0.0, 128
    %737 = vxpose.xlu0.b32.cont [14/16] 0.0, 128
    %738 = vxpose.xlu0.b32.cont [15/16] 0.0, 128
    %739 = vxpose.xlu0.b32.end [16/16] 0.0, 128
    %v740 = vpop.trf.xlu0
    %v741 = vpop.trf.xlu0
    %v742 = vpop.trf.xlu0
    %v743 = vpop.trf.xlu0
    %v744 = vpop.trf.xlu0
    %v745 = vpop.trf.xlu0
    %v746 = vpop.trf.xlu0
    %v747 = vpop.trf.xlu0
    %v748 = vpop.trf.xlu0
    %v749 = vpop.trf.xlu0
    %v750 = vpop.trf.xlu0
    %v751 = vpop.trf.xlu0
    %v752 = vpop.trf.xlu0
    %v753 = vpop.trf.xlu0
    %v754 = vpop.trf.xlu0
    %v755 = vpop.trf.xlu0
    %756 = vxpose.xlu0.b32.start [1/16] %v369, 128
    %757 = vxpose.xlu0.b32.cont [2/16] %v374, 128
    %758 = vxpose.xlu0.b32.cont [3/16] %v379, 128
    %759 = vxpose.xlu0.b32.cont [4/16] %v384, 128
    %760 = vxpose.xlu0.b32.cont [5/16] 0.0, 128
    %761 = vxpose.xlu0.b32.cont [6/16] 0.0, 128
    %762 = vxpose.xlu0.b32.cont [7/16] 0.0, 128
    %763 = vxpose.xlu0.b32.cont [8/16] 0.0, 128
    %764 = vxpose.xlu0.b32.cont [9/16] 0.0, 128
    %765 = vxpose.xlu0.b32.cont [10/16] 0.0, 128
    %766 = vxpose.xlu0.b32.cont [11/16] 0.0, 128
    %767 = vxpose.xlu0.b32.cont [12/16] 0.0, 128
    %768 = vxpose.xlu0.b32.cont [13/16] 0.0, 128
    %769 = vxpose.xlu0.b32.cont [14/16] 0.0, 128
    %770 = vxpose.xlu0.b32.cont [15/16] 0.0, 128
    %771 = vxpose.xlu0.b32.end [16/16] 0.0, 128
    %v772 = vpop.trf.xlu0
    %v773 = vpop.trf.xlu0
    %v774 = vpop.trf.xlu0
    %v775 = vpop.trf.xlu0
    %v776 = vpop.trf.xlu0
    %v777 = vpop.trf.xlu0
    %v778 = vpop.trf.xlu0
    %v779 = vpop.trf.xlu0
    %v780 = vpop.trf.xlu0
    %v781 = vpop.trf.xlu0
    %v782 = vpop.trf.xlu0
    %v783 = vpop.trf.xlu0
    %v784 = vpop.trf.xlu0
    %v785 = vpop.trf.xlu0
    %v786 = vpop.trf.xlu0
    %v787 = vpop.trf.xlu0
    %788 = vxpose.xlu0.b32.start [1/16] %v572, 128
    %789 = vxpose.xlu0.b32.cont [2/16] %v573, 128
    %790 = vxpose.xlu0.b32.cont [3/16] %v574, 128
    %791 = vxpose.xlu0.b32.cont [4/16] %v575, 128
    %792 = vxpose.xlu0.b32.cont [5/16] 0.0, 128
    %793 = vxpose.xlu0.b32.cont [6/16] 0.0, 128
    %794 = vxpose.xlu0.b32.cont [7/16] 0.0, 128
    %795 = vxpose.xlu0.b32.cont [8/16] 0.0, 128
    %796 = vxpose.xlu0.b32.cont [9/16] 0.0, 128
    %797 = vxpose.xlu0.b32.cont [10/16] 0.0, 128
    %798 = vxpose.xlu0.b32.cont [11/16] 0.0, 128
    %799 = vxpose.xlu0.b32.cont [12/16] 0.0, 128
    %800 = vxpose.xlu0.b32.cont [13/16] 0.0, 128
    %801 = vxpose.xlu0.b32.cont [14/16] 0.0, 128
    %802 = vxpose.xlu0.b32.cont [15/16] 0.0, 128
    %803 = vxpose.xlu0.b32.end [16/16] 0.0, 128
    %v804 = vpop.trf.xlu0
    %v805 = vpop.trf.xlu0
    %v806 = vpop.trf.xlu0
    %v807 = vpop.trf.xlu0
    %v808 = vpop.trf.xlu0
    %v809 = vpop.trf.xlu0
    %v810 = vpop.trf.xlu0
    %v811 = vpop.trf.xlu0
    %v812 = vpop.trf.xlu0
    %v813 = vpop.trf.xlu0
    %v814 = vpop.trf.xlu0
    %v815 = vpop.trf.xlu0
    %v816 = vpop.trf.xlu0
    %v817 = vpop.trf.xlu0
    %v818 = vpop.trf.xlu0
    %v819 = vpop.trf.xlu0
    %820 = vxpose.xlu0.b32.start [1/16] %v576, 128
    %821 = vxpose.xlu0.b32.cont [2/16] %v577, 128
    %822 = vxpose.xlu0.b32.cont [3/16] %v578, 128
    %823 = vxpose.xlu0.b32.cont [4/16] %v579, 128
    %824 = vxpose.xlu0.b32.cont [5/16] 0.0, 128
    %825 = vxpose.xlu0.b32.cont [6/16] 0.0, 128
    %826 = vxpose.xlu0.b32.cont [7/16] 0.0, 128
    %827 = vxpose.xlu0.b32.cont [8/16] 0.0, 128
    %828 = vxpose.xlu0.b32.cont [9/16] 0.0, 128
    %829 = vxpose.xlu0.b32.cont [10/16] 0.0, 128
    %830 = vxpose.xlu0.b32.cont [11/16] 0.0, 128
    %831 = vxpose.xlu0.b32.cont [12/16] 0.0, 128
    %832 = vxpose.xlu0.b32.cont [13/16] 0.0, 128
    %833 = vxpose.xlu0.b32.cont [14/16] 0.0, 128
    %834 = vxpose.xlu0.b32.cont [15/16] 0.0, 128
    %835 = vxpose.xlu0.b32.end [16/16] 0.0, 128
    %v836 = vpop.trf.xlu0
    %v837 = vpop.trf.xlu0
    %v838 = vpop.trf.xlu0
    %v839 = vpop.trf.xlu0
    %v840 = vpop.trf.xlu0
    %v841 = vpop.trf.xlu0
    %v842 = vpop.trf.xlu0
    %v843 = vpop.trf.xlu0
    %v844 = vpop.trf.xlu0
    %v845 = vpop.trf.xlu0
    %v846 = vpop.trf.xlu0
    %v847 = vpop.trf.xlu0
    %v848 = vpop.trf.xlu0
    %v849 = vpop.trf.xlu0
    %v850 = vpop.trf.xlu0
    %v851 = vpop.trf.xlu0
    %852 = vxpose.xlu0.b32.start [1/16] %v580, 128
    %853 = vxpose.xlu0.b32.cont [2/16] %v581, 128
    %854 = vxpose.xlu0.b32.cont [3/16] %v582, 128
    %855 = vxpose.xlu0.b32.cont [4/16] %v583, 128
    %856 = vxpose.xlu0.b32.cont [5/16] 0.0, 128
    %857 = vxpose.xlu0.b32.cont [6/16] 0.0, 128
    %858 = vxpose.xlu0.b32.cont [7/16] 0.0, 128
    %859 = vxpose.xlu0.b32.cont [8/16] 0.0, 128
    %860 = vxpose.xlu0.b32.cont [9/16] 0.0, 128
    %861 = vxpose.xlu0.b32.cont [10/16] 0.0, 128
    %862 = vxpose.xlu0.b32.cont [11/16] 0.0, 128
    %863 = vxpose.xlu0.b32.cont [12/16] 0.0, 128
    %864 = vxpose.xlu0.b32.cont [13/16] 0.0, 128
    %865 = vxpose.xlu0.b32.cont [14/16] 0.0, 128
    %866 = vxpose.xlu0.b32.cont [15/16] 0.0, 128
    %867 = vxpose.xlu0.b32.end [16/16] 0.0, 128
    %v868 = vpop.trf.xlu0
    %v869 = vpop.trf.xlu0
    %v870 = vpop.trf.xlu0
    %v871 = vpop.trf.xlu0
    %v872 = vpop.trf.xlu0
    %v873 = vpop.trf.xlu0
    %v874 = vpop.trf.xlu0
    %v875 = vpop.trf.xlu0
    %v876 = vpop.trf.xlu0
    %v877 = vpop.trf.xlu0
    %v878 = vpop.trf.xlu0
    %v879 = vpop.trf.xlu0
    %v880 = vpop.trf.xlu0
    %v881 = vpop.trf.xlu0
    %v882 = vpop.trf.xlu0
    %v883 = vpop.trf.xlu0
    %884 = vxpose.xlu0.b32.start [1/16] %v584, 128
    %885 = vxpose.xlu0.b32.cont [2/16] %v585, 128
    %886 = vxpose.xlu0.b32.cont [3/16] %v586, 128
    %887 = vxpose.xlu0.b32.cont [4/16] %v587, 128
    %888 = vxpose.xlu0.b32.cont [5/16] 0.0, 128
    %889 = vxpose.xlu0.b32.cont [6/16] 0.0, 128
    %890 = vxpose.xlu0.b32.cont [7/16] 0.0, 128
    %891 = vxpose.xlu0.b32.cont [8/16] 0.0, 128
    %892 = vxpose.xlu0.b32.cont [9/16] 0.0, 128
    %893 = vxpose.xlu0.b32.cont [10/16] 0.0, 128
    %894 = vxpose.xlu0.b32.cont [11/16] 0.0, 128
    %895 = vxpose.xlu0.b32.cont [12/16] 0.0, 128
    %896 = vxpose.xlu0.b32.cont [13/16] 0.0, 128
    %897 = vxpose.xlu0.b32.cont [14/16] 0.0, 128
    %898 = vxpose.xlu0.b32.cont [15/16] 0.0, 128
    %899 = vxpose.xlu0.b32.end [16/16] 0.0, 128
    %v900 = vpop.trf.xlu0
    %v901 = vpop.trf.xlu0
    %v902 = vpop.trf.xlu0
    %v903 = vpop.trf.xlu0
    %v904 = vpop.trf.xlu0
    %v905 = vpop.trf.xlu0
    %v906 = vpop.trf.xlu0
    %v907 = vpop.trf.xlu0
    %v908 = vpop.trf.xlu0
    %v909 = vpop.trf.xlu0
    %v910 = vpop.trf.xlu0
    %v911 = vpop.trf.xlu0
    %v912 = vpop.trf.xlu0
    %v913 = vpop.trf.xlu0
    %v914 = vpop.trf.xlu0
    %v915 = vpop.trf.xlu0
    %916 = vxpose.xlu0.b32.start [1/16] %v588, 128
    %917 = vxpose.xlu0.b32.cont [2/16] %v589, 128
    %918 = vxpose.xlu0.b32.cont [3/16] %v590, 128
    %919 = vxpose.xlu0.b32.cont [4/16] %v591, 128
    %920 = vxpose.xlu0.b32.cont [5/16] 0.0, 128
    %921 = vxpose.xlu0.b32.cont [6/16] 0.0, 128
    %922 = vxpose.xlu0.b32.cont [7/16] 0.0, 128
    %923 = vxpose.xlu0.b32.cont [8/16] 0.0, 128
    %924 = vxpose.xlu0.b32.cont [9/16] 0.0, 128
    %925 = vxpose.xlu0.b32.cont [10/16] 0.0, 128
    %926 = vxpose.xlu0.b32.cont [11/16] 0.0, 128
    %927 = vxpose.xlu0.b32.cont [12/16] 0.0, 128
    %928 = vxpose.xlu0.b32.cont [13/16] 0.0, 128
    %929 = vxpose.xlu0.b32.cont [14/16] 0.0, 128
    %930 = vxpose.xlu0.b32.cont [15/16] 0.0, 128
    %931 = vxpose.xlu0.b32.end [16/16] 0.0, 128
    %v932 = vpop.trf.xlu0
    %v933 = vpop.trf.xlu0
    %v934 = vpop.trf.xlu0
    %v935 = vpop.trf.xlu0
    %v936 = vpop.trf.xlu0
    %v937 = vpop.trf.xlu0
    %v938 = vpop.trf.xlu0
    %v939 = vpop.trf.xlu0
    %v940 = vpop.trf.xlu0
    %v941 = vpop.trf.xlu0
    %v942 = vpop.trf.xlu0
    %v943 = vpop.trf.xlu0
    %v944 = vpop.trf.xlu0
    %v945 = vpop.trf.xlu0
    %v946 = vpop.trf.xlu0
    %v947 = vpop.trf.xlu0
    %948 = vxpose.xlu0.b32.start [1/16] %v592, 128
    %949 = vxpose.xlu0.b32.cont [2/16] %v593, 128
    %950 = vxpose.xlu0.b32.cont [3/16] %v594, 128
    %951 = vxpose.xlu0.b32.cont [4/16] %v595, 128
    %952 = vxpose.xlu0.b32.cont [5/16] 0.0, 128
    %953 = vxpose.xlu0.b32.cont [6/16] 0.0, 128
    %954 = vxpose.xlu0.b32.cont [7/16] 0.0, 128
    %955 = vxpose.xlu0.b32.cont [8/16] 0.0, 128
    %956 = vxpose.xlu0.b32.cont [9/16] 0.0, 128
    %957 = vxpose.xlu0.b32.cont [10/16] 0.0, 128
    %958 = vxpose.xlu0.b32.cont [11/16] 0.0, 128
    %959 = vxpose.xlu0.b32.cont [12/16] 0.0, 128
    %960 = vxpose.xlu0.b32.cont [13/16] 0.0, 128
    %961 = vxpose.xlu0.b32.cont [14/16] 0.0, 128
    %962 = vxpose.xlu0.b32.cont [15/16] 0.0, 128
    %963 = vxpose.xlu0.b32.end [16/16] 0.0, 128
    %v964 = vpop.trf.xlu0
    %v965 = vpop.trf.xlu0
    %v966 = vpop.trf.xlu0
    %v967 = vpop.trf.xlu0
    %v968 = vpop.trf.xlu0
    %v969 = vpop.trf.xlu0
    %v970 = vpop.trf.xlu0
    %v971 = vpop.trf.xlu0
    %v972 = vpop.trf.xlu0
    %v973 = vpop.trf.xlu0
    %v974 = vpop.trf.xlu0
    %v975 = vpop.trf.xlu0
    %v976 = vpop.trf.xlu0
    %v977 = vpop.trf.xlu0
    %v978 = vpop.trf.xlu0
    %v979 = vpop.trf.xlu0
    %v981 = vsel %vm129, %v612, 0
    %v984 = vsel %vm129, %v613, 0
    %v987 = vsel %vm129, %v614, 0
    %v990 = vsel %vm129, %v615, 0
    %v993 = vsel %vm129, %v644, 0
    %v996 = vsel %vm129, %v645, 0
    %v999 = vsel %vm129, %v646, 0
    %v1002 = vsel %vm129, %v647, 0
    %v1005 = vsel %vm129, %v676, 0
    %v1008 = vsel %vm129, %v677, 0
    %v1011 = vsel %vm129, %v678, 0
    %v1014 = vsel %vm129, %v679, 0
    %v1017 = vsel %vm129, %v708, 0
    %v1020 = vsel %vm129, %v709, 0
    %v1023 = vsel %vm129, %v710, 0
    %v1026 = vsel %vm129, %v711, 0
    %v1029 = vsel %vm129, %v740, 0
    %v1032 = vsel %vm129, %v741, 0
    %v1035 = vsel %vm129, %v742, 0
    %v1038 = vsel %vm129, %v743, 0
    %v1041 = vsel %vm129, %v772, 0
    %v1044 = vsel %vm129, %v773, 0
    %v1047 = vsel %vm129, %v774, 0
    %v1050 = vsel %vm129, %v775, 0
    %1052 = vmatprep.subr.mxu0 0.0
    %1053 = vmatpush1.msra.mxu0 %v121
    %1054 = vmatprep.subr.mxu0 0.0
    %1055 = vmatpush1.msra.mxu0 %v122
    %1056 = vmatprep.subr.mxu0 0.0
    %1057 = vmatpush1.msra.mxu0 %v123
    %1058 = vmatprep.subr.mxu0 0.0
    %1059 = vmatpush1.msra.mxu0 %v124
    %1060 = vmatprep.subr.mxu0 0.0
    %1061 = vmatpush1.msra.mxu0 0.0
    %1062 = vmatprep.subr.mxu0 0.0
    %1063 = vmatpush1.msra.mxu0 0.0
    %1064 = vmatprep.subr.mxu0 0.0
    %1065 = vmatpush1.msra.mxu0 0.0
    %1066 = vmatprep.subr.mxu0 0.0
    %1067 = vmatpush1.msra.mxu0 0.0
    %1068 = vmatprep.subr.mxu0 0.0
    %1069 = vmatpush1.msra.mxu0 0.0
    %1070 = vmatprep.subr.mxu0 0.0
    %1071 = vmatpush1.msra.mxu0 0.0
    %1072 = vmatprep.subr.mxu0 0.0
    %1073 = vmatpush1.msra.mxu0 0.0
    %1074 = vmatprep.subr.mxu0 0.0
    %1075 = vmatpush1.msra.mxu0 0.0
    %1076 = vmatprep.subr.mxu0 0.0
    %1077 = vmatpush1.msra.mxu0 0.0
    %1078 = vmatprep.subr.mxu0 0.0
    %1079 = vmatpush1.msra.mxu0 0.0
    %1080 = vmatprep.subr.mxu0 0.0
    %1081 = vmatpush1.msra.mxu0 0.0
    %1082 = vmatprep.subr.mxu0 0.0
    %1083 = vmatpush1.msra.mxu0 0.0
    %1084 = vmatprep.subr.mxu0 0.0
    %1085 = vmatpush1.msra.mxu0 0.0
    %1086 = vmatprep.subr.mxu0 0.0
    %1087 = vmatpush1.msra.mxu0 0.0
    %1088 = vmatprep.subr.mxu0 0.0
    %1089 = vmatpush1.msra.mxu0 0.0
    %1090 = vmatprep.subr.mxu0 0.0
    %1091 = vmatpush1.msra.mxu0 0.0
    %1092 = vmatprep.subr.mxu0 0.0
    %1093 = vmatpush1.msra.mxu0 0.0
    %1094 = vmatprep.subr.mxu0 0.0
    %1095 = vmatpush1.msra.mxu0 0.0
    %1096 = vmatprep.subr.mxu0 0.0
    %1097 = vmatpush1.msra.mxu0 0.0
    %1098 = vmatprep.subr.mxu0 0.0
    %1099 = vmatpush1.msra.mxu0 0.0
    %1100 = vmatprep.subr.mxu0 0.0
    %1101 = vmatpush1.msra.mxu0 0.0
    %1102 = vmatprep.subr.mxu0 0.0
    %1103 = vmatpush1.msra.mxu0 0.0
    %1104 = vmatprep.subr.mxu0 0.0
    %1105 = vmatpush1.msra.mxu0 0.0
    %1106 = vmatprep.subr.mxu0 0.0
    %1107 = vmatpush1.msra.mxu0 0.0
    %1108 = vmatprep.subr.mxu0 0.0
    %1109 = vmatpush1.msra.mxu0 0.0
    %1110 = vmatprep.subr.mxu0 0.0
    %1111 = vmatpush1.msra.mxu0 0.0
    %1112 = vmatprep.subr.mxu0 0.0
    %1113 = vmatpush1.msra.mxu0 0.0
    %1114 = vmatprep.subr.mxu0 0.0
    %1115 = vmatpush1.msra.mxu0 0.0
    %1116 = vmatprep.mubr.f32.mxu0 0.0
    %1117 = vmatmul.mubr.f32.gmra.mrb[0].mxu0 %v981
    %v1118 = vpop.f32.mrb[0].mxu0
    %v1119 = vadd.f32 0.0, %v1118
    %v1120 = vpop.f32.mrb[0].mxu0
    %1121 = vmatprep.mubr.f32.mxu0 0.0
    %1122 = vmatmul.mubr.f32.gmra.mrb[0].mxu0 %v984
    %v1123 = vpop.f32.mrb[0].mxu0
    %v1124 = vadd.f32 0.0, %v1123
    %v1125 = vpop.f32.mrb[0].mxu0
    %1126 = vmatprep.mubr.f32.mxu0 0.0
    %1127 = vmatmul.mubr.f32.gmra.mrb[0].mxu0 %v987
    %v1128 = vpop.f32.mrb[0].mxu0
    %v1129 = vadd.f32 0.0, %v1128
    %v1130 = vpop.f32.mrb[0].mxu0
    %1131 = vmatprep.mubr.f32.mxu0 0.0
    %1132 = vmatmul.mubr.f32.gmra.mrb[0].mxu0 %v990
    %v1133 = vpop.f32.mrb[0].mxu0
    %v1134 = vadd.f32 0.0, %v1133
    %v1135 = vpop.f32.mrb[0].mxu0
    %1136 = vmatprep.mubr.f32.mxu0 0.0
    %1137 = vmatmul.mubr.f32.gmra.mrb[0].mxu0 %v993
    %v1138 = vpop.f32.mrb[0].mxu0
    %v1139 = vadd.f32 0.0, %v1138
    %v1140 = vpop.f32.mrb[0].mxu0
    %1141 = vmatprep.mubr.f32.mxu0 0.0
    %1142 = vmatmul.mubr.f32.gmra.mrb[0].mxu0 %v996
    %v1143 = vpop.f32.mrb[0].mxu0
    %v1144 = vadd.f32 0.0, %v1143
    %v1145 = vpop.f32.mrb[0].mxu0
    %1146 = vmatprep.mubr.f32.mxu0 0.0
    %1147 = vmatmul.mubr.f32.gmra.mrb[0].mxu0 %v999
    %v1148 = vpop.f32.mrb[0].mxu0
    %v1149 = vadd.f32 0.0, %v1148
    %v1150 = vpop.f32.mrb[0].mxu0
    %1151 = vmatprep.mubr.f32.mxu0 0.0
    %1152 = vmatmul.mubr.f32.gmra.mrb[0].mxu0 %v1002
    %v1153 = vpop.f32.mrb[0].mxu0
    %v1154 = vadd.f32 0.0, %v1153
    %v1155 = vpop.f32.mrb[0].mxu0
    %1156 = vmatprep.mubr.f32.mxu0 0.0
    %1157 = vmatmul.mubr.f32.gmra.mrb[0].mxu0 %v1005
    %v1158 = vpop.f32.mrb[0].mxu0
    %v1159 = vadd.f32 0.0, %v1158
    %v1160 = vpop.f32.mrb[0].mxu0
    %1161 = vmatprep.mubr.f32.mxu0 0.0
    %1162 = vmatmul.mubr.f32.gmra.mrb[0].mxu0 %v1008
    %v1163 = vpop.f32.mrb[0].mxu0
    %v1164 = vadd.f32 0.0, %v1163
    %v1165 = vpop.f32.mrb[0].mxu0
    %1166 = vmatprep.mubr.f32.mxu0 0.0
    %1167 = vmatmul.mubr.f32.gmra.mrb[0].mxu0 %v1011
    %v1168 = vpop.f32.mrb[0].mxu0
    %v1169 = vadd.f32 0.0, %v1168
    %v1170 = vpop.f32.mrb[0].mxu0
    %1171 = vmatprep.mubr.f32.mxu0 0.0
    %1172 = vmatmul.mubr.f32.gmra.mrb[0].mxu0 %v1014
    %v1173 = vpop.f32.mrb[0].mxu0
    %v1174 = vadd.f32 0.0, %v1173
    %v1175 = vpop.f32.mrb[0].mxu0
    %1176 = vmatprep.mubr.f32.mxu0 0.0
    %1177 = vmatmul.mubr.f32.gmra.mrb[0].mxu0 %v1017
    %v1178 = vpop.f32.mrb[0].mxu0
    %v1179 = vadd.f32 0.0, %v1178
    %v1180 = vpop.f32.mrb[0].mxu0
    %1181 = vmatprep.mubr.f32.mxu0 0.0
    %1182 = vmatmul.mubr.f32.gmra.mrb[0].mxu0 %v1020
    %v1183 = vpop.f32.mrb[0].mxu0
    %v1184 = vadd.f32 0.0, %v1183
    %v1185 = vpop.f32.mrb[0].mxu0
    %1186 = vmatprep.mubr.f32.mxu0 0.0
    %1187 = vmatmul.mubr.f32.gmra.mrb[0].mxu0 %v1023
    %v1188 = vpop.f32.mrb[0].mxu0
    %v1189 = vadd.f32 0.0, %v1188
    %v1190 = vpop.f32.mrb[0].mxu0
    %1191 = vmatprep.mubr.f32.mxu0 0.0
    %1192 = vmatmul.mubr.f32.gmra.mrb[0].mxu0 %v1026
    %v1193 = vpop.f32.mrb[0].mxu0
    %v1194 = vadd.f32 0.0, %v1193
    %v1195 = vpop.f32.mrb[0].mxu0
    %1196 = vmatprep.mubr.f32.mxu0 0.0
    %1197 = vmatmul.mubr.f32.gmra.mrb[0].mxu0 %v1029
    %v1198 = vpop.f32.mrb[0].mxu0
    %v1199 = vadd.f32 0.0, %v1198
    %v1200 = vpop.f32.mrb[0].mxu0
    %1201 = vmatprep.mubr.f32.mxu0 0.0
    %1202 = vmatmul.mubr.f32.gmra.mrb[0].mxu0 %v1032
    %v1203 = vpop.f32.mrb[0].mxu0
    %v1204 = vadd.f32 0.0, %v1203
    %v1205 = vpop.f32.mrb[0].mxu0
    %1206 = vmatprep.mubr.f32.mxu0 0.0
    %1207 = vmatmul.mubr.f32.gmra.mrb[0].mxu0 %v1035
    %v1208 = vpop.f32.mrb[0].mxu0
    %v1209 = vadd.f32 0.0, %v1208
    %v1210 = vpop.f32.mrb[0].mxu0
    %1211 = vmatprep.mubr.f32.mxu0 0.0
    %1212 = vmatmul.mubr.f32.gmra.mrb[0].mxu0 %v1038
    %v1213 = vpop.f32.mrb[0].mxu0
    %v1214 = vadd.f32 0.0, %v1213
    %v1215 = vpop.f32.mrb[0].mxu0
    %1216 = vmatprep.mubr.f32.mxu0 0.0
    %1217 = vmatmul.mubr.f32.gmra.mrb[0].mxu0 %v1041
    %v1218 = vpop.f32.mrb[0].mxu0
    %v1219 = vadd.f32 0.0, %v1218
    %v1220 = vpop.f32.mrb[0].mxu0
    %1221 = vmatprep.mubr.f32.mxu0 0.0
    %1222 = vmatmul.mubr.f32.gmra.mrb[0].mxu0 %v1044
    %v1223 = vpop.f32.mrb[0].mxu0
    %v1224 = vadd.f32 0.0, %v1223
    %v1225 = vpop.f32.mrb[0].mxu0
    %1226 = vmatprep.mubr.f32.mxu0 0.0
    %1227 = vmatmul.mubr.f32.gmra.mrb[0].mxu0 %v1047
    %v1228 = vpop.f32.mrb[0].mxu0
    %v1229 = vadd.f32 0.0, %v1228
    %v1230 = vpop.f32.mrb[0].mxu0
    %1231 = vmatprep.mubr.f32.mxu0 0.0
    %1232 = vmatmul.mubr.f32.gmra.mrb[0].mxu0 %v1050
    %v1233 = vpop.f32.mrb[0].mxu0
    %v1234 = vadd.f32 0.0, %v1233
    %v1235 = vpop.f32.mrb[0].mxu0
    %1236 = vdwg.mxu0
    %v1238 = vsel %vm129, %v804, 0
    %v1241 = vsel %vm129, %v805, 0
    %v1244 = vsel %vm129, %v806, 0
    %v1247 = vsel %vm129, %v807, 0
    %v1250 = vsel %vm129, %v836, 0
    %v1253 = vsel %vm129, %v837, 0
    %v1256 = vsel %vm129, %v838, 0
    %v1259 = vsel %vm129, %v839, 0
    %v1262 = vsel %vm129, %v868, 0
    %v1265 = vsel %vm129, %v869, 0
    %v1268 = vsel %vm129, %v870, 0
    %v1271 = vsel %vm129, %v871, 0
    %v1274 = vsel %vm129, %v900, 0
    %v1277 = vsel %vm129, %v901, 0
    %v1280 = vsel %vm129, %v902, 0
    %v1283 = vsel %vm129, %v903, 0
    %v1286 = vsel %vm129, %v932, 0
    %v1289 = vsel %vm129, %v933, 0
    %v1292 = vsel %vm129, %v934, 0
    %v1295 = vsel %vm129, %v935, 0
    %v1298 = vsel %vm129, %v964, 0
    %v1301 = vsel %vm129, %v965, 0
    %v1304 = vsel %vm129, %v966, 0
    %v1307 = vsel %vm129, %v967, 0
    %1309 = vmatprep.subr.mxu0 0.0
    %1310 = vmatpush1.msra.mxu0 %v125
    %1311 = vmatprep.subr.mxu0 0.0
    %1312 = vmatpush1.msra.mxu0 %v126
    %1313 = vmatprep.subr.mxu0 0.0
    %1314 = vmatpush1.msra.mxu0 %v127
    %1315 = vmatprep.subr.mxu0 0.0
    %1316 = vmatpush1.msra.mxu0 %v128
    %1317 = vmatprep.subr.mxu0 0.0
    %1318 = vmatpush1.msra.mxu0 0.0
    %1319 = vmatprep.subr.mxu0 0.0
    %1320 = vmatpush1.msra.mxu0 0.0
    %1321 = vmatprep.subr.mxu0 0.0
    %1322 = vmatpush1.msra.mxu0 0.0
    %1323 = vmatprep.subr.mxu0 0.0
    %1324 = vmatpush1.msra.mxu0 0.0
    %1325 = vmatprep.subr.mxu0 0.0
    %1326 = vmatpush1.msra.mxu0 0.0
    %1327 = vmatprep.subr.mxu0 0.0
    %1328 = vmatpush1.msra.mxu0 0.0
    %1329 = vmatprep.subr.mxu0 0.0
    %1330 = vmatpush1.msra.mxu0 0.0
    %1331 = vmatprep.subr.mxu0 0.0
    %1332 = vmatpush1.msra.mxu0 0.0
    %1333 = vmatprep.subr.mxu0 0.0
    %1334 = vmatpush1.msra.mxu0 0.0
    %1335 = vmatprep.subr.mxu0 0.0
    %1336 = vmatpush1.msra.mxu0 0.0
    %1337 = vmatprep.subr.mxu0 0.0
    %1338 = vmatpush1.msra.mxu0 0.0
    %1339 = vmatprep.subr.mxu0 0.0
    %1340 = vmatpush1.msra.mxu0 0.0
    %1341 = vmatprep.subr.mxu0 0.0
    %1342 = vmatpush1.msra.mxu0 0.0
    %1343 = vmatprep.subr.mxu0 0.0
    %1344 = vmatpush1.msra.mxu0 0.0
    %1345 = vmatprep.subr.mxu0 0.0
    %1346 = vmatpush1.msra.mxu0 0.0
    %1347 = vmatprep.subr.mxu0 0.0
    %1348 = vmatpush1.msra.mxu0 0.0
    %1349 = vmatprep.subr.mxu0 0.0
    %1350 = vmatpush1.msra.mxu0 0.0
    %1351 = vmatprep.subr.mxu0 0.0
    %1352 = vmatpush1.msra.mxu0 0.0
    %1353 = vmatprep.subr.mxu0 0.0
    %1354 = vmatpush1.msra.mxu0 0.0
    %1355 = vmatprep.subr.mxu0 0.0
    %1356 = vmatpush1.msra.mxu0 0.0
    %1357 = vmatprep.subr.mxu0 0.0
    %1358 = vmatpush1.msra.mxu0 0.0
    %1359 = vmatprep.subr.mxu0 0.0
    %1360 = vmatpush1.msra.mxu0 0.0
    %1361 = vmatprep.subr.mxu0 0.0
    %1362 = vmatpush1.msra.mxu0 0.0
    %1363 = vmatprep.subr.mxu0 0.0
    %1364 = vmatpush1.msra.mxu0 0.0
    %1365 = vmatprep.subr.mxu0 0.0
    %1366 = vmatpush1.msra.mxu0 0.0
    %1367 = vmatprep.subr.mxu0 0.0
    %1368 = vmatpush1.msra.mxu0 0.0
    %1369 = vmatprep.subr.mxu0 0.0
    %1370 = vmatpush1.msra.mxu0 0.0
    %1371 = vmatprep.subr.mxu0 0.0
    %1372 = vmatpush1.msra.mxu0 0.0
    %1373 = vmatprep.mubr.f32.mxu0 0.0
    %1374 = vmatmul.mubr.f32.gmra.mrb[0].mxu0 %v1238
    %v1375 = vpop.f32.mrb[0].mxu0
    %v1376 = vadd.f32 0.0, %v1375
    %v1377 = vpop.f32.mrb[0].mxu0
    %1378 = vmatprep.mubr.f32.mxu0 0.0
    %1379 = vmatmul.mubr.f32.gmra.mrb[0].mxu0 %v1241
    %v1380 = vpop.f32.mrb[0].mxu0
    %v1381 = vadd.f32 0.0, %v1380
    %v1382 = vpop.f32.mrb[0].mxu0
    %1383 = vmatprep.mubr.f32.mxu0 0.0
    %1384 = vmatmul.mubr.f32.gmra.mrb[0].mxu0 %v1244
    %v1385 = vpop.f32.mrb[0].mxu0
    %v1386 = vadd.f32 0.0, %v1385
    %v1387 = vpop.f32.mrb[0].mxu0
    %1388 = vmatprep.mubr.f32.mxu0 0.0
    %1389 = vmatmul.mubr.f32.gmra.mrb[0].mxu0 %v1247
    %v1390 = vpop.f32.mrb[0].mxu0
    %v1391 = vadd.f32 0.0, %v1390
    %v1392 = vpop.f32.mrb[0].mxu0
    %1393 = vmatprep.mubr.f32.mxu0 0.0
    %1394 = vmatmul.mubr.f32.gmra.mrb[0].mxu0 %v1250
    %v1395 = vpop.f32.mrb[0].mxu0
    %v1396 = vadd.f32 0.0, %v1395
    %v1397 = vpop.f32.mrb[0].mxu0
    %1398 = vmatprep.mubr.f32.mxu0 0.0
    %1399 = vmatmul.mubr.f32.gmra.mrb[0].mxu0 %v1253
    %v1400 = vpop.f32.mrb[0].mxu0
    %v1401 = vadd.f32 0.0, %v1400
    %v1402 = vpop.f32.mrb[0].mxu0
    %1403 = vmatprep.mubr.f32.mxu0 0.0
    %1404 = vmatmul.mubr.f32.gmra.mrb[0].mxu0 %v1256
    %v1405 = vpop.f32.mrb[0].mxu0
    %v1406 = vadd.f32 0.0, %v1405
    %v1407 = vpop.f32.mrb[0].mxu0
    %1408 = vmatprep.mubr.f32.mxu0 0.0
    %1409 = vmatmul.mubr.f32.gmra.mrb[0].mxu0 %v1259
    %v1410 = vpop.f32.mrb[0].mxu0
    %v1411 = vadd.f32 0.0, %v1410
    %v1412 = vpop.f32.mrb[0].mxu0
    %1413 = vmatprep.mubr.f32.mxu0 0.0
    %1414 = vmatmul.mubr.f32.gmra.mrb[0].mxu0 %v1262
    %v1415 = vpop.f32.mrb[0].mxu0
    %v1416 = vadd.f32 0.0, %v1415
    %v1417 = vpop.f32.mrb[0].mxu0
    %1418 = vmatprep.mubr.f32.mxu0 0.0
    %1419 = vmatmul.mubr.f32.gmra.mrb[0].mxu0 %v1265
    %v1420 = vpop.f32.mrb[0].mxu0
    %v1421 = vadd.f32 0.0, %v1420
    %v1422 = vpop.f32.mrb[0].mxu0
    %1423 = vmatprep.mubr.f32.mxu0 0.0
    %1424 = vmatmul.mubr.f32.gmra.mrb[0].mxu0 %v1268
    %v1425 = vpop.f32.mrb[0].mxu0
    %v1426 = vadd.f32 0.0, %v1425
    %v1427 = vpop.f32.mrb[0].mxu0
    %1428 = vmatprep.mubr.f32.mxu0 0.0
    %1429 = vmatmul.mubr.f32.gmra.mrb[0].mxu0 %v1271
    %v1430 = vpop.f32.mrb[0].mxu0
    %v1431 = vadd.f32 0.0, %v1430
    %v1432 = vpop.f32.mrb[0].mxu0
    %1433 = vmatprep.mubr.f32.mxu0 0.0
    %1434 = vmatmul.mubr.f32.gmra.mrb[0].mxu0 %v1274
    %v1435 = vpop.f32.mrb[0].mxu0
    %v1436 = vadd.f32 0.0, %v1435
    %v1437 = vpop.f32.mrb[0].mxu0
    %1438 = vmatprep.mubr.f32.mxu0 0.0
    %1439 = vmatmul.mubr.f32.gmra.mrb[0].mxu0 %v1277
    %v1440 = vpop.f32.mrb[0].mxu0
    %v1441 = vadd.f32 0.0, %v1440
    %v1442 = vpop.f32.mrb[0].mxu0
    %1443 = vmatprep.mubr.f32.mxu0 0.0
    %1444 = vmatmul.mubr.f32.gmra.mrb[0].mxu0 %v1280
    %v1445 = vpop.f32.mrb[0].mxu0
    %v1446 = vadd.f32 0.0, %v1445
    %v1447 = vpop.f32.mrb[0].mxu0
    %1448 = vmatprep.mubr.f32.mxu0 0.0
    %1449 = vmatmul.mubr.f32.gmra.mrb[0].mxu0 %v1283
    %v1450 = vpop.f32.mrb[0].mxu0
    %v1451 = vadd.f32 0.0, %v1450
    %v1452 = vpop.f32.mrb[0].mxu0
    %1453 = vmatprep.mubr.f32.mxu0 0.0
    %1454 = vmatmul.mubr.f32.gmra.mrb[0].mxu0 %v1286
    %v1455 = vpop.f32.mrb[0].mxu0
    %v1456 = vadd.f32 0.0, %v1455
    %v1457 = vpop.f32.mrb[0].mxu0
    %1458 = vmatprep.mubr.f32.mxu0 0.0
    %1459 = vmatmul.mubr.f32.gmra.mrb[0].mxu0 %v1289
    %v1460 = vpop.f32.mrb[0].mxu0
    %v1461 = vadd.f32 0.0, %v1460
    %v1462 = vpop.f32.mrb[0].mxu0
    %1463 = vmatprep.mubr.f32.mxu0 0.0
    %1464 = vmatmul.mubr.f32.gmra.mrb[0].mxu0 %v1292
    %v1465 = vpop.f32.mrb[0].mxu0
    %v1466 = vadd.f32 0.0, %v1465
    %v1467 = vpop.f32.mrb[0].mxu0
    %1468 = vmatprep.mubr.f32.mxu0 0.0
    %1469 = vmatmul.mubr.f32.gmra.mrb[0].mxu0 %v1295
    %v1470 = vpop.f32.mrb[0].mxu0
    %v1471 = vadd.f32 0.0, %v1470
    %v1472 = vpop.f32.mrb[0].mxu0
    %1473 = vmatprep.mubr.f32.mxu0 0.0
    %1474 = vmatmul.mubr.f32.gmra.mrb[0].mxu0 %v1298
    %v1475 = vpop.f32.mrb[0].mxu0
    %v1476 = vadd.f32 0.0, %v1475
    %v1477 = vpop.f32.mrb[0].mxu0
    %1478 = vmatprep.mubr.f32.mxu0 0.0
    %1479 = vmatmul.mubr.f32.gmra.mrb[0].mxu0 %v1301
    %v1480 = vpop.f32.mrb[0].mxu0
    %v1481 = vadd.f32 0.0, %v1480
    %v1482 = vpop.f32.mrb[0].mxu0
    %1483 = vmatprep.mubr.f32.mxu0 0.0
    %1484 = vmatmul.mubr.f32.gmra.mrb[0].mxu0 %v1304
    %v1485 = vpop.f32.mrb[0].mxu0
    %v1486 = vadd.f32 0.0, %v1485
    %v1487 = vpop.f32.mrb[0].mxu0
    %1488 = vmatprep.mubr.f32.mxu0 0.0
    %1489 = vmatmul.mubr.f32.gmra.mrb[0].mxu0 %v1307
    %v1490 = vpop.f32.mrb[0].mxu0
    %v1491 = vadd.f32 0.0, %v1490
    %v1492 = vpop.f32.mrb[0].mxu0
    %1493 = vdwg.mxu0
    %v1494 = vadd.f32 %v1119, %v1376
    %v1495 = vadd.f32 %v1124, %v1381
    %v1496 = vadd.f32 %v1129, %v1386
    %v1497 = vadd.f32 %v1134, %v1391
    %v1498 = vadd.f32 %v1139, %v1396
    %v1499 = vadd.f32 %v1144, %v1401
    %v1500 = vadd.f32 %v1149, %v1406
    %v1501 = vadd.f32 %v1154, %v1411
    %v1502 = vadd.f32 %v1159, %v1416
    %v1503 = vadd.f32 %v1164, %v1421
    %v1504 = vadd.f32 %v1169, %v1426
    %v1505 = vadd.f32 %v1174, %v1431
    %v1506 = vadd.f32 %v1179, %v1436
    %v1507 = vadd.f32 %v1184, %v1441
    %v1508 = vadd.f32 %v1189, %v1446
    %v1509 = vadd.f32 %v1194, %v1451
    %v1510 = vadd.f32 %v1199, %v1456
    %v1511 = vadd.f32 %v1204, %v1461
    %v1512 = vadd.f32 %v1209, %v1466
    %v1513 = vadd.f32 %v1214, %v1471
    %v1514 = vadd.f32 %v1219, %v1476
    %v1515 = vadd.f32 %v1224, %v1481
    %v1516 = vadd.f32 %v1229, %v1486
    %v1517 = vadd.f32 %v1234, %v1491
    %1518 = vmatprep.subr.mxu0 0.0
    %1519 = vmatpush1.msra.mxu0 %v121
    %1520 = vmatprep.subr.mxu0 0.0
    %1521 = vmatpush1.msra.mxu0 %v122
    %1522 = vmatprep.subr.mxu0 0.0
    %1523 = vmatpush1.msra.mxu0 %v123
    %1524 = vmatprep.subr.mxu0 0.0
    %1525 = vmatpush1.msra.mxu0 %v124
    %1526 = vmatprep.subr.mxu0 0.0
    %1527 = vmatpush1.msra.mxu0 0.0
    %1528 = vmatprep.subr.mxu0 0.0
    %1529 = vmatpush1.msra.mxu0 0.0
    %1530 = vmatprep.subr.mxu0 0.0
    %1531 = vmatpush1.msra.mxu0 0.0
    %1532 = vmatprep.subr.mxu0 0.0
    %1533 = vmatpush1.msra.mxu0 0.0
    %1534 = vmatprep.subr.mxu0 0.0
    %1535 = vmatpush1.msra.mxu0 0.0
    %1536 = vmatprep.subr.mxu0 0.0
    %1537 = vmatpush1.msra.mxu0 0.0
    %1538 = vmatprep.subr.mxu0 0.0
    %1539 = vmatpush1.msra.mxu0 0.0
    %1540 = vmatprep.subr.mxu0 0.0
    %1541 = vmatpush1.msra.mxu0 0.0
    %1542 = vmatprep.subr.mxu0 0.0
    %1543 = vmatpush1.msra.mxu0 0.0
    %1544 = vmatprep.subr.mxu0 0.0
    %1545 = vmatpush1.msra.mxu0 0.0
    %1546 = vmatprep.subr.mxu0 0.0
    %1547 = vmatpush1.msra.mxu0 0.0
    %1548 = vmatprep.subr.mxu0 0.0
    %1549 = vmatpush1.msra.mxu0 0.0
    %1550 = vmatprep.subr.mxu0 0.0
    %1551 = vmatpush1.msra.mxu0 0.0
    %1552 = vmatprep.subr.mxu0 0.0
    %1553 = vmatpush1.msra.mxu0 0.0
    %1554 = vmatprep.subr.mxu0 0.0
    %1555 = vmatpush1.msra.mxu0 0.0
    %1556 = vmatprep.subr.mxu0 0.0
    %1557 = vmatpush1.msra.mxu0 0.0
    %1558 = vmatprep.subr.mxu0 0.0
    %1559 = vmatpush1.msra.mxu0 0.0
    %1560 = vmatprep.subr.mxu0 0.0
    %1561 = vmatpush1.msra.mxu0 0.0
    %1562 = vmatprep.subr.mxu0 0.0
    %1563 = vmatpush1.msra.mxu0 0.0
    %1564 = vmatprep.subr.mxu0 0.0
    %1565 = vmatpush1.msra.mxu0 0.0
    %1566 = vmatprep.subr.mxu0 0.0
    %1567 = vmatpush1.msra.mxu0 0.0
    %1568 = vmatprep.subr.mxu0 0.0
    %1569 = vmatpush1.msra.mxu0 0.0
    %1570 = vmatprep.subr.mxu0 0.0
    %1571 = vmatpush1.msra.mxu0 0.0
    %1572 = vmatprep.subr.mxu0 0.0
    %1573 = vmatpush1.msra.mxu0 0.0
    %1574 = vmatprep.subr.mxu0 0.0
    %1575 = vmatpush1.msra.mxu0 0.0
    %1576 = vmatprep.subr.mxu0 0.0
    %1577 = vmatpush1.msra.mxu0 0.0
    %1578 = vmatprep.subr.mxu0 0.0
    %1579 = vmatpush1.msra.mxu0 0.0
    %1580 = vmatprep.subr.mxu0 0.0
    %1581 = vmatpush1.msra.mxu0 0.0
    %1582 = vmatprep.mubr.f32.mxu0 0.0
    %1583 = vmatmul.mubr.f32.gmra.mrb[0].mxu0 %v1238
    %v1584 = vpop.f32.mrb[0].mxu0
    %v1585 = vadd.f32 0.0, %v1584
    %v1586 = vpop.f32.mrb[0].mxu0
    %1587 = vmatprep.mubr.f32.mxu0 0.0
    %1588 = vmatmul.mubr.f32.gmra.mrb[0].mxu0 %v1241
    %v1589 = vpop.f32.mrb[0].mxu0
    %v1590 = vadd.f32 0.0, %v1589
    %v1591 = vpop.f32.mrb[0].mxu0
    %1592 = vmatprep.mubr.f32.mxu0 0.0
    %1593 = vmatmul.mubr.f32.gmra.mrb[0].mxu0 %v1244
    %v1594 = vpop.f32.mrb[0].mxu0
    %v1595 = vadd.f32 0.0, %v1594
    %v1596 = vpop.f32.mrb[0].mxu0
    %1597 = vmatprep.mubr.f32.mxu0 0.0
    %1598 = vmatmul.mubr.f32.gmra.mrb[0].mxu0 %v1247
    %v1599 = vpop.f32.mrb[0].mxu0
    %v1600 = vadd.f32 0.0, %v1599
    %v1601 = vpop.f32.mrb[0].mxu0
    %1602 = vmatprep.mubr.f32.mxu0 0.0
    %1603 = vmatmul.mubr.f32.gmra.mrb[0].mxu0 %v1250
    %v1604 = vpop.f32.mrb[0].mxu0
    %v1605 = vadd.f32 0.0, %v1604
    %v1606 = vpop.f32.mrb[0].mxu0
    %1607 = vmatprep.mubr.f32.mxu0 0.0
    %1608 = vmatmul.mubr.f32.gmra.mrb[0].mxu0 %v1253
    %v1609 = vpop.f32.mrb[0].mxu0
    %v1610 = vadd.f32 0.0, %v1609
    %v1611 = vpop.f32.mrb[0].mxu0
    %1612 = vmatprep.mubr.f32.mxu0 0.0
    %1613 = vmatmul.mubr.f32.gmra.mrb[0].mxu0 %v1256
    %v1614 = vpop.f32.mrb[0].mxu0
    %v1615 = vadd.f32 0.0, %v1614
    %v1616 = vpop.f32.mrb[0].mxu0
    %1617 = vmatprep.mubr.f32.mxu0 0.0
    %1618 = vmatmul.mubr.f32.gmra.mrb[0].mxu0 %v1259
    %v1619 = vpop.f32.mrb[0].mxu0
    %v1620 = vadd.f32 0.0, %v1619
    %v1621 = vpop.f32.mrb[0].mxu0
    %1622 = vmatprep.mubr.f32.mxu0 0.0
    %1623 = vmatmul.mubr.f32.gmra.mrb[0].mxu0 %v1262
    %v1624 = vpop.f32.mrb[0].mxu0
    %v1625 = vadd.f32 0.0, %v1624
    %v1626 = vpop.f32.mrb[0].mxu0
    %1627 = vmatprep.mubr.f32.mxu0 0.0
    %1628 = vmatmul.mubr.f32.gmra.mrb[0].mxu0 %v1265
    %v1629 = vpop.f32.mrb[0].mxu0
    %v1630 = vadd.f32 0.0, %v1629
    %v1631 = vpop.f32.mrb[0].mxu0
    %1632 = vmatprep.mubr.f32.mxu0 0.0
    %1633 = vmatmul.mubr.f32.gmra.mrb[0].mxu0 %v1268
    %v1634 = vpop.f32.mrb[0].mxu0
    %v1635 = vadd.f32 0.0, %v1634
    %v1636 = vpop.f32.mrb[0].mxu0
    %1637 = vmatprep.mubr.f32.mxu0 0.0
    %1638 = vmatmul.mubr.f32.gmra.mrb[0].mxu0 %v1271
    %v1639 = vpop.f32.mrb[0].mxu0
    %v1640 = vadd.f32 0.0, %v1639
    %v1641 = vpop.f32.mrb[0].mxu0
    %1642 = vmatprep.mubr.f32.mxu0 0.0
    %1643 = vmatmul.mubr.f32.gmra.mrb[0].mxu0 %v1274
    %v1644 = vpop.f32.mrb[0].mxu0
    %v1645 = vadd.f32 0.0, %v1644
    %v1646 = vpop.f32.mrb[0].mxu0
    %1647 = vmatprep.mubr.f32.mxu0 0.0
    %1648 = vmatmul.mubr.f32.gmra.mrb[0].mxu0 %v1277
    %v1649 = vpop.f32.mrb[0].mxu0
    %v1650 = vadd.f32 0.0, %v1649
    %v1651 = vpop.f32.mrb[0].mxu0
    %1652 = vmatprep.mubr.f32.mxu0 0.0
    %1653 = vmatmul.mubr.f32.gmra.mrb[0].mxu0 %v1280
    %v1654 = vpop.f32.mrb[0].mxu0
    %v1655 = vadd.f32 0.0, %v1654
    %v1656 = vpop.f32.mrb[0].mxu0
    %1657 = vmatprep.mubr.f32.mxu0 0.0
    %1658 = vmatmul.mubr.f32.gmra.mrb[0].mxu0 %v1283
    %v1659 = vpop.f32.mrb[0].mxu0
    %v1660 = vadd.f32 0.0, %v1659
    %v1661 = vpop.f32.mrb[0].mxu0
    %1662 = vmatprep.mubr.f32.mxu0 0.0
    %1663 = vmatmul.mubr.f32.gmra.mrb[0].mxu0 %v1286
    %v1664 = vpop.f32.mrb[0].mxu0
    %v1665 = vadd.f32 0.0, %v1664
    %v1666 = vpop.f32.mrb[0].mxu0
    %1667 = vmatprep.mubr.f32.mxu0 0.0
    %1668 = vmatmul.mubr.f32.gmra.mrb[0].mxu0 %v1289
    %v1669 = vpop.f32.mrb[0].mxu0
    %v1670 = vadd.f32 0.0, %v1669
    %v1671 = vpop.f32.mrb[0].mxu0
    %1672 = vmatprep.mubr.f32.mxu0 0.0
    %1673 = vmatmul.mubr.f32.gmra.mrb[0].mxu0 %v1292
    %v1674 = vpop.f32.mrb[0].mxu0
    %v1675 = vadd.f32 0.0, %v1674
    %v1676 = vpop.f32.mrb[0].mxu0
    %1677 = vmatprep.mubr.f32.mxu0 0.0
    %1678 = vmatmul.mubr.f32.gmra.mrb[0].mxu0 %v1295
    %v1679 = vpop.f32.mrb[0].mxu0
    %v1680 = vadd.f32 0.0, %v1679
    %v1681 = vpop.f32.mrb[0].mxu0
    %1682 = vmatprep.mubr.f32.mxu0 0.0
    %1683 = vmatmul.mubr.f32.gmra.mrb[0].mxu0 %v1298
    %v1684 = vpop.f32.mrb[0].mxu0
    %v1685 = vadd.f32 0.0, %v1684
    %v1686 = vpop.f32.mrb[0].mxu0
    %1687 = vmatprep.mubr.f32.mxu0 0.0
    %1688 = vmatmul.mubr.f32.gmra.mrb[0].mxu0 %v1301
    %v1689 = vpop.f32.mrb[0].mxu0
    %v1690 = vadd.f32 0.0, %v1689
    %v1691 = vpop.f32.mrb[0].mxu0
    %1692 = vmatprep.mubr.f32.mxu0 0.0
    %1693 = vmatmul.mubr.f32.gmra.mrb[0].mxu0 %v1304
    %v1694 = vpop.f32.mrb[0].mxu0
    %v1695 = vadd.f32 0.0, %v1694
    %v1696 = vpop.f32.mrb[0].mxu0
    %1697 = vmatprep.mubr.f32.mxu0 0.0
    %1698 = vmatmul.mubr.f32.gmra.mrb[0].mxu0 %v1307
    %v1699 = vpop.f32.mrb[0].mxu0
    %v1700 = vadd.f32 0.0, %v1699
    %v1701 = vpop.f32.mrb[0].mxu0
    %1702 = vdwg.mxu0
    %1703 = vmatprep.subr.mxu0 0.0
    %1704 = vmatpush1.msra.mxu0 %v125
    %1705 = vmatprep.subr.mxu0 0.0
    %1706 = vmatpush1.msra.mxu0 %v126
    %1707 = vmatprep.subr.mxu0 0.0
    %1708 = vmatpush1.msra.mxu0 %v127
    %1709 = vmatprep.subr.mxu0 0.0
    %1710 = vmatpush1.msra.mxu0 %v128
    %1711 = vmatprep.subr.mxu0 0.0
    %1712 = vmatpush1.msra.mxu0 0.0
    %1713 = vmatprep.subr.mxu0 0.0
    %1714 = vmatpush1.msra.mxu0 0.0
    %1715 = vmatprep.subr.mxu0 0.0
    %1716 = vmatpush1.msra.mxu0 0.0
    %1717 = vmatprep.subr.mxu0 0.0
    %1718 = vmatpush1.msra.mxu0 0.0
    %1719 = vmatprep.subr.mxu0 0.0
    %1720 = vmatpush1.msra.mxu0 0.0
    %1721 = vmatprep.subr.mxu0 0.0
    %1722 = vmatpush1.msra.mxu0 0.0
    %1723 = vmatprep.subr.mxu0 0.0
    %1724 = vmatpush1.msra.mxu0 0.0
    %1725 = vmatprep.subr.mxu0 0.0
    %1726 = vmatpush1.msra.mxu0 0.0
    %1727 = vmatprep.subr.mxu0 0.0
    %1728 = vmatpush1.msra.mxu0 0.0
    %1729 = vmatprep.subr.mxu0 0.0
    %1730 = vmatpush1.msra.mxu0 0.0
    %1731 = vmatprep.subr.mxu0 0.0
    %1732 = vmatpush1.msra.mxu0 0.0
    %1733 = vmatprep.subr.mxu0 0.0
    %1734 = vmatpush1.msra.mxu0 0.0
    %1735 = vmatprep.subr.mxu0 0.0
    %1736 = vmatpush1.msra.mxu0 0.0
    %1737 = vmatprep.subr.mxu0 0.0
    %1738 = vmatpush1.msra.mxu0 0.0
    %1739 = vmatprep.subr.mxu0 0.0
    %1740 = vmatpush1.msra.mxu0 0.0
    %1741 = vmatprep.subr.mxu0 0.0
    %1742 = vmatpush1.msra.mxu0 0.0
    %1743 = vmatprep.subr.mxu0 0.0
    %1744 = vmatpush1.msra.mxu0 0.0
    %1745 = vmatprep.subr.mxu0 0.0
    %1746 = vmatpush1.msra.mxu0 0.0
    %1747 = vmatprep.subr.mxu0 0.0
    %1748 = vmatpush1.msra.mxu0 0.0
    %1749 = vmatprep.subr.mxu0 0.0
    %1750 = vmatpush1.msra.mxu0 0.0
    %1751 = vmatprep.subr.mxu0 0.0
    %1752 = vmatpush1.msra.mxu0 0.0
    %1753 = vmatprep.subr.mxu0 0.0
    %1754 = vmatpush1.msra.mxu0 0.0
    %1755 = vmatprep.subr.mxu0 0.0
    %1756 = vmatpush1.msra.mxu0 0.0
    %1757 = vmatprep.subr.mxu0 0.0
    %1758 = vmatpush1.msra.mxu0 0.0
    %1759 = vmatprep.subr.mxu0 0.0
    %1760 = vmatpush1.msra.mxu0 0.0
    %1761 = vmatprep.subr.mxu0 0.0
    %1762 = vmatpush1.msra.mxu0 0.0
    %1763 = vmatprep.subr.mxu0 0.0
    %1764 = vmatpush1.msra.mxu0 0.0
    %1765 = vmatprep.subr.mxu0 0.0
    %1766 = vmatpush1.msra.mxu0 0.0
    %1767 = vmatprep.mubr.f32.mxu0 0.0
    %1768 = vmatmul.mubr.f32.gmra.mrb[0].mxu0 %v981
    %v1769 = vpop.f32.mrb[0].mxu0
    %v1770 = vadd.f32 0.0, %v1769
    %v1771 = vpop.f32.mrb[0].mxu0
    %1772 = vmatprep.mubr.f32.mxu0 0.0
    %1773 = vmatmul.mubr.f32.gmra.mrb[0].mxu0 %v984
    %v1774 = vpop.f32.mrb[0].mxu0
    %v1775 = vadd.f32 0.0, %v1774
    %v1776 = vpop.f32.mrb[0].mxu0
    %1777 = vmatprep.mubr.f32.mxu0 0.0
    %1778 = vmatmul.mubr.f32.gmra.mrb[0].mxu0 %v987
    %v1779 = vpop.f32.mrb[0].mxu0
    %v1780 = vadd.f32 0.0, %v1779
    %v1781 = vpop.f32.mrb[0].mxu0
    %1782 = vmatprep.mubr.f32.mxu0 0.0
    %1783 = vmatmul.mubr.f32.gmra.mrb[0].mxu0 %v990
    %v1784 = vpop.f32.mrb[0].mxu0
    %v1785 = vadd.f32 0.0, %v1784
    %v1786 = vpop.f32.mrb[0].mxu0
    %1787 = vmatprep.mubr.f32.mxu0 0.0
    %1788 = vmatmul.mubr.f32.gmra.mrb[0].mxu0 %v993
    %v1789 = vpop.f32.mrb[0].mxu0
    %v1790 = vadd.f32 0.0, %v1789
    %v1791 = vpop.f32.mrb[0].mxu0
    %1792 = vmatprep.mubr.f32.mxu0 0.0
    %1793 = vmatmul.mubr.f32.gmra.mrb[0].mxu0 %v996
    %v1794 = vpop.f32.mrb[0].mxu0
    %v1795 = vadd.f32 0.0, %v1794
    %v1796 = vpop.f32.mrb[0].mxu0
    %1797 = vmatprep.mubr.f32.mxu0 0.0
    %1798 = vmatmul.mubr.f32.gmra.mrb[0].mxu0 %v999
    %v1799 = vpop.f32.mrb[0].mxu0
    %v1800 = vadd.f32 0.0, %v1799
    %v1801 = vpop.f32.mrb[0].mxu0
    %1802 = vmatprep.mubr.f32.mxu0 0.0
    %1803 = vmatmul.mubr.f32.gmra.mrb[0].mxu0 %v1002
    %v1804 = vpop.f32.mrb[0].mxu0
    %v1805 = vadd.f32 0.0, %v1804
    %v1806 = vpop.f32.mrb[0].mxu0
    %1807 = vmatprep.mubr.f32.mxu0 0.0
    %1808 = vmatmul.mubr.f32.gmra.mrb[0].mxu0 %v1005
    %v1809 = vpop.f32.mrb[0].mxu0
    %v1810 = vadd.f32 0.0, %v1809
    %v1811 = vpop.f32.mrb[0].mxu0
    %1812 = vmatprep.mubr.f32.mxu0 0.0
    %1813 = vmatmul.mubr.f32.gmra.mrb[0].mxu0 %v1008
    %v1814 = vpop.f32.mrb[0].mxu0
    %v1815 = vadd.f32 0.0, %v1814
    %v1816 = vpop.f32.mrb[0].mxu0
    %1817 = vmatprep.mubr.f32.mxu0 0.0
    %1818 = vmatmul.mubr.f32.gmra.mrb[0].mxu0 %v1011
    %v1819 = vpop.f32.mrb[0].mxu0
    %v1820 = vadd.f32 0.0, %v1819
    %v1821 = vpop.f32.mrb[0].mxu0
    %1822 = vmatprep.mubr.f32.mxu0 0.0
    %1823 = vmatmul.mubr.f32.gmra.mrb[0].mxu0 %v1014
    %v1824 = vpop.f32.mrb[0].mxu0
    %v1825 = vadd.f32 0.0, %v1824
    %v1826 = vpop.f32.mrb[0].mxu0
    %1827 = vmatprep.mubr.f32.mxu0 0.0
    %1828 = vmatmul.mubr.f32.gmra.mrb[0].mxu0 %v1017
    %v1829 = vpop.f32.mrb[0].mxu0
    %v1830 = vadd.f32 0.0, %v1829
    %v1831 = vpop.f32.mrb[0].mxu0
    %1832 = vmatprep.mubr.f32.mxu0 0.0
    %1833 = vmatmul.mubr.f32.gmra.mrb[0].mxu0 %v1020
    %v1834 = vpop.f32.mrb[0].mxu0
    %v1835 = vadd.f32 0.0, %v1834
    %v1836 = vpop.f32.mrb[0].mxu0
    %1837 = vmatprep.mubr.f32.mxu0 0.0
    %1838 = vmatmul.mubr.f32.gmra.mrb[0].mxu0 %v1023
    %v1839 = vpop.f32.mrb[0].mxu0
    %v1840 = vadd.f32 0.0, %v1839
    %v1841 = vpop.f32.mrb[0].mxu0
    %1842 = vmatprep.mubr.f32.mxu0 0.0
    %1843 = vmatmul.mubr.f32.gmra.mrb[0].mxu0 %v1026
    %v1844 = vpop.f32.mrb[0].mxu0
    %v1845 = vadd.f32 0.0, %v1844
    %v1846 = vpop.f32.mrb[0].mxu0
    %1847 = vmatprep.mubr.f32.mxu0 0.0
    %1848 = vmatmul.mubr.f32.gmra.mrb[0].mxu0 %v1029
    %v1849 = vpop.f32.mrb[0].mxu0
    %v1850 = vadd.f32 0.0, %v1849
    %v1851 = vpop.f32.mrb[0].mxu0
    %1852 = vmatprep.mubr.f32.mxu0 0.0
    %1853 = vmatmul.mubr.f32.gmra.mrb[0].mxu0 %v1032
    %v1854 = vpop.f32.mrb[0].mxu0
    %v1855 = vadd.f32 0.0, %v1854
    %v1856 = vpop.f32.mrb[0].mxu0
    %1857 = vmatprep.mubr.f32.mxu0 0.0
    %1858 = vmatmul.mubr.f32.gmra.mrb[0].mxu0 %v1035
    %v1859 = vpop.f32.mrb[0].mxu0
    %v1860 = vadd.f32 0.0, %v1859
    %v1861 = vpop.f32.mrb[0].mxu0
    %1862 = vmatprep.mubr.f32.mxu0 0.0
    %1863 = vmatmul.mubr.f32.gmra.mrb[0].mxu0 %v1038
    %v1864 = vpop.f32.mrb[0].mxu0
    %v1865 = vadd.f32 0.0, %v1864
    %v1866 = vpop.f32.mrb[0].mxu0
    %1867 = vmatprep.mubr.f32.mxu0 0.0
    %1868 = vmatmul.mubr.f32.gmra.mrb[0].mxu0 %v1041
    %v1869 = vpop.f32.mrb[0].mxu0
    %v1870 = vadd.f32 0.0, %v1869
    %v1871 = vpop.f32.mrb[0].mxu0
    %1872 = vmatprep.mubr.f32.mxu0 0.0
    %1873 = vmatmul.mubr.f32.gmra.mrb[0].mxu0 %v1044
    %v1874 = vpop.f32.mrb[0].mxu0
    %v1875 = vadd.f32 0.0, %v1874
    %v1876 = vpop.f32.mrb[0].mxu0
    %1877 = vmatprep.mubr.f32.mxu0 0.0
    %1878 = vmatmul.mubr.f32.gmra.mrb[0].mxu0 %v1047
    %v1879 = vpop.f32.mrb[0].mxu0
    %v1880 = vadd.f32 0.0, %v1879
    %v1881 = vpop.f32.mrb[0].mxu0
    %1882 = vmatprep.mubr.f32.mxu0 0.0
    %1883 = vmatmul.mubr.f32.gmra.mrb[0].mxu0 %v1050
    %v1884 = vpop.f32.mrb[0].mxu0
    %v1885 = vadd.f32 0.0, %v1884
    %v1886 = vpop.f32.mrb[0].mxu0
    %1887 = vdwg.mxu0
    %v1888 = vsub.f32 %v1585, %v1770
    %v1889 = vsub.f32 %v1590, %v1775
    %v1890 = vsub.f32 %v1595, %v1780
    %v1891 = vsub.f32 %v1600, %v1785
    %v1892 = vsub.f32 %v1605, %v1790
    %v1893 = vsub.f32 %v1610, %v1795
    %v1894 = vsub.f32 %v1615, %v1800
    %v1895 = vsub.f32 %v1620, %v1805
    %v1896 = vsub.f32 %v1625, %v1810
    %v1897 = vsub.f32 %v1630, %v1815
    %v1898 = vsub.f32 %v1635, %v1820
    %v1899 = vsub.f32 %v1640, %v1825
    %v1900 = vsub.f32 %v1645, %v1830
    %v1901 = vsub.f32 %v1650, %v1835
    %v1902 = vsub.f32 %v1655, %v1840
    %v1903 = vsub.f32 %v1660, %v1845
    %v1904 = vsub.f32 %v1665, %v1850
    %v1905 = vsub.f32 %v1670, %v1855
    %v1906 = vsub.f32 %v1675, %v1860
    %v1907 = vsub.f32 %v1680, %v1865
    %v1908 = vsub.f32 %v1685, %v1870
    %v1909 = vsub.f32 %v1690, %v1875
    %v1910 = vsub.f32 %v1695, %v1880
    %v1911 = vsub.f32 %v1700, %v1885
    %v1912 = vmul.f32 %v97, %v1494
    %v1913 = vmul.f32 %v98, %v1495
    %v1914 = vmul.f32 %v99, %v1496
    %v1915 = vmul.f32 %v100, %v1497
    %v1916 = vmul.f32 %v101, %v1498
    %v1917 = vmul.f32 %v102, %v1499
    %v1918 = vmul.f32 %v103, %v1500
    %v1919 = vmul.f32 %v104, %v1501
    %v1920 = vmul.f32 %v105, %v1502
    %v1921 = vmul.f32 %v106, %v1503
    %v1922 = vmul.f32 %v107, %v1504
    %v1923 = vmul.f32 %v108, %v1505
    %v1924 = vmul.f32 %v109, %v1506
    %v1925 = vmul.f32 %v110, %v1507
    %v1926 = vmul.f32 %v111, %v1508
    %v1927 = vmul.f32 %v112, %v1509
    %v1928 = vmul.f32 %v113, %v1510
    %v1929 = vmul.f32 %v114, %v1511
    %v1930 = vmul.f32 %v115, %v1512
    %v1931 = vmul.f32 %v116, %v1513
    %v1932 = vmul.f32 %v117, %v1514
    %v1933 = vmul.f32 %v118, %v1515
    %v1934 = vmul.f32 %v119, %v1516
    %v1935 = vmul.f32 %v120, %v1517
    %v1936 = vmul.f32 %v97, %v1888
    %v1937 = vmul.f32 %v98, %v1889
    %v1938 = vmul.f32 %v99, %v1890
    %v1939 = vmul.f32 %v100, %v1891
    %v1940 = vmul.f32 %v101, %v1892
    %v1941 = vmul.f32 %v102, %v1893
    %v1942 = vmul.f32 %v103, %v1894
    %v1943 = vmul.f32 %v104, %v1895
    %v1944 = vmul.f32 %v105, %v1896
    %v1945 = vmul.f32 %v106, %v1897
    %v1946 = vmul.f32 %v107, %v1898
    %v1947 = vmul.f32 %v108, %v1899
    %v1948 = vmul.f32 %v109, %v1900
    %v1949 = vmul.f32 %v110, %v1901
    %v1950 = vmul.f32 %v111, %v1902
    %v1951 = vmul.f32 %v112, %v1903
    %v1952 = vmul.f32 %v113, %v1904
    %v1953 = vmul.f32 %v114, %v1905
    %v1954 = vmul.f32 %v115, %v1906
    %v1955 = vmul.f32 %v116, %v1907
    %v1956 = vmul.f32 %v117, %v1908
    %v1957 = vmul.f32 %v118, %v1909
    %v1958 = vmul.f32 %v119, %v1910
    %v1959 = vmul.f32 %v120, %v1911
    %v1961 = vsel %vm129, %v1912, 0
    %v1964 = vsel %vm129, %v1913, 0
    %v1967 = vsel %vm129, %v1914, 0
    %v1970 = vsel %vm129, %v1915, 0
    %v1973 = vsel %vm129, %v1916, 0
    %v1976 = vsel %vm129, %v1917, 0
    %v1979 = vsel %vm129, %v1918, 0
    %v1982 = vsel %vm129, %v1919, 0
    %v1985 = vsel %vm129, %v1920, 0
    %v1988 = vsel %vm129, %v1921, 0
    %v1991 = vsel %vm129, %v1922, 0
    %v1994 = vsel %vm129, %v1923, 0
    %v1997 = vsel %vm129, %v1924, 0
    %v2000 = vsel %vm129, %v1925, 0
    %v2003 = vsel %vm129, %v1926, 0
    %v2006 = vsel %vm129, %v1927, 0
    %v2009 = vsel %vm129, %v1928, 0
    %v2012 = vsel %vm129, %v1929, 0
    %v2015 = vsel %vm129, %v1930, 0
    %v2018 = vsel %vm129, %v1931, 0
    %v2021 = vsel %vm129, %v1932, 0
    %v2024 = vsel %vm129, %v1933, 0
    %v2027 = vsel %vm129, %v1934, 0
    %v2030 = vsel %vm129, %v1935, 0
    %2032 = vmatprep.subr.mxu0 0.0
    %2033 = vmatpush1.msra.mxu0 %v121
    %2034 = vmatprep.subr.mxu0 0.0
    %2035 = vmatpush1.msra.mxu0 %v122
    %2036 = vmatprep.subr.mxu0 0.0
    %2037 = vmatpush1.msra.mxu0 %v123
    %2038 = vmatprep.subr.mxu0 0.0
    %2039 = vmatpush1.msra.mxu0 %v124
    %2040 = vmatprep.subr.mxu0 0.0
    %2041 = vmatpush1.msra.mxu0 0.0
    %2042 = vmatprep.subr.mxu0 0.0
    %2043 = vmatpush1.msra.mxu0 0.0
    %2044 = vmatprep.subr.mxu0 0.0
    %2045 = vmatpush1.msra.mxu0 0.0
    %2046 = vmatprep.subr.mxu0 0.0
    %2047 = vmatpush1.msra.mxu0 0.0
    %2048 = vmatprep.subr.mxu0 0.0
    %2049 = vmatpush1.msra.mxu0 0.0
    %2050 = vmatprep.subr.mxu0 0.0
    %2051 = vmatpush1.msra.mxu0 0.0
    %2052 = vmatprep.subr.mxu0 0.0
    %2053 = vmatpush1.msra.mxu0 0.0
    %2054 = vmatprep.subr.mxu0 0.0
    %2055 = vmatpush1.msra.mxu0 0.0
    %2056 = vmatprep.subr.mxu0 0.0
    %2057 = vmatpush1.msra.mxu0 0.0
    %2058 = vmatprep.subr.mxu0 0.0
    %2059 = vmatpush1.msra.mxu0 0.0
    %2060 = vmatprep.subr.mxu0 0.0
    %2061 = vmatpush1.msra.mxu0 0.0
    %2062 = vmatprep.subr.mxu0 0.0
    %2063 = vmatpush1.msra.mxu0 0.0
    %2064 = vmatprep.subr.mxu0 0.0
    %2065 = vmatpush1.msra.mxu0 0.0
    %2066 = vmatprep.subr.mxu0 0.0
    %2067 = vmatpush1.msra.mxu0 0.0
    %2068 = vmatprep.subr.mxu0 0.0
    %2069 = vmatpush1.msra.mxu0 0.0
    %2070 = vmatprep.subr.mxu0 0.0
    %2071 = vmatpush1.msra.mxu0 0.0
    %2072 = vmatprep.subr.mxu0 0.0
    %2073 = vmatpush1.msra.mxu0 0.0
    %2074 = vmatprep.subr.mxu0 0.0
    %2075 = vmatpush1.msra.mxu0 0.0
    %2076 = vmatprep.subr.mxu0 0.0
    %2077 = vmatpush1.msra.mxu0 0.0
    %2078 = vmatprep.subr.mxu0 0.0
    %2079 = vmatpush1.msra.mxu0 0.0
    %2080 = vmatprep.subr.mxu0 0.0
    %2081 = vmatpush1.msra.mxu0 0.0
    %2082 = vmatprep.subr.mxu0 0.0
    %2083 = vmatpush1.msra.mxu0 0.0
    %2084 = vmatprep.subr.mxu0 0.0
    %2085 = vmatpush1.msra.mxu0 0.0
    %2086 = vmatprep.subr.mxu0 0.0
    %2087 = vmatpush1.msra.mxu0 0.0
    %2088 = vmatprep.subr.mxu0 0.0
    %2089 = vmatpush1.msra.mxu0 0.0
    %2090 = vmatprep.subr.mxu0 0.0
    %2091 = vmatpush1.msra.mxu0 0.0
    %2092 = vmatprep.subr.mxu0 0.0
    %2093 = vmatpush1.msra.mxu0 0.0
    %2094 = vmatprep.subr.mxu0 0.0
    %2095 = vmatpush1.msra.mxu0 0.0
    %2096 = vmatprep.mubr.f32.mxu0 0.0
    %2097 = vmatmul.mubr.f32.gmra.mrb[0].mxu0 %v1961
    %v2098 = vpop.f32.mrb[0].mxu0
    %v2099 = vadd.f32 0.0, %v2098
    %v2100 = vpop.f32.mrb[0].mxu0
    %2101 = vmatprep.mubr.f32.mxu0 0.0
    %2102 = vmatmul.mubr.f32.gmra.mrb[0].mxu0 %v1964
    %v2103 = vpop.f32.mrb[0].mxu0
    %v2104 = vadd.f32 0.0, %v2103
    %v2105 = vpop.f32.mrb[0].mxu0
    %2106 = vmatprep.mubr.f32.mxu0 0.0
    %2107 = vmatmul.mubr.f32.gmra.mrb[0].mxu0 %v1967
    %v2108 = vpop.f32.mrb[0].mxu0
    %v2109 = vadd.f32 0.0, %v2108
    %v2110 = vpop.f32.mrb[0].mxu0
    %2111 = vmatprep.mubr.f32.mxu0 0.0
    %2112 = vmatmul.mubr.f32.gmra.mrb[0].mxu0 %v1970
    %v2113 = vpop.f32.mrb[0].mxu0
    %v2114 = vadd.f32 0.0, %v2113
    %v2115 = vpop.f32.mrb[0].mxu0
    %2116 = vmatprep.mubr.f32.mxu0 0.0
    %2117 = vmatmul.mubr.f32.gmra.mrb[0].mxu0 %v1973
    %v2118 = vpop.f32.mrb[0].mxu0
    %v2119 = vadd.f32 0.0, %v2118
    %v2120 = vpop.f32.mrb[0].mxu0
    %2121 = vmatprep.mubr.f32.mxu0 0.0
    %2122 = vmatmul.mubr.f32.gmra.mrb[0].mxu0 %v1976
    %v2123 = vpop.f32.mrb[0].mxu0
    %v2124 = vadd.f32 0.0, %v2123
    %v2125 = vpop.f32.mrb[0].mxu0
    %2126 = vmatprep.mubr.f32.mxu0 0.0
    %2127 = vmatmul.mubr.f32.gmra.mrb[0].mxu0 %v1979
    %v2128 = vpop.f32.mrb[0].mxu0
    %v2129 = vadd.f32 0.0, %v2128
    %v2130 = vpop.f32.mrb[0].mxu0
    %2131 = vmatprep.mubr.f32.mxu0 0.0
    %2132 = vmatmul.mubr.f32.gmra.mrb[0].mxu0 %v1982
    %v2133 = vpop.f32.mrb[0].mxu0
    %v2134 = vadd.f32 0.0, %v2133
    %v2135 = vpop.f32.mrb[0].mxu0
    %2136 = vmatprep.mubr.f32.mxu0 0.0
    %2137 = vmatmul.mubr.f32.gmra.mrb[0].mxu0 %v1985
    %v2138 = vpop.f32.mrb[0].mxu0
    %v2139 = vadd.f32 0.0, %v2138
    %v2140 = vpop.f32.mrb[0].mxu0
    %2141 = vmatprep.mubr.f32.mxu0 0.0
    %2142 = vmatmul.mubr.f32.gmra.mrb[0].mxu0 %v1988
    %v2143 = vpop.f32.mrb[0].mxu0
    %v2144 = vadd.f32 0.0, %v2143
    %v2145 = vpop.f32.mrb[0].mxu0
    %2146 = vmatprep.mubr.f32.mxu0 0.0
    %2147 = vmatmul.mubr.f32.gmra.mrb[0].mxu0 %v1991
    %v2148 = vpop.f32.mrb[0].mxu0
    %v2149 = vadd.f32 0.0, %v2148
    %v2150 = vpop.f32.mrb[0].mxu0
    %2151 = vmatprep.mubr.f32.mxu0 0.0
    %2152 = vmatmul.mubr.f32.gmra.mrb[0].mxu0 %v1994
    %v2153 = vpop.f32.mrb[0].mxu0
    %v2154 = vadd.f32 0.0, %v2153
    %v2155 = vpop.f32.mrb[0].mxu0
    %2156 = vmatprep.mubr.f32.mxu0 0.0
    %2157 = vmatmul.mubr.f32.gmra.mrb[0].mxu0 %v1997
    %v2158 = vpop.f32.mrb[0].mxu0
    %v2159 = vadd.f32 0.0, %v2158
    %v2160 = vpop.f32.mrb[0].mxu0
    %2161 = vmatprep.mubr.f32.mxu0 0.0
    %2162 = vmatmul.mubr.f32.gmra.mrb[0].mxu0 %v2000
    %v2163 = vpop.f32.mrb[0].mxu0
    %v2164 = vadd.f32 0.0, %v2163
    %v2165 = vpop.f32.mrb[0].mxu0
    %2166 = vmatprep.mubr.f32.mxu0 0.0
    %2167 = vmatmul.mubr.f32.gmra.mrb[0].mxu0 %v2003
    %v2168 = vpop.f32.mrb[0].mxu0
    %v2169 = vadd.f32 0.0, %v2168
    %v2170 = vpop.f32.mrb[0].mxu0
    %2171 = vmatprep.mubr.f32.mxu0 0.0
    %2172 = vmatmul.mubr.f32.gmra.mrb[0].mxu0 %v2006
    %v2173 = vpop.f32.mrb[0].mxu0
    %v2174 = vadd.f32 0.0, %v2173
    %v2175 = vpop.f32.mrb[0].mxu0
    %2176 = vmatprep.mubr.f32.mxu0 0.0
    %2177 = vmatmul.mubr.f32.gmra.mrb[0].mxu0 %v2009
    %v2178 = vpop.f32.mrb[0].mxu0
    %v2179 = vadd.f32 0.0, %v2178
    %v2180 = vpop.f32.mrb[0].mxu0
    %2181 = vmatprep.mubr.f32.mxu0 0.0
    %2182 = vmatmul.mubr.f32.gmra.mrb[0].mxu0 %v2012
    %v2183 = vpop.f32.mrb[0].mxu0
    %v2184 = vadd.f32 0.0, %v2183
    %v2185 = vpop.f32.mrb[0].mxu0
    %2186 = vmatprep.mubr.f32.mxu0 0.0
    %2187 = vmatmul.mubr.f32.gmra.mrb[0].mxu0 %v2015
    %v2188 = vpop.f32.mrb[0].mxu0
    %v2189 = vadd.f32 0.0, %v2188
    %v2190 = vpop.f32.mrb[0].mxu0
    %2191 = vmatprep.mubr.f32.mxu0 0.0
    %2192 = vmatmul.mubr.f32.gmra.mrb[0].mxu0 %v2018
    %v2193 = vpop.f32.mrb[0].mxu0
    %v2194 = vadd.f32 0.0, %v2193
    %v2195 = vpop.f32.mrb[0].mxu0
    %2196 = vmatprep.mubr.f32.mxu0 0.0
    %2197 = vmatmul.mubr.f32.gmra.mrb[0].mxu0 %v2021
    %v2198 = vpop.f32.mrb[0].mxu0
    %v2199 = vadd.f32 0.0, %v2198
    %v2200 = vpop.f32.mrb[0].mxu0
    %2201 = vmatprep.mubr.f32.mxu0 0.0
    %2202 = vmatmul.mubr.f32.gmra.mrb[0].mxu0 %v2024
    %v2203 = vpop.f32.mrb[0].mxu0
    %v2204 = vadd.f32 0.0, %v2203
    %v2205 = vpop.f32.mrb[0].mxu0
    %2206 = vmatprep.mubr.f32.mxu0 0.0
    %2207 = vmatmul.mubr.f32.gmra.mrb[0].mxu0 %v2027
    %v2208 = vpop.f32.mrb[0].mxu0
    %v2209 = vadd.f32 0.0, %v2208
    %v2210 = vpop.f32.mrb[0].mxu0
    %2211 = vmatprep.mubr.f32.mxu0 0.0
    %2212 = vmatmul.mubr.f32.gmra.mrb[0].mxu0 %v2030
    %v2213 = vpop.f32.mrb[0].mxu0
    %v2214 = vadd.f32 0.0, %v2213
    %v2215 = vpop.f32.mrb[0].mxu0
    %2216 = vdwg.mxu0
    %v2218 = vsel %vm129, %v1936, 0
    %v2221 = vsel %vm129, %v1937, 0
    %v2224 = vsel %vm129, %v1938, 0
    %v2227 = vsel %vm129, %v1939, 0
    %v2230 = vsel %vm129, %v1940, 0
    %v2233 = vsel %vm129, %v1941, 0
    %v2236 = vsel %vm129, %v1942, 0
    %v2239 = vsel %vm129, %v1943, 0
    %v2242 = vsel %vm129, %v1944, 0
    %v2245 = vsel %vm129, %v1945, 0
    %v2248 = vsel %vm129, %v1946, 0
    %v2251 = vsel %vm129, %v1947, 0
    %v2254 = vsel %vm129, %v1948, 0
    %v2257 = vsel %vm129, %v1949, 0
    %v2260 = vsel %vm129, %v1950, 0
    %v2263 = vsel %vm129, %v1951, 0
    %v2266 = vsel %vm129, %v1952, 0
    %v2269 = vsel %vm129, %v1953, 0
    %v2272 = vsel %vm129, %v1954, 0
    %v2275 = vsel %vm129, %v1955, 0
    %v2278 = vsel %vm129, %v1956, 0
    %v2281 = vsel %vm129, %v1957, 0
    %v2284 = vsel %vm129, %v1958, 0
    %v2287 = vsel %vm129, %v1959, 0
    %2289 = vmatprep.subr.mxu0 0.0
    %2290 = vmatpush1.msra.mxu0 %v125
    %2291 = vmatprep.subr.mxu0 0.0
    %2292 = vmatpush1.msra.mxu0 %v126
    %2293 = vmatprep.subr.mxu0 0.0
    %2294 = vmatpush1.msra.mxu0 %v127
    %2295 = vmatprep.subr.mxu0 0.0
    %2296 = vmatpush1.msra.mxu0 %v128
    %2297 = vmatprep.subr.mxu0 0.0
    %2298 = vmatpush1.msra.mxu0 0.0
    %2299 = vmatprep.subr.mxu0 0.0
    %2300 = vmatpush1.msra.mxu0 0.0
    %2301 = vmatprep.subr.mxu0 0.0
    %2302 = vmatpush1.msra.mxu0 0.0
    %2303 = vmatprep.subr.mxu0 0.0
    %2304 = vmatpush1.msra.mxu0 0.0
    %2305 = vmatprep.subr.mxu0 0.0
    %2306 = vmatpush1.msra.mxu0 0.0
    %2307 = vmatprep.subr.mxu0 0.0
    %2308 = vmatpush1.msra.mxu0 0.0
    %2309 = vmatprep.subr.mxu0 0.0
    %2310 = vmatpush1.msra.mxu0 0.0
    %2311 = vmatprep.subr.mxu0 0.0
    %2312 = vmatpush1.msra.mxu0 0.0
    %2313 = vmatprep.subr.mxu0 0.0
    %2314 = vmatpush1.msra.mxu0 0.0
    %2315 = vmatprep.subr.mxu0 0.0
    %2316 = vmatpush1.msra.mxu0 0.0
    %2317 = vmatprep.subr.mxu0 0.0
    %2318 = vmatpush1.msra.mxu0 0.0
    %2319 = vmatprep.subr.mxu0 0.0
    %2320 = vmatpush1.msra.mxu0 0.0
    %2321 = vmatprep.subr.mxu0 0.0
    %2322 = vmatpush1.msra.mxu0 0.0
    %2323 = vmatprep.subr.mxu0 0.0
    %2324 = vmatpush1.msra.mxu0 0.0
    %2325 = vmatprep.subr.mxu0 0.0
    %2326 = vmatpush1.msra.mxu0 0.0
    %2327 = vmatprep.subr.mxu0 0.0
    %2328 = vmatpush1.msra.mxu0 0.0
    %2329 = vmatprep.subr.mxu0 0.0
    %2330 = vmatpush1.msra.mxu0 0.0
    %2331 = vmatprep.subr.mxu0 0.0
    %2332 = vmatpush1.msra.mxu0 0.0
    %2333 = vmatprep.subr.mxu0 0.0
    %2334 = vmatpush1.msra.mxu0 0.0
    %2335 = vmatprep.subr.mxu0 0.0
    %2336 = vmatpush1.msra.mxu0 0.0
    %2337 = vmatprep.subr.mxu0 0.0
    %2338 = vmatpush1.msra.mxu0 0.0
    %2339 = vmatprep.subr.mxu0 0.0
    %2340 = vmatpush1.msra.mxu0 0.0
    %2341 = vmatprep.subr.mxu0 0.0
    %2342 = vmatpush1.msra.mxu0 0.0
    %2343 = vmatprep.subr.mxu0 0.0
    %2344 = vmatpush1.msra.mxu0 0.0
    %2345 = vmatprep.subr.mxu0 0.0
    %2346 = vmatpush1.msra.mxu0 0.0
    %2347 = vmatprep.subr.mxu0 0.0
    %2348 = vmatpush1.msra.mxu0 0.0
    %2349 = vmatprep.subr.mxu0 0.0
    %2350 = vmatpush1.msra.mxu0 0.0
    %2351 = vmatprep.subr.mxu0 0.0
    %2352 = vmatpush1.msra.mxu0 0.0
    %2353 = vmatprep.mubr.f32.mxu0 0.0
    %2354 = vmatmul.mubr.f32.gmra.mrb[0].mxu0 %v2218
    %v2355 = vpop.f32.mrb[0].mxu0
    %v2356 = vadd.f32 0.0, %v2355
    %v2357 = vpop.f32.mrb[0].mxu0
    %2358 = vmatprep.mubr.f32.mxu0 0.0
    %2359 = vmatmul.mubr.f32.gmra.mrb[0].mxu0 %v2221
    %v2360 = vpop.f32.mrb[0].mxu0
    %v2361 = vadd.f32 0.0, %v2360
    %v2362 = vpop.f32.mrb[0].mxu0
    %2363 = vmatprep.mubr.f32.mxu0 0.0
    %2364 = vmatmul.mubr.f32.gmra.mrb[0].mxu0 %v2224
    %v2365 = vpop.f32.mrb[0].mxu0
    %v2366 = vadd.f32 0.0, %v2365
    %v2367 = vpop.f32.mrb[0].mxu0
    %2368 = vmatprep.mubr.f32.mxu0 0.0
    %2369 = vmatmul.mubr.f32.gmra.mrb[0].mxu0 %v2227
    %v2370 = vpop.f32.mrb[0].mxu0
    %v2371 = vadd.f32 0.0, %v2370
    %v2372 = vpop.f32.mrb[0].mxu0
    %2373 = vmatprep.mubr.f32.mxu0 0.0
    %2374 = vmatmul.mubr.f32.gmra.mrb[0].mxu0 %v2230
    %v2375 = vpop.f32.mrb[0].mxu0
    %v2376 = vadd.f32 0.0, %v2375
    %v2377 = vpop.f32.mrb[0].mxu0
    %2378 = vmatprep.mubr.f32.mxu0 0.0
    %2379 = vmatmul.mubr.f32.gmra.mrb[0].mxu0 %v2233
    %v2380 = vpop.f32.mrb[0].mxu0
    %v2381 = vadd.f32 0.0, %v2380
    %v2382 = vpop.f32.mrb[0].mxu0
    %2383 = vmatprep.mubr.f32.mxu0 0.0
    %2384 = vmatmul.mubr.f32.gmra.mrb[0].mxu0 %v2236
    %v2385 = vpop.f32.mrb[0].mxu0
    %v2386 = vadd.f32 0.0, %v2385
    %v2387 = vpop.f32.mrb[0].mxu0
    %2388 = vmatprep.mubr.f32.mxu0 0.0
    %2389 = vmatmul.mubr.f32.gmra.mrb[0].mxu0 %v2239
    %v2390 = vpop.f32.mrb[0].mxu0
    %v2391 = vadd.f32 0.0, %v2390
    %v2392 = vpop.f32.mrb[0].mxu0
    %2393 = vmatprep.mubr.f32.mxu0 0.0
    %2394 = vmatmul.mubr.f32.gmra.mrb[0].mxu0 %v2242
    %v2395 = vpop.f32.mrb[0].mxu0
    %v2396 = vadd.f32 0.0, %v2395
    %v2397 = vpop.f32.mrb[0].mxu0
    %2398 = vmatprep.mubr.f32.mxu0 0.0
    %2399 = vmatmul.mubr.f32.gmra.mrb[0].mxu0 %v2245
    %v2400 = vpop.f32.mrb[0].mxu0
    %v2401 = vadd.f32 0.0, %v2400
    %v2402 = vpop.f32.mrb[0].mxu0
    %2403 = vmatprep.mubr.f32.mxu0 0.0
    %2404 = vmatmul.mubr.f32.gmra.mrb[0].mxu0 %v2248
    %v2405 = vpop.f32.mrb[0].mxu0
    %v2406 = vadd.f32 0.0, %v2405
    %v2407 = vpop.f32.mrb[0].mxu0
    %2408 = vmatprep.mubr.f32.mxu0 0.0
    %2409 = vmatmul.mubr.f32.gmra.mrb[0].mxu0 %v2251
    %v2410 = vpop.f32.mrb[0].mxu0
    %v2411 = vadd.f32 0.0, %v2410
    %v2412 = vpop.f32.mrb[0].mxu0
    %2413 = vmatprep.mubr.f32.mxu0 0.0
    %2414 = vmatmul.mubr.f32.gmra.mrb[0].mxu0 %v2254
    %v2415 = vpop.f32.mrb[0].mxu0
    %v2416 = vadd.f32 0.0, %v2415
    %v2417 = vpop.f32.mrb[0].mxu0
    %2418 = vmatprep.mubr.f32.mxu0 0.0
    %2419 = vmatmul.mubr.f32.gmra.mrb[0].mxu0 %v2257
    %v2420 = vpop.f32.mrb[0].mxu0
    %v2421 = vadd.f32 0.0, %v2420
    %v2422 = vpop.f32.mrb[0].mxu0
    %2423 = vmatprep.mubr.f32.mxu0 0.0
    %2424 = vmatmul.mubr.f32.gmra.mrb[0].mxu0 %v2260
    %v2425 = vpop.f32.mrb[0].mxu0
    %v2426 = vadd.f32 0.0, %v2425
    %v2427 = vpop.f32.mrb[0].mxu0
    %2428 = vmatprep.mubr.f32.mxu0 0.0
    %2429 = vmatmul.mubr.f32.gmra.mrb[0].mxu0 %v2263
    %v2430 = vpop.f32.mrb[0].mxu0
    %v2431 = vadd.f32 0.0, %v2430
    %v2432 = vpop.f32.mrb[0].mxu0
    %2433 = vmatprep.mubr.f32.mxu0 0.0
    %2434 = vmatmul.mubr.f32.gmra.mrb[0].mxu0 %v2266
    %v2435 = vpop.f32.mrb[0].mxu0
    %v2436 = vadd.f32 0.0, %v2435
    %v2437 = vpop.f32.mrb[0].mxu0
    %2438 = vmatprep.mubr.f32.mxu0 0.0
    %2439 = vmatmul.mubr.f32.gmra.mrb[0].mxu0 %v2269
    %v2440 = vpop.f32.mrb[0].mxu0
    %v2441 = vadd.f32 0.0, %v2440
    %v2442 = vpop.f32.mrb[0].mxu0
    %2443 = vmatprep.mubr.f32.mxu0 0.0
    %2444 = vmatmul.mubr.f32.gmra.mrb[0].mxu0 %v2272
    %v2445 = vpop.f32.mrb[0].mxu0
    %v2446 = vadd.f32 0.0, %v2445
    %v2447 = vpop.f32.mrb[0].mxu0
    %2448 = vmatprep.mubr.f32.mxu0 0.0
    %2449 = vmatmul.mubr.f32.gmra.mrb[0].mxu0 %v2275
    %v2450 = vpop.f32.mrb[0].mxu0
    %v2451 = vadd.f32 0.0, %v2450
    %v2452 = vpop.f32.mrb[0].mxu0
    %2453 = vmatprep.mubr.f32.mxu0 0.0
    %2454 = vmatmul.mubr.f32.gmra.mrb[0].mxu0 %v2278
    %v2455 = vpop.f32.mrb[0].mxu0
    %v2456 = vadd.f32 0.0, %v2455
    %v2457 = vpop.f32.mrb[0].mxu0
    %2458 = vmatprep.mubr.f32.mxu0 0.0
    %2459 = vmatmul.mubr.f32.gmra.mrb[0].mxu0 %v2281
    %v2460 = vpop.f32.mrb[0].mxu0
    %v2461 = vadd.f32 0.0, %v2460
    %v2462 = vpop.f32.mrb[0].mxu0
    %2463 = vmatprep.mubr.f32.mxu0 0.0
    %2464 = vmatmul.mubr.f32.gmra.mrb[0].mxu0 %v2284
    %v2465 = vpop.f32.mrb[0].mxu0
    %v2466 = vadd.f32 0.0, %v2465
    %v2467 = vpop.f32.mrb[0].mxu0
    %2468 = vmatprep.mubr.f32.mxu0 0.0
    %2469 = vmatmul.mubr.f32.gmra.mrb[0].mxu0 %v2287
    %v2470 = vpop.f32.mrb[0].mxu0
    %v2471 = vadd.f32 0.0, %v2470
    %v2472 = vpop.f32.mrb[0].mxu0
    %2473 = vdwg.mxu0
    %v2474 = vsub.f32 %v2099, %v2356
    %v2475 = vsub.f32 %v2104, %v2361
    %v2476 = vsub.f32 %v2109, %v2366
    %v2477 = vsub.f32 %v2114, %v2371
    %v2478 = vsub.f32 %v2119, %v2376
    %v2479 = vsub.f32 %v2124, %v2381
    %v2480 = vsub.f32 %v2129, %v2386
    %v2481 = vsub.f32 %v2134, %v2391
    %v2482 = vsub.f32 %v2139, %v2396
    %v2483 = vsub.f32 %v2144, %v2401
    %v2484 = vsub.f32 %v2149, %v2406
    %v2485 = vsub.f32 %v2154, %v2411
    %v2486 = vsub.f32 %v2159, %v2416
    %v2487 = vsub.f32 %v2164, %v2421
    %v2488 = vsub.f32 %v2169, %v2426
    %v2489 = vsub.f32 %v2174, %v2431
    %v2490 = vsub.f32 %v2179, %v2436
    %v2491 = vsub.f32 %v2184, %v2441
    %v2492 = vsub.f32 %v2189, %v2446
    %v2493 = vsub.f32 %v2194, %v2451
    %v2494 = vsub.f32 %v2199, %v2456
    %v2495 = vsub.f32 %v2204, %v2461
    %v2496 = vsub.f32 %v2209, %v2466
    %v2497 = vsub.f32 %v2214, %v2471
    %2498 = vmatprep.subr.mxu0 0.0
    %2499 = vmatpush1.msra.mxu0 %v121
    %2500 = vmatprep.subr.mxu0 0.0
    %2501 = vmatpush1.msra.mxu0 %v122
    %2502 = vmatprep.subr.mxu0 0.0
    %2503 = vmatpush1.msra.mxu0 %v123
    %2504 = vmatprep.subr.mxu0 0.0
    %2505 = vmatpush1.msra.mxu0 %v124
    %2506 = vmatprep.subr.mxu0 0.0
    %2507 = vmatpush1.msra.mxu0 0.0
    %2508 = vmatprep.subr.mxu0 0.0
    %2509 = vmatpush1.msra.mxu0 0.0
    %2510 = vmatprep.subr.mxu0 0.0
    %2511 = vmatpush1.msra.mxu0 0.0
    %2512 = vmatprep.subr.mxu0 0.0
    %2513 = vmatpush1.msra.mxu0 0.0
    %2514 = vmatprep.subr.mxu0 0.0
    %2515 = vmatpush1.msra.mxu0 0.0
    %2516 = vmatprep.subr.mxu0 0.0
    %2517 = vmatpush1.msra.mxu0 0.0
    %2518 = vmatprep.subr.mxu0 0.0
    %2519 = vmatpush1.msra.mxu0 0.0
    %2520 = vmatprep.subr.mxu0 0.0
    %2521 = vmatpush1.msra.mxu0 0.0
    %2522 = vmatprep.subr.mxu0 0.0
    %2523 = vmatpush1.msra.mxu0 0.0
    %2524 = vmatprep.subr.mxu0 0.0
    %2525 = vmatpush1.msra.mxu0 0.0
    %2526 = vmatprep.subr.mxu0 0.0
    %2527 = vmatpush1.msra.mxu0 0.0
    %2528 = vmatprep.subr.mxu0 0.0
    %2529 = vmatpush1.msra.mxu0 0.0
    %2530 = vmatprep.subr.mxu0 0.0
    %2531 = vmatpush1.msra.mxu0 0.0
    %2532 = vmatprep.subr.mxu0 0.0
    %2533 = vmatpush1.msra.mxu0 0.0
    %2534 = vmatprep.subr.mxu0 0.0
    %2535 = vmatpush1.msra.mxu0 0.0
    %2536 = vmatprep.subr.mxu0 0.0
    %2537 = vmatpush1.msra.mxu0 0.0
    %2538 = vmatprep.subr.mxu0 0.0
    %2539 = vmatpush1.msra.mxu0 0.0
    %2540 = vmatprep.subr.mxu0 0.0
    %2541 = vmatpush1.msra.mxu0 0.0
    %2542 = vmatprep.subr.mxu0 0.0
    %2543 = vmatpush1.msra.mxu0 0.0
    %2544 = vmatprep.subr.mxu0 0.0
    %2545 = vmatpush1.msra.mxu0 0.0
    %2546 = vmatprep.subr.mxu0 0.0
    %2547 = vmatpush1.msra.mxu0 0.0
    %2548 = vmatprep.subr.mxu0 0.0
    %2549 = vmatpush1.msra.mxu0 0.0
    %2550 = vmatprep.subr.mxu0 0.0
    %2551 = vmatpush1.msra.mxu0 0.0
    %2552 = vmatprep.subr.mxu0 0.0
    %2553 = vmatpush1.msra.mxu0 0.0
    %2554 = vmatprep.subr.mxu0 0.0
    %2555 = vmatpush1.msra.mxu0 0.0
    %2556 = vmatprep.subr.mxu0 0.0
    %2557 = vmatpush1.msra.mxu0 0.0
    %2558 = vmatprep.subr.mxu0 0.0
    %2559 = vmatpush1.msra.mxu0 0.0
    %2560 = vmatprep.subr.mxu0 0.0
    %2561 = vmatpush1.msra.mxu0 0.0
    %2562 = vmatprep.mubr.f32.mxu0 0.0
    %2563 = vmatmul.mubr.f32.gmra.mrb[0].mxu0 %v2218
    %v2564 = vpop.f32.mrb[0].mxu0
    %v2565 = vadd.f32 0.0, %v2564
    %v2566 = vpop.f32.mrb[0].mxu0
    %2567 = vmatprep.mubr.f32.mxu0 0.0
    %2568 = vmatmul.mubr.f32.gmra.mrb[0].mxu0 %v2221
    %v2569 = vpop.f32.mrb[0].mxu0
    %v2570 = vadd.f32 0.0, %v2569
    %v2571 = vpop.f32.mrb[0].mxu0
    %2572 = vmatprep.mubr.f32.mxu0 0.0
    %2573 = vmatmul.mubr.f32.gmra.mrb[0].mxu0 %v2224
    %v2574 = vpop.f32.mrb[0].mxu0
    %v2575 = vadd.f32 0.0, %v2574
    %v2576 = vpop.f32.mrb[0].mxu0
    %2577 = vmatprep.mubr.f32.mxu0 0.0
    %2578 = vmatmul.mubr.f32.gmra.mrb[0].mxu0 %v2227
    %v2579 = vpop.f32.mrb[0].mxu0
    %v2580 = vadd.f32 0.0, %v2579
    %v2581 = vpop.f32.mrb[0].mxu0
    %2582 = vmatprep.mubr.f32.mxu0 0.0
    %2583 = vmatmul.mubr.f32.gmra.mrb[0].mxu0 %v2230
    %v2584 = vpop.f32.mrb[0].mxu0
    %v2585 = vadd.f32 0.0, %v2584
    %v2586 = vpop.f32.mrb[0].mxu0
    %2587 = vmatprep.mubr.f32.mxu0 0.0
    %2588 = vmatmul.mubr.f32.gmra.mrb[0].mxu0 %v2233
    %v2589 = vpop.f32.mrb[0].mxu0
    %v2590 = vadd.f32 0.0, %v2589
    %v2591 = vpop.f32.mrb[0].mxu0
    %2592 = vmatprep.mubr.f32.mxu0 0.0
    %2593 = vmatmul.mubr.f32.gmra.mrb[0].mxu0 %v2236
    %v2594 = vpop.f32.mrb[0].mxu0
    %v2595 = vadd.f32 0.0, %v2594
    %v2596 = vpop.f32.mrb[0].mxu0
    %2597 = vmatprep.mubr.f32.mxu0 0.0
    %2598 = vmatmul.mubr.f32.gmra.mrb[0].mxu0 %v2239
    %v2599 = vpop.f32.mrb[0].mxu0
    %v2600 = vadd.f32 0.0, %v2599
    %v2601 = vpop.f32.mrb[0].mxu0
    %2602 = vmatprep.mubr.f32.mxu0 0.0
    %2603 = vmatmul.mubr.f32.gmra.mrb[0].mxu0 %v2242
    %v2604 = vpop.f32.mrb[0].mxu0
    %v2605 = vadd.f32 0.0, %v2604
    %v2606 = vpop.f32.mrb[0].mxu0
    %2607 = vmatprep.mubr.f32.mxu0 0.0
    %2608 = vmatmul.mubr.f32.gmra.mrb[0].mxu0 %v2245
    %v2609 = vpop.f32.mrb[0].mxu0
    %v2610 = vadd.f32 0.0, %v2609
    %v2611 = vpop.f32.mrb[0].mxu0
    %2612 = vmatprep.mubr.f32.mxu0 0.0
    %2613 = vmatmul.mubr.f32.gmra.mrb[0].mxu0 %v2248
    %v2614 = vpop.f32.mrb[0].mxu0
    %v2615 = vadd.f32 0.0, %v2614
    %v2616 = vpop.f32.mrb[0].mxu0
    %2617 = vmatprep.mubr.f32.mxu0 0.0
    %2618 = vmatmul.mubr.f32.gmra.mrb[0].mxu0 %v2251
    %v2619 = vpop.f32.mrb[0].mxu0
    %v2620 = vadd.f32 0.0, %v2619
    %v2621 = vpop.f32.mrb[0].mxu0
    %2622 = vmatprep.mubr.f32.mxu0 0.0
    %2623 = vmatmul.mubr.f32.gmra.mrb[0].mxu0 %v2254
    %v2624 = vpop.f32.mrb[0].mxu0
    %v2625 = vadd.f32 0.0, %v2624
    %v2626 = vpop.f32.mrb[0].mxu0
    %2627 = vmatprep.mubr.f32.mxu0 0.0
    %2628 = vmatmul.mubr.f32.gmra.mrb[0].mxu0 %v2257
    %v2629 = vpop.f32.mrb[0].mxu0
    %v2630 = vadd.f32 0.0, %v2629
    %v2631 = vpop.f32.mrb[0].mxu0
    %2632 = vmatprep.mubr.f32.mxu0 0.0
    %2633 = vmatmul.mubr.f32.gmra.mrb[0].mxu0 %v2260
    %v2634 = vpop.f32.mrb[0].mxu0
    %v2635 = vadd.f32 0.0, %v2634
    %v2636 = vpop.f32.mrb[0].mxu0
    %2637 = vmatprep.mubr.f32.mxu0 0.0
    %2638 = vmatmul.mubr.f32.gmra.mrb[0].mxu0 %v2263
    %v2639 = vpop.f32.mrb[0].mxu0
    %v2640 = vadd.f32 0.0, %v2639
    %v2641 = vpop.f32.mrb[0].mxu0
    %2642 = vmatprep.mubr.f32.mxu0 0.0
    %2643 = vmatmul.mubr.f32.gmra.mrb[0].mxu0 %v2266
    %v2644 = vpop.f32.mrb[0].mxu0
    %v2645 = vadd.f32 0.0, %v2644
    %v2646 = vpop.f32.mrb[0].mxu0
    %2647 = vmatprep.mubr.f32.mxu0 0.0
    %2648 = vmatmul.mubr.f32.gmra.mrb[0].mxu0 %v2269
    %v2649 = vpop.f32.mrb[0].mxu0
    %v2650 = vadd.f32 0.0, %v2649
    %v2651 = vpop.f32.mrb[0].mxu0
    %2652 = vmatprep.mubr.f32.mxu0 0.0
    %2653 = vmatmul.mubr.f32.gmra.mrb[0].mxu0 %v2272
    %v2654 = vpop.f32.mrb[0].mxu0
    %v2655 = vadd.f32 0.0, %v2654
    %v2656 = vpop.f32.mrb[0].mxu0
    %2657 = vmatprep.mubr.f32.mxu0 0.0
    %2658 = vmatmul.mubr.f32.gmra.mrb[0].mxu0 %v2275
    %v2659 = vpop.f32.mrb[0].mxu0
    %v2660 = vadd.f32 0.0, %v2659
    %v2661 = vpop.f32.mrb[0].mxu0
    %2662 = vmatprep.mubr.f32.mxu0 0.0
    %2663 = vmatmul.mubr.f32.gmra.mrb[0].mxu0 %v2278
    %v2664 = vpop.f32.mrb[0].mxu0
    %v2665 = vadd.f32 0.0, %v2664
    %v2666 = vpop.f32.mrb[0].mxu0
    %2667 = vmatprep.mubr.f32.mxu0 0.0
    %2668 = vmatmul.mubr.f32.gmra.mrb[0].mxu0 %v2281
    %v2669 = vpop.f32.mrb[0].mxu0
    %v2670 = vadd.f32 0.0, %v2669
    %v2671 = vpop.f32.mrb[0].mxu0
    %2672 = vmatprep.mubr.f32.mxu0 0.0
    %2673 = vmatmul.mubr.f32.gmra.mrb[0].mxu0 %v2284
    %v2674 = vpop.f32.mrb[0].mxu0
    %v2675 = vadd.f32 0.0, %v2674
    %v2676 = vpop.f32.mrb[0].mxu0
    %2677 = vmatprep.mubr.f32.mxu0 0.0
    %2678 = vmatmul.mubr.f32.gmra.mrb[0].mxu0 %v2287
    %v2679 = vpop.f32.mrb[0].mxu0
    %v2680 = vadd.f32 0.0, %v2679
    %v2681 = vpop.f32.mrb[0].mxu0
    %2682 = vdwg.mxu0
    %2683 = vmatprep.subr.mxu0 0.0
    %2684 = vmatpush1.msra.mxu0 %v125
    %2685 = vmatprep.subr.mxu0 0.0
    %2686 = vmatpush1.msra.mxu0 %v126
    %2687 = vmatprep.subr.mxu0 0.0
    %2688 = vmatpush1.msra.mxu0 %v127
    %2689 = vmatprep.subr.mxu0 0.0
    %2690 = vmatpush1.msra.mxu0 %v128
    %2691 = vmatprep.subr.mxu0 0.0
    %2692 = vmatpush1.msra.mxu0 0.0
    %2693 = vmatprep.subr.mxu0 0.0
    %2694 = vmatpush1.msra.mxu0 0.0
    %2695 = vmatprep.subr.mxu0 0.0
    %2696 = vmatpush1.msra.mxu0 0.0
    %2697 = vmatprep.subr.mxu0 0.0
    %2698 = vmatpush1.msra.mxu0 0.0
    %2699 = vmatprep.subr.mxu0 0.0
    %2700 = vmatpush1.msra.mxu0 0.0
    %2701 = vmatprep.subr.mxu0 0.0
    %2702 = vmatpush1.msra.mxu0 0.0
    %2703 = vmatprep.subr.mxu0 0.0
    %2704 = vmatpush1.msra.mxu0 0.0
    %2705 = vmatprep.subr.mxu0 0.0
    %2706 = vmatpush1.msra.mxu0 0.0
    %2707 = vmatprep.subr.mxu0 0.0
    %2708 = vmatpush1.msra.mxu0 0.0
    %2709 = vmatprep.subr.mxu0 0.0
    %2710 = vmatpush1.msra.mxu0 0.0
    %2711 = vmatprep.subr.mxu0 0.0
    %2712 = vmatpush1.msra.mxu0 0.0
    %2713 = vmatprep.subr.mxu0 0.0
    %2714 = vmatpush1.msra.mxu0 0.0
    %2715 = vmatprep.subr.mxu0 0.0
    %2716 = vmatpush1.msra.mxu0 0.0
    %2717 = vmatprep.subr.mxu0 0.0
    %2718 = vmatpush1.msra.mxu0 0.0
    %2719 = vmatprep.subr.mxu0 0.0
    %2720 = vmatpush1.msra.mxu0 0.0
    %2721 = vmatprep.subr.mxu0 0.0
    %2722 = vmatpush1.msra.mxu0 0.0
    %2723 = vmatprep.subr.mxu0 0.0
    %2724 = vmatpush1.msra.mxu0 0.0
    %2725 = vmatprep.subr.mxu0 0.0
    %2726 = vmatpush1.msra.mxu0 0.0
    %2727 = vmatprep.subr.mxu0 0.0
    %2728 = vmatpush1.msra.mxu0 0.0
    %2729 = vmatprep.subr.mxu0 0.0
    %2730 = vmatpush1.msra.mxu0 0.0
    %2731 = vmatprep.subr.mxu0 0.0
    %2732 = vmatpush1.msra.mxu0 0.0
    %2733 = vmatprep.subr.mxu0 0.0
    %2734 = vmatpush1.msra.mxu0 0.0
    %2735 = vmatprep.subr.mxu0 0.0
    %2736 = vmatpush1.msra.mxu0 0.0
    %2737 = vmatprep.subr.mxu0 0.0
    %2738 = vmatpush1.msra.mxu0 0.0
    %2739 = vmatprep.subr.mxu0 0.0
    %2740 = vmatpush1.msra.mxu0 0.0
    %2741 = vmatprep.subr.mxu0 0.0
    %2742 = vmatpush1.msra.mxu0 0.0
    %2743 = vmatprep.subr.mxu0 0.0
    %2744 = vmatpush1.msra.mxu0 0.0
    %2745 = vmatprep.subr.mxu0 0.0
    %2746 = vmatpush1.msra.mxu0 0.0
    %2747 = vmatprep.mubr.f32.mxu0 0.0
    %2748 = vmatmul.mubr.f32.gmra.mrb[0].mxu0 %v1961
    %v2749 = vpop.f32.mrb[0].mxu0
    %v2750 = vadd.f32 0.0, %v2749
    %v2751 = vpop.f32.mrb[0].mxu0
    %2752 = vmatprep.mubr.f32.mxu0 0.0
    %2753 = vmatmul.mubr.f32.gmra.mrb[0].mxu0 %v1964
    %v2754 = vpop.f32.mrb[0].mxu0
    %v2755 = vadd.f32 0.0, %v2754
    %v2756 = vpop.f32.mrb[0].mxu0
    %2757 = vmatprep.mubr.f32.mxu0 0.0
    %2758 = vmatmul.mubr.f32.gmra.mrb[0].mxu0 %v1967
    %v2759 = vpop.f32.mrb[0].mxu0
    %v2760 = vadd.f32 0.0, %v2759
    %v2761 = vpop.f32.mrb[0].mxu0
    %2762 = vmatprep.mubr.f32.mxu0 0.0
    %2763 = vmatmul.mubr.f32.gmra.mrb[0].mxu0 %v1970
    %v2764 = vpop.f32.mrb[0].mxu0
    %v2765 = vadd.f32 0.0, %v2764
    %v2766 = vpop.f32.mrb[0].mxu0
    %2767 = vmatprep.mubr.f32.mxu0 0.0
    %2768 = vmatmul.mubr.f32.gmra.mrb[0].mxu0 %v1973
    %v2769 = vpop.f32.mrb[0].mxu0
    %v2770 = vadd.f32 0.0, %v2769
    %v2771 = vpop.f32.mrb[0].mxu0
    %2772 = vmatprep.mubr.f32.mxu0 0.0
    %2773 = vmatmul.mubr.f32.gmra.mrb[0].mxu0 %v1976
    %v2774 = vpop.f32.mrb[0].mxu0
    %v2775 = vadd.f32 0.0, %v2774
    %v2776 = vpop.f32.mrb[0].mxu0
    %2777 = vmatprep.mubr.f32.mxu0 0.0
    %2778 = vmatmul.mubr.f32.gmra.mrb[0].mxu0 %v1979
    %v2779 = vpop.f32.mrb[0].mxu0
    %v2780 = vadd.f32 0.0, %v2779
    %v2781 = vpop.f32.mrb[0].mxu0
    %2782 = vmatprep.mubr.f32.mxu0 0.0
    %2783 = vmatmul.mubr.f32.gmra.mrb[0].mxu0 %v1982
    %v2784 = vpop.f32.mrb[0].mxu0
    %v2785 = vadd.f32 0.0, %v2784
    %v2786 = vpop.f32.mrb[0].mxu0
    %2787 = vmatprep.mubr.f32.mxu0 0.0
    %2788 = vmatmul.mubr.f32.gmra.mrb[0].mxu0 %v1985
    %v2789 = vpop.f32.mrb[0].mxu0
    %v2790 = vadd.f32 0.0, %v2789
    %v2791 = vpop.f32.mrb[0].mxu0
    %2792 = vmatprep.mubr.f32.mxu0 0.0
    %2793 = vmatmul.mubr.f32.gmra.mrb[0].mxu0 %v1988
    %v2794 = vpop.f32.mrb[0].mxu0
    %v2795 = vadd.f32 0.0, %v2794
    %v2796 = vpop.f32.mrb[0].mxu0
    %2797 = vmatprep.mubr.f32.mxu0 0.0
    %2798 = vmatmul.mubr.f32.gmra.mrb[0].mxu0 %v1991
    %v2799 = vpop.f32.mrb[0].mxu0
    %v2800 = vadd.f32 0.0, %v2799
    %v2801 = vpop.f32.mrb[0].mxu0
    %2802 = vmatprep.mubr.f32.mxu0 0.0
    %2803 = vmatmul.mubr.f32.gmra.mrb[0].mxu0 %v1994
    %v2804 = vpop.f32.mrb[0].mxu0
    %v2805 = vadd.f32 0.0, %v2804
    %v2806 = vpop.f32.mrb[0].mxu0
    %2807 = vmatprep.mubr.f32.mxu0 0.0
    %2808 = vmatmul.mubr.f32.gmra.mrb[0].mxu0 %v1997
    %v2809 = vpop.f32.mrb[0].mxu0
    %v2810 = vadd.f32 0.0, %v2809
    %v2811 = vpop.f32.mrb[0].mxu0
    %2812 = vmatprep.mubr.f32.mxu0 0.0
    %2813 = vmatmul.mubr.f32.gmra.mrb[0].mxu0 %v2000
    %v2814 = vpop.f32.mrb[0].mxu0
    %v2815 = vadd.f32 0.0, %v2814
    %v2816 = vpop.f32.mrb[0].mxu0
    %2817 = vmatprep.mubr.f32.mxu0 0.0
    %2818 = vmatmul.mubr.f32.gmra.mrb[0].mxu0 %v2003
    %v2819 = vpop.f32.mrb[0].mxu0
    %v2820 = vadd.f32 0.0, %v2819
    %v2821 = vpop.f32.mrb[0].mxu0
    %2822 = vmatprep.mubr.f32.mxu0 0.0
    %2823 = vmatmul.mubr.f32.gmra.mrb[0].mxu0 %v2006
    %v2824 = vpop.f32.mrb[0].mxu0
    %v2825 = vadd.f32 0.0, %v2824
    %v2826 = vpop.f32.mrb[0].mxu0
    %2827 = vmatprep.mubr.f32.mxu0 0.0
    %2828 = vmatmul.mubr.f32.gmra.mrb[0].mxu0 %v2009
    %v2829 = vpop.f32.mrb[0].mxu0
    %v2830 = vadd.f32 0.0, %v2829
    %v2831 = vpop.f32.mrb[0].mxu0
    %2832 = vmatprep.mubr.f32.mxu0 0.0
    %2833 = vmatmul.mubr.f32.gmra.mrb[0].mxu0 %v2012
    %v2834 = vpop.f32.mrb[0].mxu0
    %v2835 = vadd.f32 0.0, %v2834
    %v2836 = vpop.f32.mrb[0].mxu0
    %2837 = vmatprep.mubr.f32.mxu0 0.0
    %2838 = vmatmul.mubr.f32.gmra.mrb[0].mxu0 %v2015
    %v2839 = vpop.f32.mrb[0].mxu0
    %v2840 = vadd.f32 0.0, %v2839
    %v2841 = vpop.f32.mrb[0].mxu0
    %2842 = vmatprep.mubr.f32.mxu0 0.0
    %2843 = vmatmul.mubr.f32.gmra.mrb[0].mxu0 %v2018
    %v2844 = vpop.f32.mrb[0].mxu0
    %v2845 = vadd.f32 0.0, %v2844
    %v2846 = vpop.f32.mrb[0].mxu0
    %2847 = vmatprep.mubr.f32.mxu0 0.0
    %2848 = vmatmul.mubr.f32.gmra.mrb[0].mxu0 %v2021
    %v2849 = vpop.f32.mrb[0].mxu0
    %v2850 = vadd.f32 0.0, %v2849
    %v2851 = vpop.f32.mrb[0].mxu0
    %2852 = vmatprep.mubr.f32.mxu0 0.0
    %2853 = vmatmul.mubr.f32.gmra.mrb[0].mxu0 %v2024
    %v2854 = vpop.f32.mrb[0].mxu0
    %v2855 = vadd.f32 0.0, %v2854
    %v2856 = vpop.f32.mrb[0].mxu0
    %2857 = vmatprep.mubr.f32.mxu0 0.0
    %2858 = vmatmul.mubr.f32.gmra.mrb[0].mxu0 %v2027
    %v2859 = vpop.f32.mrb[0].mxu0
    %v2860 = vadd.f32 0.0, %v2859
    %v2861 = vpop.f32.mrb[0].mxu0
    %2862 = vmatprep.mubr.f32.mxu0 0.0
    %2863 = vmatmul.mubr.f32.gmra.mrb[0].mxu0 %v2030
    %v2864 = vpop.f32.mrb[0].mxu0
    %v2865 = vadd.f32 0.0, %v2864
    %v2866 = vpop.f32.mrb[0].mxu0
    %2867 = vdwg.mxu0
    %v2868 = vadd.f32 %v2565, %v2750
    %v2869 = vadd.f32 %v2570, %v2755
    %v2870 = vadd.f32 %v2575, %v2760
    %v2871 = vadd.f32 %v2580, %v2765
    %v2872 = vadd.f32 %v2585, %v2770
    %v2873 = vadd.f32 %v2590, %v2775
    %v2874 = vadd.f32 %v2595, %v2780
    %v2875 = vadd.f32 %v2600, %v2785
    %v2876 = vadd.f32 %v2605, %v2790
    %v2877 = vadd.f32 %v2610, %v2795
    %v2878 = vadd.f32 %v2615, %v2800
    %v2879 = vadd.f32 %v2620, %v2805
    %v2880 = vadd.f32 %v2625, %v2810
    %v2881 = vadd.f32 %v2630, %v2815
    %v2882 = vadd.f32 %v2635, %v2820
    %v2883 = vadd.f32 %v2640, %v2825
    %v2884 = vadd.f32 %v2645, %v2830
    %v2885 = vadd.f32 %v2650, %v2835
    %v2886 = vadd.f32 %v2655, %v2840
    %v2887 = vadd.f32 %v2660, %v2845
    %v2888 = vadd.f32 %v2665, %v2850
    %v2889 = vadd.f32 %v2670, %v2855
    %v2890 = vadd.f32 %v2675, %v2860
    %v2891 = vadd.f32 %v2680, %v2865
    %2892 = vxpose.xlu0.b32.start [1/16] %v2474, 128
    %2893 = vxpose.xlu0.b32.cont [2/16] %v2475, 128
    %2894 = vxpose.xlu0.b32.cont [3/16] %v2476, 128
    %2895 = vxpose.xlu0.b32.cont [4/16] %v2477, 128
    %2896 = vxpose.xlu0.b32.cont [5/16] 0.0, 128
    %2897 = vxpose.xlu0.b32.cont [6/16] 0.0, 128
    %2898 = vxpose.xlu0.b32.cont [7/16] 0.0, 128
    %2899 = vxpose.xlu0.b32.cont [8/16] 0.0, 128
    %2900 = vxpose.xlu0.b32.cont [9/16] 0.0, 128
    %2901 = vxpose.xlu0.b32.cont [10/16] 0.0, 128
    %2902 = vxpose.xlu0.b32.cont [11/16] 0.0, 128
    %2903 = vxpose.xlu0.b32.cont [12/16] 0.0, 128
    %2904 = vxpose.xlu0.b32.cont [13/16] 0.0, 128
    %2905 = vxpose.xlu0.b32.cont [14/16] 0.0, 128
    %2906 = vxpose.xlu0.b32.cont [15/16] 0.0, 128
    %2907 = vxpose.xlu0.b32.end [16/16] 0.0, 128
    %v2908 = vpop.trf.xlu0
    %v2909 = vpop.trf.xlu0
    %v2910 = vpop.trf.xlu0
    %v2911 = vpop.trf.xlu0
    %v2912 = vpop.trf.xlu0
    %v2913 = vpop.trf.xlu0
    %v2914 = vpop.trf.xlu0
    %v2915 = vpop.trf.xlu0
    %v2916 = vpop.trf.xlu0
    %v2917 = vpop.trf.xlu0
    %v2918 = vpop.trf.xlu0
    %v2919 = vpop.trf.xlu0
    %v2920 = vpop.trf.xlu0
    %v2921 = vpop.trf.xlu0
    %v2922 = vpop.trf.xlu0
    %v2923 = vpop.trf.xlu0
    %2924 = vxpose.xlu0.b32.start [1/16] %v2478, 128
    %2925 = vxpose.xlu0.b32.cont [2/16] %v2479, 128
    %2926 = vxpose.xlu0.b32.cont [3/16] %v2480, 128
    %2927 = vxpose.xlu0.b32.cont [4/16] %v2481, 128
    %2928 = vxpose.xlu0.b32.cont [5/16] 0.0, 128
    %2929 = vxpose.xlu0.b32.cont [6/16] 0.0, 128
    %2930 = vxpose.xlu0.b32.cont [7/16] 0.0, 128
    %2931 = vxpose.xlu0.b32.cont [8/16] 0.0, 128
    %2932 = vxpose.xlu0.b32.cont [9/16] 0.0, 128
    %2933 = vxpose.xlu0.b32.cont [10/16] 0.0, 128
    %2934 = vxpose.xlu0.b32.cont [11/16] 0.0, 128
    %2935 = vxpose.xlu0.b32.cont [12/16] 0.0, 128
    %2936 = vxpose.xlu0.b32.cont [13/16] 0.0, 128
    %2937 = vxpose.xlu0.b32.cont [14/16] 0.0, 128
    %2938 = vxpose.xlu0.b32.cont [15/16] 0.0, 128
    %2939 = vxpose.xlu0.b32.end [16/16] 0.0, 128
    %v2940 = vpop.trf.xlu0
    %v2941 = vpop.trf.xlu0
    %v2942 = vpop.trf.xlu0
    %v2943 = vpop.trf.xlu0
    %v2944 = vpop.trf.xlu0
    %v2945 = vpop.trf.xlu0
    %v2946 = vpop.trf.xlu0
    %v2947 = vpop.trf.xlu0
    %v2948 = vpop.trf.xlu0
    %v2949 = vpop.trf.xlu0
    %v2950 = vpop.trf.xlu0
    %v2951 = vpop.trf.xlu0
    %v2952 = vpop.trf.xlu0
    %v2953 = vpop.trf.xlu0
    %v2954 = vpop.trf.xlu0
    %v2955 = vpop.trf.xlu0
    %2956 = vxpose.xlu0.b32.start [1/16] %v2482, 128
    %2957 = vxpose.xlu0.b32.cont [2/16] %v2483, 128
    %2958 = vxpose.xlu0.b32.cont [3/16] %v2484, 128
    %2959 = vxpose.xlu0.b32.cont [4/16] %v2485, 128
    %2960 = vxpose.xlu0.b32.cont [5/16] 0.0, 128
    %2961 = vxpose.xlu0.b32.cont [6/16] 0.0, 128
    %2962 = vxpose.xlu0.b32.cont [7/16] 0.0, 128
    %2963 = vxpose.xlu0.b32.cont [8/16] 0.0, 128
    %2964 = vxpose.xlu0.b32.cont [9/16] 0.0, 128
    %2965 = vxpose.xlu0.b32.cont [10/16] 0.0, 128
    %2966 = vxpose.xlu0.b32.cont [11/16] 0.0, 128
    %2967 = vxpose.xlu0.b32.cont [12/16] 0.0, 128
    %2968 = vxpose.xlu0.b32.cont [13/16] 0.0, 128
    %2969 = vxpose.xlu0.b32.cont [14/16] 0.0, 128
    %2970 = vxpose.xlu0.b32.cont [15/16] 0.0, 128
    %2971 = vxpose.xlu0.b32.end [16/16] 0.0, 128
    %v2972 = vpop.trf.xlu0
    %v2973 = vpop.trf.xlu0
    %v2974 = vpop.trf.xlu0
    %v2975 = vpop.trf.xlu0
    %v2976 = vpop.trf.xlu0
    %v2977 = vpop.trf.xlu0
    %v2978 = vpop.trf.xlu0
    %v2979 = vpop.trf.xlu0
    %v2980 = vpop.trf.xlu0
    %v2981 = vpop.trf.xlu0
    %v2982 = vpop.trf.xlu0
    %v2983 = vpop.trf.xlu0
    %v2984 = vpop.trf.xlu0
    %v2985 = vpop.trf.xlu0
    %v2986 = vpop.trf.xlu0
    %v2987 = vpop.trf.xlu0
    %2988 = vxpose.xlu0.b32.start [1/16] %v2486, 128
    %2989 = vxpose.xlu0.b32.cont [2/16] %v2487, 128
    %2990 = vxpose.xlu0.b32.cont [3/16] %v2488, 128
    %2991 = vxpose.xlu0.b32.cont [4/16] %v2489, 128
    %2992 = vxpose.xlu0.b32.cont [5/16] 0.0, 128
    %2993 = vxpose.xlu0.b32.cont [6/16] 0.0, 128
    %2994 = vxpose.xlu0.b32.cont [7/16] 0.0, 128
    %2995 = vxpose.xlu0.b32.cont [8/16] 0.0, 128
    %2996 = vxpose.xlu0.b32.cont [9/16] 0.0, 128
    %2997 = vxpose.xlu0.b32.cont [10/16] 0.0, 128
    %2998 = vxpose.xlu0.b32.cont [11/16] 0.0, 128
    %2999 = vxpose.xlu0.b32.cont [12/16] 0.0, 128
    %3000 = vxpose.xlu0.b32.cont [13/16] 0.0, 128
    %3001 = vxpose.xlu0.b32.cont [14/16] 0.0, 128
    %3002 = vxpose.xlu0.b32.cont [15/16] 0.0, 128
    %3003 = vxpose.xlu0.b32.end [16/16] 0.0, 128
    %v3004 = vpop.trf.xlu0
    %v3005 = vpop.trf.xlu0
    %v3006 = vpop.trf.xlu0
    %v3007 = vpop.trf.xlu0
    %v3008 = vpop.trf.xlu0
    %v3009 = vpop.trf.xlu0
    %v3010 = vpop.trf.xlu0
    %v3011 = vpop.trf.xlu0
    %v3012 = vpop.trf.xlu0
    %v3013 = vpop.trf.xlu0
    %v3014 = vpop.trf.xlu0
    %v3015 = vpop.trf.xlu0
    %v3016 = vpop.trf.xlu0
    %v3017 = vpop.trf.xlu0
    %v3018 = vpop.trf.xlu0
    %v3019 = vpop.trf.xlu0
    %3020 = vxpose.xlu0.b32.start [1/16] %v2490, 128
    %3021 = vxpose.xlu0.b32.cont [2/16] %v2491, 128
    %3022 = vxpose.xlu0.b32.cont [3/16] %v2492, 128
    %3023 = vxpose.xlu0.b32.cont [4/16] %v2493, 128
    %3024 = vxpose.xlu0.b32.cont [5/16] 0.0, 128
    %3025 = vxpose.xlu0.b32.cont [6/16] 0.0, 128
    %3026 = vxpose.xlu0.b32.cont [7/16] 0.0, 128
    %3027 = vxpose.xlu0.b32.cont [8/16] 0.0, 128
    %3028 = vxpose.xlu0.b32.cont [9/16] 0.0, 128
    %3029 = vxpose.xlu0.b32.cont [10/16] 0.0, 128
    %3030 = vxpose.xlu0.b32.cont [11/16] 0.0, 128
    %3031 = vxpose.xlu0.b32.cont [12/16] 0.0, 128
    %3032 = vxpose.xlu0.b32.cont [13/16] 0.0, 128
    %3033 = vxpose.xlu0.b32.cont [14/16] 0.0, 128
    %3034 = vxpose.xlu0.b32.cont [15/16] 0.0, 128
    %3035 = vxpose.xlu0.b32.end [16/16] 0.0, 128
    %v3036 = vpop.trf.xlu0
    %v3037 = vpop.trf.xlu0
    %v3038 = vpop.trf.xlu0
    %v3039 = vpop.trf.xlu0
    %v3040 = vpop.trf.xlu0
    %v3041 = vpop.trf.xlu0
    %v3042 = vpop.trf.xlu0
    %v3043 = vpop.trf.xlu0
    %v3044 = vpop.trf.xlu0
    %v3045 = vpop.trf.xlu0
    %v3046 = vpop.trf.xlu0
    %v3047 = vpop.trf.xlu0
    %v3048 = vpop.trf.xlu0
    %v3049 = vpop.trf.xlu0
    %v3050 = vpop.trf.xlu0
    %v3051 = vpop.trf.xlu0
    %3052 = vxpose.xlu0.b32.start [1/16] %v2494, 128
    %3053 = vxpose.xlu0.b32.cont [2/16] %v2495, 128
    %3054 = vxpose.xlu0.b32.cont [3/16] %v2496, 128
    %3055 = vxpose.xlu0.b32.cont [4/16] %v2497, 128
    %3056 = vxpose.xlu0.b32.cont [5/16] 0.0, 128
    %3057 = vxpose.xlu0.b32.cont [6/16] 0.0, 128
    %3058 = vxpose.xlu0.b32.cont [7/16] 0.0, 128
    %3059 = vxpose.xlu0.b32.cont [8/16] 0.0, 128
    %3060 = vxpose.xlu0.b32.cont [9/16] 0.0, 128
    %3061 = vxpose.xlu0.b32.cont [10/16] 0.0, 128
    %3062 = vxpose.xlu0.b32.cont [11/16] 0.0, 128
    %3063 = vxpose.xlu0.b32.cont [12/16] 0.0, 128
    %3064 = vxpose.xlu0.b32.cont [13/16] 0.0, 128
    %3065 = vxpose.xlu0.b32.cont [14/16] 0.0, 128
    %3066 = vxpose.xlu0.b32.cont [15/16] 0.0, 128
    %3067 = vxpose.xlu0.b32.end [16/16] 0.0, 128
    %v3068 = vpop.trf.xlu0
    %v3069 = vpop.trf.xlu0
    %v3070 = vpop.trf.xlu0
    %v3071 = vpop.trf.xlu0
    %v3072 = vpop.trf.xlu0
    %v3073 = vpop.trf.xlu0
    %v3074 = vpop.trf.xlu0
    %v3075 = vpop.trf.xlu0
    %v3076 = vpop.trf.xlu0
    %v3077 = vpop.trf.xlu0
    %v3078 = vpop.trf.xlu0
    %v3079 = vpop.trf.xlu0
    %v3080 = vpop.trf.xlu0
    %v3081 = vpop.trf.xlu0
    %v3082 = vpop.trf.xlu0
    %v3083 = vpop.trf.xlu0
    %3084 = vxpose.xlu0.b32.start [1/16] %v2868, 128
    %3085 = vxpose.xlu0.b32.cont [2/16] %v2869, 128
    %3086 = vxpose.xlu0.b32.cont [3/16] %v2870, 128
    %3087 = vxpose.xlu0.b32.cont [4/16] %v2871, 128
    %3088 = vxpose.xlu0.b32.cont [5/16] 0.0, 128
    %3089 = vxpose.xlu0.b32.cont [6/16] 0.0, 128
    %3090 = vxpose.xlu0.b32.cont [7/16] 0.0, 128
    %3091 = vxpose.xlu0.b32.cont [8/16] 0.0, 128
    %3092 = vxpose.xlu0.b32.cont [9/16] 0.0, 128
    %3093 = vxpose.xlu0.b32.cont [10/16] 0.0, 128
    %3094 = vxpose.xlu0.b32.cont [11/16] 0.0, 128
    %3095 = vxpose.xlu0.b32.cont [12/16] 0.0, 128
    %3096 = vxpose.xlu0.b32.cont [13/16] 0.0, 128
    %3097 = vxpose.xlu0.b32.cont [14/16] 0.0, 128
    %3098 = vxpose.xlu0.b32.cont [15/16] 0.0, 128
    %3099 = vxpose.xlu0.b32.end [16/16] 0.0, 128
    %v3100 = vpop.trf.xlu0
    %v3101 = vpop.trf.xlu0
    %v3102 = vpop.trf.xlu0
    %v3103 = vpop.trf.xlu0
    %v3104 = vpop.trf.xlu0
    %v3105 = vpop.trf.xlu0
    %v3106 = vpop.trf.xlu0
    %v3107 = vpop.trf.xlu0
    %v3108 = vpop.trf.xlu0
    %v3109 = vpop.trf.xlu0
    %v3110 = vpop.trf.xlu0
    %v3111 = vpop.trf.xlu0
    %v3112 = vpop.trf.xlu0
    %v3113 = vpop.trf.xlu0
    %v3114 = vpop.trf.xlu0
    %v3115 = vpop.trf.xlu0
    %3116 = vxpose.xlu0.b32.start [1/16] %v2872, 128
    %3117 = vxpose.xlu0.b32.cont [2/16] %v2873, 128
    %3118 = vxpose.xlu0.b32.cont [3/16] %v2874, 128
    %3119 = vxpose.xlu0.b32.cont [4/16] %v2875, 128
    %3120 = vxpose.xlu0.b32.cont [5/16] 0.0, 128
    %3121 = vxpose.xlu0.b32.cont [6/16] 0.0, 128
    %3122 = vxpose.xlu0.b32.cont [7/16] 0.0, 128
    %3123 = vxpose.xlu0.b32.cont [8/16] 0.0, 128
    %3124 = vxpose.xlu0.b32.cont [9/16] 0.0, 128
    %3125 = vxpose.xlu0.b32.cont [10/16] 0.0, 128
    %3126 = vxpose.xlu0.b32.cont [11/16] 0.0, 128
    %3127 = vxpose.xlu0.b32.cont [12/16] 0.0, 128
    %3128 = vxpose.xlu0.b32.cont [13/16] 0.0, 128
    %3129 = vxpose.xlu0.b32.cont [14/16] 0.0, 128
    %3130 = vxpose.xlu0.b32.cont [15/16] 0.0, 128
    %3131 = vxpose.xlu0.b32.end [16/16] 0.0, 128
    %v3132 = vpop.trf.xlu0
    %v3133 = vpop.trf.xlu0
    %v3134 = vpop.trf.xlu0
    %v3135 = vpop.trf.xlu0
    %v3136 = vpop.trf.xlu0
    %v3137 = vpop.trf.xlu0
    %v3138 = vpop.trf.xlu0
    %v3139 = vpop.trf.xlu0
    %v3140 = vpop.trf.xlu0
    %v3141 = vpop.trf.xlu0
    %v3142 = vpop.trf.xlu0
    %v3143 = vpop.trf.xlu0
    %v3144 = vpop.trf.xlu0
    %v3145 = vpop.trf.xlu0
    %v3146 = vpop.trf.xlu0
    %v3147 = vpop.trf.xlu0
    %3148 = vxpose.xlu0.b32.start [1/16] %v2876, 128
    %3149 = vxpose.xlu0.b32.cont [2/16] %v2877, 128
    %3150 = vxpose.xlu0.b32.cont [3/16] %v2878, 128
    %3151 = vxpose.xlu0.b32.cont [4/16] %v2879, 128
    %3152 = vxpose.xlu0.b32.cont [5/16] 0.0, 128
    %3153 = vxpose.xlu0.b32.cont [6/16] 0.0, 128
    %3154 = vxpose.xlu0.b32.cont [7/16] 0.0, 128
    %3155 = vxpose.xlu0.b32.cont [8/16] 0.0, 128
    %3156 = vxpose.xlu0.b32.cont [9/16] 0.0, 128
    %3157 = vxpose.xlu0.b32.cont [10/16] 0.0, 128
    %3158 = vxpose.xlu0.b32.cont [11/16] 0.0, 128
    %3159 = vxpose.xlu0.b32.cont [12/16] 0.0, 128
    %3160 = vxpose.xlu0.b32.cont [13/16] 0.0, 128
    %3161 = vxpose.xlu0.b32.cont [14/16] 0.0, 128
    %3162 = vxpose.xlu0.b32.cont [15/16] 0.0, 128
    %3163 = vxpose.xlu0.b32.end [16/16] 0.0, 128
    %v3164 = vpop.trf.xlu0
    %v3165 = vpop.trf.xlu0
    %v3166 = vpop.trf.xlu0
    %v3167 = vpop.trf.xlu0
    %v3168 = vpop.trf.xlu0
    %v3169 = vpop.trf.xlu0
    %v3170 = vpop.trf.xlu0
    %v3171 = vpop.trf.xlu0
    %v3172 = vpop.trf.xlu0
    %v3173 = vpop.trf.xlu0
    %v3174 = vpop.trf.xlu0
    %v3175 = vpop.trf.xlu0
    %v3176 = vpop.trf.xlu0
    %v3177 = vpop.trf.xlu0
    %v3178 = vpop.trf.xlu0
    %v3179 = vpop.trf.xlu0
    %3180 = vxpose.xlu0.b32.start [1/16] %v2880, 128
    %3181 = vxpose.xlu0.b32.cont [2/16] %v2881, 128
    %3182 = vxpose.xlu0.b32.cont [3/16] %v2882, 128
    %3183 = vxpose.xlu0.b32.cont [4/16] %v2883, 128
    %3184 = vxpose.xlu0.b32.cont [5/16] 0.0, 128
    %3185 = vxpose.xlu0.b32.cont [6/16] 0.0, 128
    %3186 = vxpose.xlu0.b32.cont [7/16] 0.0, 128
    %3187 = vxpose.xlu0.b32.cont [8/16] 0.0, 128
    %3188 = vxpose.xlu0.b32.cont [9/16] 0.0, 128
    %3189 = vxpose.xlu0.b32.cont [10/16] 0.0, 128
    %3190 = vxpose.xlu0.b32.cont [11/16] 0.0, 128
    %3191 = vxpose.xlu0.b32.cont [12/16] 0.0, 128
    %3192 = vxpose.xlu0.b32.cont [13/16] 0.0, 128
    %3193 = vxpose.xlu0.b32.cont [14/16] 0.0, 128
    %3194 = vxpose.xlu0.b32.cont [15/16] 0.0, 128
    %3195 = vxpose.xlu0.b32.end [16/16] 0.0, 128
    %v3196 = vpop.trf.xlu0
    %v3197 = vpop.trf.xlu0
    %v3198 = vpop.trf.xlu0
    %v3199 = vpop.trf.xlu0
    %v3200 = vpop.trf.xlu0
    %v3201 = vpop.trf.xlu0
    %v3202 = vpop.trf.xlu0
    %v3203 = vpop.trf.xlu0
    %v3204 = vpop.trf.xlu0
    %v3205 = vpop.trf.xlu0
    %v3206 = vpop.trf.xlu0
    %v3207 = vpop.trf.xlu0
    %v3208 = vpop.trf.xlu0
    %v3209 = vpop.trf.xlu0
    %v3210 = vpop.trf.xlu0
    %v3211 = vpop.trf.xlu0
    %3212 = vxpose.xlu0.b32.start [1/16] %v2884, 128
    %3213 = vxpose.xlu0.b32.cont [2/16] %v2885, 128
    %3214 = vxpose.xlu0.b32.cont [3/16] %v2886, 128
    %3215 = vxpose.xlu0.b32.cont [4/16] %v2887, 128
    %3216 = vxpose.xlu0.b32.cont [5/16] 0.0, 128
    %3217 = vxpose.xlu0.b32.cont [6/16] 0.0, 128
    %3218 = vxpose.xlu0.b32.cont [7/16] 0.0, 128
    %3219 = vxpose.xlu0.b32.cont [8/16] 0.0, 128
    %3220 = vxpose.xlu0.b32.cont [9/16] 0.0, 128
    %3221 = vxpose.xlu0.b32.cont [10/16] 0.0, 128
    %3222 = vxpose.xlu0.b32.cont [11/16] 0.0, 128
    %3223 = vxpose.xlu0.b32.cont [12/16] 0.0, 128
    %3224 = vxpose.xlu0.b32.cont [13/16] 0.0, 128
    %3225 = vxpose.xlu0.b32.cont [14/16] 0.0, 128
    %3226 = vxpose.xlu0.b32.cont [15/16] 0.0, 128
    %3227 = vxpose.xlu0.b32.end [16/16] 0.0, 128
    %v3228 = vpop.trf.xlu0
    %v3229 = vpop.trf.xlu0
    %v3230 = vpop.trf.xlu0
    %v3231 = vpop.trf.xlu0
    %v3232 = vpop.trf.xlu0
    %v3233 = vpop.trf.xlu0
    %v3234 = vpop.trf.xlu0
    %v3235 = vpop.trf.xlu0
    %v3236 = vpop.trf.xlu0
    %v3237 = vpop.trf.xlu0
    %v3238 = vpop.trf.xlu0
    %v3239 = vpop.trf.xlu0
    %v3240 = vpop.trf.xlu0
    %v3241 = vpop.trf.xlu0
    %v3242 = vpop.trf.xlu0
    %v3243 = vpop.trf.xlu0
    %3244 = vxpose.xlu0.b32.start [1/16] %v2888, 128
    %3245 = vxpose.xlu0.b32.cont [2/16] %v2889, 128
    %3246 = vxpose.xlu0.b32.cont [3/16] %v2890, 128
    %3247 = vxpose.xlu0.b32.cont [4/16] %v2891, 128
    %3248 = vxpose.xlu0.b32.cont [5/16] 0.0, 128
    %3249 = vxpose.xlu0.b32.cont [6/16] 0.0, 128
    %3250 = vxpose.xlu0.b32.cont [7/16] 0.0, 128
    %3251 = vxpose.xlu0.b32.cont [8/16] 0.0, 128
    %3252 = vxpose.xlu0.b32.cont [9/16] 0.0, 128
    %3253 = vxpose.xlu0.b32.cont [10/16] 0.0, 128
    %3254 = vxpose.xlu0.b32.cont [11/16] 0.0, 128
    %3255 = vxpose.xlu0.b32.cont [12/16] 0.0, 128
    %3256 = vxpose.xlu0.b32.cont [13/16] 0.0, 128
    %3257 = vxpose.xlu0.b32.cont [14/16] 0.0, 128
    %3258 = vxpose.xlu0.b32.cont [15/16] 0.0, 128
    %3259 = vxpose.xlu0.b32.end [16/16] 0.0, 128
    %v3260 = vpop.trf.xlu0
    %v3261 = vpop.trf.xlu0
    %v3262 = vpop.trf.xlu0
    %v3263 = vpop.trf.xlu0
    %v3264 = vpop.trf.xlu0
    %v3265 = vpop.trf.xlu0
    %v3266 = vpop.trf.xlu0
    %v3267 = vpop.trf.xlu0
    %v3268 = vpop.trf.xlu0
    %v3269 = vpop.trf.xlu0
    %v3270 = vpop.trf.xlu0
    %v3271 = vpop.trf.xlu0
    %v3272 = vpop.trf.xlu0
    %v3273 = vpop.trf.xlu0
    %v3274 = vpop.trf.xlu0
    %v3275 = vpop.trf.xlu0
    %v3277 = vsel %vm129, %v2908, 0
    %v3280 = vsel %vm129, %v2909, 0
    %v3283 = vsel %vm129, %v2910, 0
    %v3286 = vsel %vm129, %v2911, 0
    %v3289 = vsel %vm129, %v2940, 0
    %v3292 = vsel %vm129, %v2941, 0
    %v3295 = vsel %vm129, %v2942, 0
    %v3298 = vsel %vm129, %v2943, 0
    %v3301 = vsel %vm129, %v2972, 0
    %v3304 = vsel %vm129, %v2973, 0
    %v3307 = vsel %vm129, %v2974, 0
    %v3310 = vsel %vm129, %v2975, 0
    %v3313 = vsel %vm129, %v3004, 0
    %v3316 = vsel %vm129, %v3005, 0
    %v3319 = vsel %vm129, %v3006, 0
    %v3322 = vsel %vm129, %v3007, 0
    %v3325 = vsel %vm129, %v3036, 0
    %v3328 = vsel %vm129, %v3037, 0
    %v3331 = vsel %vm129, %v3038, 0
    %v3334 = vsel %vm129, %v3039, 0
    %v3337 = vsel %vm129, %v3068, 0
    %v3340 = vsel %vm129, %v3069, 0
    %v3343 = vsel %vm129, %v3070, 0
    %v3346 = vsel %vm129, %v3071, 0
    %3348 = vmatprep.subr.mxu0 0.0
    %3349 = vmatpush1.msra.mxu0 %v121
    %3350 = vmatprep.subr.mxu0 0.0
    %3351 = vmatpush1.msra.mxu0 %v122
    %3352 = vmatprep.subr.mxu0 0.0
    %3353 = vmatpush1.msra.mxu0 %v123
    %3354 = vmatprep.subr.mxu0 0.0
    %3355 = vmatpush1.msra.mxu0 %v124
    %3356 = vmatprep.subr.mxu0 0.0
    %3357 = vmatpush1.msra.mxu0 0.0
    %3358 = vmatprep.subr.mxu0 0.0
    %3359 = vmatpush1.msra.mxu0 0.0
    %3360 = vmatprep.subr.mxu0 0.0
    %3361 = vmatpush1.msra.mxu0 0.0
    %3362 = vmatprep.subr.mxu0 0.0
    %3363 = vmatpush1.msra.mxu0 0.0
    %3364 = vmatprep.subr.mxu0 0.0
    %3365 = vmatpush1.msra.mxu0 0.0
    %3366 = vmatprep.subr.mxu0 0.0
    %3367 = vmatpush1.msra.mxu0 0.0
    %3368 = vmatprep.subr.mxu0 0.0
    %3369 = vmatpush1.msra.mxu0 0.0
    %3370 = vmatprep.subr.mxu0 0.0
    %3371 = vmatpush1.msra.mxu0 0.0
    %3372 = vmatprep.subr.mxu0 0.0
    %3373 = vmatpush1.msra.mxu0 0.0
    %3374 = vmatprep.subr.mxu0 0.0
    %3375 = vmatpush1.msra.mxu0 0.0
    %3376 = vmatprep.subr.mxu0 0.0
    %3377 = vmatpush1.msra.mxu0 0.0
    %3378 = vmatprep.subr.mxu0 0.0
    %3379 = vmatpush1.msra.mxu0 0.0
    %3380 = vmatprep.subr.mxu0 0.0
    %3381 = vmatpush1.msra.mxu0 0.0
    %3382 = vmatprep.subr.mxu0 0.0
    %3383 = vmatpush1.msra.mxu0 0.0
    %3384 = vmatprep.subr.mxu0 0.0
    %3385 = vmatpush1.msra.mxu0 0.0
    %3386 = vmatprep.subr.mxu0 0.0
    %3387 = vmatpush1.msra.mxu0 0.0
    %3388 = vmatprep.subr.mxu0 0.0
    %3389 = vmatpush1.msra.mxu0 0.0
    %3390 = vmatprep.subr.mxu0 0.0
    %3391 = vmatpush1.msra.mxu0 0.0
    %3392 = vmatprep.subr.mxu0 0.0
    %3393 = vmatpush1.msra.mxu0 0.0
    %3394 = vmatprep.subr.mxu0 0.0
    %3395 = vmatpush1.msra.mxu0 0.0
    %3396 = vmatprep.subr.mxu0 0.0
    %3397 = vmatpush1.msra.mxu0 0.0
    %3398 = vmatprep.subr.mxu0 0.0
    %3399 = vmatpush1.msra.mxu0 0.0
    %3400 = vmatprep.subr.mxu0 0.0
    %3401 = vmatpush1.msra.mxu0 0.0
    %3402 = vmatprep.subr.mxu0 0.0
    %3403 = vmatpush1.msra.mxu0 0.0
    %3404 = vmatprep.subr.mxu0 0.0
    %3405 = vmatpush1.msra.mxu0 0.0
    %3406 = vmatprep.subr.mxu0 0.0
    %3407 = vmatpush1.msra.mxu0 0.0
    %3408 = vmatprep.subr.mxu0 0.0
    %3409 = vmatpush1.msra.mxu0 0.0
    %3410 = vmatprep.subr.mxu0 0.0
    %3411 = vmatpush1.msra.mxu0 0.0
    %3412 = vmatprep.mubr.f32.mxu0 0.0
    %3413 = vmatmul.mubr.f32.gmra.mrb[0].mxu0 %v3277
    %v3414 = vpop.f32.mrb[0].mxu0
    %v3415 = vadd.f32 0.0, %v3414
    %v3416 = vpop.f32.mrb[0].mxu0
    %3417 = vmatprep.mubr.f32.mxu0 0.0
    %3418 = vmatmul.mubr.f32.gmra.mrb[0].mxu0 %v3280
    %v3419 = vpop.f32.mrb[0].mxu0
    %v3420 = vadd.f32 0.0, %v3419
    %v3421 = vpop.f32.mrb[0].mxu0
    %3422 = vmatprep.mubr.f32.mxu0 0.0
    %3423 = vmatmul.mubr.f32.gmra.mrb[0].mxu0 %v3283
    %v3424 = vpop.f32.mrb[0].mxu0
    %v3425 = vadd.f32 0.0, %v3424
    %v3426 = vpop.f32.mrb[0].mxu0
    %3427 = vmatprep.mubr.f32.mxu0 0.0
    %3428 = vmatmul.mubr.f32.gmra.mrb[0].mxu0 %v3286
    %v3429 = vpop.f32.mrb[0].mxu0
    %v3430 = vadd.f32 0.0, %v3429
    %v3431 = vpop.f32.mrb[0].mxu0
    %3432 = vmatprep.mubr.f32.mxu0 0.0
    %3433 = vmatmul.mubr.f32.gmra.mrb[0].mxu0 %v3289
    %v3434 = vpop.f32.mrb[0].mxu0
    %v3435 = vadd.f32 0.0, %v3434
    %v3436 = vpop.f32.mrb[0].mxu0
    %3437 = vmatprep.mubr.f32.mxu0 0.0
    %3438 = vmatmul.mubr.f32.gmra.mrb[0].mxu0 %v3292
    %v3439 = vpop.f32.mrb[0].mxu0
    %v3440 = vadd.f32 0.0, %v3439
    %v3441 = vpop.f32.mrb[0].mxu0
    %3442 = vmatprep.mubr.f32.mxu0 0.0
    %3443 = vmatmul.mubr.f32.gmra.mrb[0].mxu0 %v3295
    %v3444 = vpop.f32.mrb[0].mxu0
    %v3445 = vadd.f32 0.0, %v3444
    %v3446 = vpop.f32.mrb[0].mxu0
    %3447 = vmatprep.mubr.f32.mxu0 0.0
    %3448 = vmatmul.mubr.f32.gmra.mrb[0].mxu0 %v3298
    %v3449 = vpop.f32.mrb[0].mxu0
    %v3450 = vadd.f32 0.0, %v3449
    %v3451 = vpop.f32.mrb[0].mxu0
    %3452 = vmatprep.mubr.f32.mxu0 0.0
    %3453 = vmatmul.mubr.f32.gmra.mrb[0].mxu0 %v3301
    %v3454 = vpop.f32.mrb[0].mxu0
    %v3455 = vadd.f32 0.0, %v3454
    %v3456 = vpop.f32.mrb[0].mxu0
    %3457 = vmatprep.mubr.f32.mxu0 0.0
    %3458 = vmatmul.mubr.f32.gmra.mrb[0].mxu0 %v3304
    %v3459 = vpop.f32.mrb[0].mxu0
    %v3460 = vadd.f32 0.0, %v3459
    %v3461 = vpop.f32.mrb[0].mxu0
    %3462 = vmatprep.mubr.f32.mxu0 0.0
    %3463 = vmatmul.mubr.f32.gmra.mrb[0].mxu0 %v3307
    %v3464 = vpop.f32.mrb[0].mxu0
    %v3465 = vadd.f32 0.0, %v3464
    %v3466 = vpop.f32.mrb[0].mxu0
    %3467 = vmatprep.mubr.f32.mxu0 0.0
    %3468 = vmatmul.mubr.f32.gmra.mrb[0].mxu0 %v3310
    %v3469 = vpop.f32.mrb[0].mxu0
    %v3470 = vadd.f32 0.0, %v3469
    %v3471 = vpop.f32.mrb[0].mxu0
    %3472 = vmatprep.mubr.f32.mxu0 0.0
    %3473 = vmatmul.mubr.f32.gmra.mrb[0].mxu0 %v3313
    %v3474 = vpop.f32.mrb[0].mxu0
    %v3475 = vadd.f32 0.0, %v3474
    %v3476 = vpop.f32.mrb[0].mxu0
    %3477 = vmatprep.mubr.f32.mxu0 0.0
    %3478 = vmatmul.mubr.f32.gmra.mrb[0].mxu0 %v3316
    %v3479 = vpop.f32.mrb[0].mxu0
    %v3480 = vadd.f32 0.0, %v3479
    %v3481 = vpop.f32.mrb[0].mxu0
    %3482 = vmatprep.mubr.f32.mxu0 0.0
    %3483 = vmatmul.mubr.f32.gmra.mrb[0].mxu0 %v3319
    %v3484 = vpop.f32.mrb[0].mxu0
    %v3485 = vadd.f32 0.0, %v3484
    %v3486 = vpop.f32.mrb[0].mxu0
    %3487 = vmatprep.mubr.f32.mxu0 0.0
    %3488 = vmatmul.mubr.f32.gmra.mrb[0].mxu0 %v3322
    %v3489 = vpop.f32.mrb[0].mxu0
    %v3490 = vadd.f32 0.0, %v3489
    %v3491 = vpop.f32.mrb[0].mxu0
    %3492 = vmatprep.mubr.f32.mxu0 0.0
    %3493 = vmatmul.mubr.f32.gmra.mrb[0].mxu0 %v3325
    %v3494 = vpop.f32.mrb[0].mxu0
    %v3495 = vadd.f32 0.0, %v3494
    %v3496 = vpop.f32.mrb[0].mxu0
    %3497 = vmatprep.mubr.f32.mxu0 0.0
    %3498 = vmatmul.mubr.f32.gmra.mrb[0].mxu0 %v3328
    %v3499 = vpop.f32.mrb[0].mxu0
    %v3500 = vadd.f32 0.0, %v3499
    %v3501 = vpop.f32.mrb[0].mxu0
    %3502 = vmatprep.mubr.f32.mxu0 0.0
    %3503 = vmatmul.mubr.f32.gmra.mrb[0].mxu0 %v3331
    %v3504 = vpop.f32.mrb[0].mxu0
    %v3505 = vadd.f32 0.0, %v3504
    %v3506 = vpop.f32.mrb[0].mxu0
    %3507 = vmatprep.mubr.f32.mxu0 0.0
    %3508 = vmatmul.mubr.f32.gmra.mrb[0].mxu0 %v3334
    %v3509 = vpop.f32.mrb[0].mxu0
    %v3510 = vadd.f32 0.0, %v3509
    %v3511 = vpop.f32.mrb[0].mxu0
    %3512 = vmatprep.mubr.f32.mxu0 0.0
    %3513 = vmatmul.mubr.f32.gmra.mrb[0].mxu0 %v3337
    %v3514 = vpop.f32.mrb[0].mxu0
    %v3515 = vadd.f32 0.0, %v3514
    %v3516 = vpop.f32.mrb[0].mxu0
    %3517 = vmatprep.mubr.f32.mxu0 0.0
    %3518 = vmatmul.mubr.f32.gmra.mrb[0].mxu0 %v3340
    %v3519 = vpop.f32.mrb[0].mxu0
    %v3520 = vadd.f32 0.0, %v3519
    %v3521 = vpop.f32.mrb[0].mxu0
    %3522 = vmatprep.mubr.f32.mxu0 0.0
    %3523 = vmatmul.mubr.f32.gmra.mrb[0].mxu0 %v3343
    %v3524 = vpop.f32.mrb[0].mxu0
    %v3525 = vadd.f32 0.0, %v3524
    %v3526 = vpop.f32.mrb[0].mxu0
    %3527 = vmatprep.mubr.f32.mxu0 0.0
    %3528 = vmatmul.mubr.f32.gmra.mrb[0].mxu0 %v3346
    %v3529 = vpop.f32.mrb[0].mxu0
    %v3530 = vadd.f32 0.0, %v3529
    %v3531 = vpop.f32.mrb[0].mxu0
    %3532 = vdwg.mxu0
    %v3534 = vsel %vm129, %v3100, 0
    %v3537 = vsel %vm129, %v3101, 0
    %v3540 = vsel %vm129, %v3102, 0
    %v3543 = vsel %vm129, %v3103, 0
    %v3546 = vsel %vm129, %v3132, 0
    %v3549 = vsel %vm129, %v3133, 0
    %v3552 = vsel %vm129, %v3134, 0
    %v3555 = vsel %vm129, %v3135, 0
    %v3558 = vsel %vm129, %v3164, 0
    %v3561 = vsel %vm129, %v3165, 0
    %v3564 = vsel %vm129, %v3166, 0
    %v3567 = vsel %vm129, %v3167, 0
    %v3570 = vsel %vm129, %v3196, 0
    %v3573 = vsel %vm129, %v3197, 0
    %v3576 = vsel %vm129, %v3198, 0
    %v3579 = vsel %vm129, %v3199, 0
    %v3582 = vsel %vm129, %v3228, 0
    %v3585 = vsel %vm129, %v3229, 0
    %v3588 = vsel %vm129, %v3230, 0
    %v3591 = vsel %vm129, %v3231, 0
    %v3594 = vsel %vm129, %v3260, 0
    %v3597 = vsel %vm129, %v3261, 0
    %v3600 = vsel %vm129, %v3262, 0
    %v3603 = vsel %vm129, %v3263, 0
    %3605 = vmatprep.subr.mxu0 0.0
    %3606 = vmatpush1.msra.mxu0 %v125
    %3607 = vmatprep.subr.mxu0 0.0
    %3608 = vmatpush1.msra.mxu0 %v126
    %3609 = vmatprep.subr.mxu0 0.0
    %3610 = vmatpush1.msra.mxu0 %v127
    %3611 = vmatprep.subr.mxu0 0.0
    %3612 = vmatpush1.msra.mxu0 %v128
    %3613 = vmatprep.subr.mxu0 0.0
    %3614 = vmatpush1.msra.mxu0 0.0
    %3615 = vmatprep.subr.mxu0 0.0
    %3616 = vmatpush1.msra.mxu0 0.0
    %3617 = vmatprep.subr.mxu0 0.0
    %3618 = vmatpush1.msra.mxu0 0.0
    %3619 = vmatprep.subr.mxu0 0.0
    %3620 = vmatpush1.msra.mxu0 0.0
    %3621 = vmatprep.subr.mxu0 0.0
    %3622 = vmatpush1.msra.mxu0 0.0
    %3623 = vmatprep.subr.mxu0 0.0
    %3624 = vmatpush1.msra.mxu0 0.0
    %3625 = vmatprep.subr.mxu0 0.0
    %3626 = vmatpush1.msra.mxu0 0.0
    %3627 = vmatprep.subr.mxu0 0.0
    %3628 = vmatpush1.msra.mxu0 0.0
    %3629 = vmatprep.subr.mxu0 0.0
    %3630 = vmatpush1.msra.mxu0 0.0
    %3631 = vmatprep.subr.mxu0 0.0
    %3632 = vmatpush1.msra.mxu0 0.0
    %3633 = vmatprep.subr.mxu0 0.0
    %3634 = vmatpush1.msra.mxu0 0.0
    %3635 = vmatprep.subr.mxu0 0.0
    %3636 = vmatpush1.msra.mxu0 0.0
    %3637 = vmatprep.subr.mxu0 0.0
    %3638 = vmatpush1.msra.mxu0 0.0
    %3639 = vmatprep.subr.mxu0 0.0
    %3640 = vmatpush1.msra.mxu0 0.0
    %3641 = vmatprep.subr.mxu0 0.0
    %3642 = vmatpush1.msra.mxu0 0.0
    %3643 = vmatprep.subr.mxu0 0.0
    %3644 = vmatpush1.msra.mxu0 0.0
    %3645 = vmatprep.subr.mxu0 0.0
    %3646 = vmatpush1.msra.mxu0 0.0
    %3647 = vmatprep.subr.mxu0 0.0
    %3648 = vmatpush1.msra.mxu0 0.0
    %3649 = vmatprep.subr.mxu0 0.0
    %3650 = vmatpush1.msra.mxu0 0.0
    %3651 = vmatprep.subr.mxu0 0.0
    %3652 = vmatpush1.msra.mxu0 0.0
    %3653 = vmatprep.subr.mxu0 0.0
    %3654 = vmatpush1.msra.mxu0 0.0
    %3655 = vmatprep.subr.mxu0 0.0
    %3656 = vmatpush1.msra.mxu0 0.0
    %3657 = vmatprep.subr.mxu0 0.0
    %3658 = vmatpush1.msra.mxu0 0.0
    %3659 = vmatprep.subr.mxu0 0.0
    %3660 = vmatpush1.msra.mxu0 0.0
    %3661 = vmatprep.subr.mxu0 0.0
    %3662 = vmatpush1.msra.mxu0 0.0
    %3663 = vmatprep.subr.mxu0 0.0
    %3664 = vmatpush1.msra.mxu0 0.0
    %3665 = vmatprep.subr.mxu0 0.0
    %3666 = vmatpush1.msra.mxu0 0.0
    %3667 = vmatprep.subr.mxu0 0.0
    %3668 = vmatpush1.msra.mxu0 0.0
    %3669 = vmatprep.mubr.f32.mxu0 0.0
    %3670 = vmatmul.mubr.f32.gmra.mrb[0].mxu0 %v3534
    %v3671 = vpop.f32.mrb[0].mxu0
    %v3672 = vadd.f32 0.0, %v3671
    %v3673 = vpop.f32.mrb[0].mxu0
    %3674 = vmatprep.mubr.f32.mxu0 0.0
    %3675 = vmatmul.mubr.f32.gmra.mrb[0].mxu0 %v3537
    %v3676 = vpop.f32.mrb[0].mxu0
    %v3677 = vadd.f32 0.0, %v3676
    %v3678 = vpop.f32.mrb[0].mxu0
    %3679 = vmatprep.mubr.f32.mxu0 0.0
    %3680 = vmatmul.mubr.f32.gmra.mrb[0].mxu0 %v3540
    %v3681 = vpop.f32.mrb[0].mxu0
    %v3682 = vadd.f32 0.0, %v3681
    %v3683 = vpop.f32.mrb[0].mxu0
    %3684 = vmatprep.mubr.f32.mxu0 0.0
    %3685 = vmatmul.mubr.f32.gmra.mrb[0].mxu0 %v3543
    %v3686 = vpop.f32.mrb[0].mxu0
    %v3687 = vadd.f32 0.0, %v3686
    %v3688 = vpop.f32.mrb[0].mxu0
    %3689 = vmatprep.mubr.f32.mxu0 0.0
    %3690 = vmatmul.mubr.f32.gmra.mrb[0].mxu0 %v3546
    %v3691 = vpop.f32.mrb[0].mxu0
    %v3692 = vadd.f32 0.0, %v3691
    %v3693 = vpop.f32.mrb[0].mxu0
    %3694 = vmatprep.mubr.f32.mxu0 0.0
    %3695 = vmatmul.mubr.f32.gmra.mrb[0].mxu0 %v3549
    %v3696 = vpop.f32.mrb[0].mxu0
    %v3697 = vadd.f32 0.0, %v3696
    %v3698 = vpop.f32.mrb[0].mxu0
    %3699 = vmatprep.mubr.f32.mxu0 0.0
    %3700 = vmatmul.mubr.f32.gmra.mrb[0].mxu0 %v3552
    %v3701 = vpop.f32.mrb[0].mxu0
    %v3702 = vadd.f32 0.0, %v3701
    %v3703 = vpop.f32.mrb[0].mxu0
    %3704 = vmatprep.mubr.f32.mxu0 0.0
    %3705 = vmatmul.mubr.f32.gmra.mrb[0].mxu0 %v3555
    %v3706 = vpop.f32.mrb[0].mxu0
    %v3707 = vadd.f32 0.0, %v3706
    %v3708 = vpop.f32.mrb[0].mxu0
    %3709 = vmatprep.mubr.f32.mxu0 0.0
    %3710 = vmatmul.mubr.f32.gmra.mrb[0].mxu0 %v3558
    %v3711 = vpop.f32.mrb[0].mxu0
    %v3712 = vadd.f32 0.0, %v3711
    %v3713 = vpop.f32.mrb[0].mxu0
    %3714 = vmatprep.mubr.f32.mxu0 0.0
    %3715 = vmatmul.mubr.f32.gmra.mrb[0].mxu0 %v3561
    %v3716 = vpop.f32.mrb[0].mxu0
    %v3717 = vadd.f32 0.0, %v3716
    %v3718 = vpop.f32.mrb[0].mxu0
    %3719 = vmatprep.mubr.f32.mxu0 0.0
    %3720 = vmatmul.mubr.f32.gmra.mrb[0].mxu0 %v3564
    %v3721 = vpop.f32.mrb[0].mxu0
    %v3722 = vadd.f32 0.0, %v3721
    %v3723 = vpop.f32.mrb[0].mxu0
    %3724 = vmatprep.mubr.f32.mxu0 0.0
    %3725 = vmatmul.mubr.f32.gmra.mrb[0].mxu0 %v3567
    %v3726 = vpop.f32.mrb[0].mxu0
    %v3727 = vadd.f32 0.0, %v3726
    %v3728 = vpop.f32.mrb[0].mxu0
    %3729 = vmatprep.mubr.f32.mxu0 0.0
    %3730 = vmatmul.mubr.f32.gmra.mrb[0].mxu0 %v3570
    %v3731 = vpop.f32.mrb[0].mxu0
    %v3732 = vadd.f32 0.0, %v3731
    %v3733 = vpop.f32.mrb[0].mxu0
    %3734 = vmatprep.mubr.f32.mxu0 0.0
    %3735 = vmatmul.mubr.f32.gmra.mrb[0].mxu0 %v3573
    %v3736 = vpop.f32.mrb[0].mxu0
    %v3737 = vadd.f32 0.0, %v3736
    %v3738 = vpop.f32.mrb[0].mxu0
    %3739 = vmatprep.mubr.f32.mxu0 0.0
    %3740 = vmatmul.mubr.f32.gmra.mrb[0].mxu0 %v3576
    %v3741 = vpop.f32.mrb[0].mxu0
    %v3742 = vadd.f32 0.0, %v3741
    %v3743 = vpop.f32.mrb[0].mxu0
    %3744 = vmatprep.mubr.f32.mxu0 0.0
    %3745 = vmatmul.mubr.f32.gmra.mrb[0].mxu0 %v3579
    %v3746 = vpop.f32.mrb[0].mxu0
    %v3747 = vadd.f32 0.0, %v3746
    %v3748 = vpop.f32.mrb[0].mxu0
    %3749 = vmatprep.mubr.f32.mxu0 0.0
    %3750 = vmatmul.mubr.f32.gmra.mrb[0].mxu0 %v3582
    %v3751 = vpop.f32.mrb[0].mxu0
    %v3752 = vadd.f32 0.0, %v3751
    %v3753 = vpop.f32.mrb[0].mxu0
    %3754 = vmatprep.mubr.f32.mxu0 0.0
    %3755 = vmatmul.mubr.f32.gmra.mrb[0].mxu0 %v3585
    %v3756 = vpop.f32.mrb[0].mxu0
    %v3757 = vadd.f32 0.0, %v3756
    %v3758 = vpop.f32.mrb[0].mxu0
    %3759 = vmatprep.mubr.f32.mxu0 0.0
    %3760 = vmatmul.mubr.f32.gmra.mrb[0].mxu0 %v3588
    %v3761 = vpop.f32.mrb[0].mxu0
    %v3762 = vadd.f32 0.0, %v3761
    %v3763 = vpop.f32.mrb[0].mxu0
    %3764 = vmatprep.mubr.f32.mxu0 0.0
    %3765 = vmatmul.mubr.f32.gmra.mrb[0].mxu0 %v3591
    %v3766 = vpop.f32.mrb[0].mxu0
    %v3767 = vadd.f32 0.0, %v3766
    %v3768 = vpop.f32.mrb[0].mxu0
    %3769 = vmatprep.mubr.f32.mxu0 0.0
    %3770 = vmatmul.mubr.f32.gmra.mrb[0].mxu0 %v3594
    %v3771 = vpop.f32.mrb[0].mxu0
    %v3772 = vadd.f32 0.0, %v3771
    %v3773 = vpop.f32.mrb[0].mxu0
    %3774 = vmatprep.mubr.f32.mxu0 0.0
    %3775 = vmatmul.mubr.f32.gmra.mrb[0].mxu0 %v3597
    %v3776 = vpop.f32.mrb[0].mxu0
    %v3777 = vadd.f32 0.0, %v3776
    %v3778 = vpop.f32.mrb[0].mxu0
    %3779 = vmatprep.mubr.f32.mxu0 0.0
    %3780 = vmatmul.mubr.f32.gmra.mrb[0].mxu0 %v3600
    %v3781 = vpop.f32.mrb[0].mxu0
    %v3782 = vadd.f32 0.0, %v3781
    %v3783 = vpop.f32.mrb[0].mxu0
    %3784 = vmatprep.mubr.f32.mxu0 0.0
    %3785 = vmatmul.mubr.f32.gmra.mrb[0].mxu0 %v3603
    %v3786 = vpop.f32.mrb[0].mxu0
    %v3787 = vadd.f32 0.0, %v3786
    %v3788 = vpop.f32.mrb[0].mxu0
    %3789 = vdwg.mxu0
    %v3790 = vsub.f32 %v3415, %v3672
    %v3791 = vsub.f32 %v3420, %v3677
    %v3792 = vsub.f32 %v3425, %v3682
    %v3793 = vsub.f32 %v3430, %v3687
    %v3794 = vsub.f32 %v3435, %v3692
    %v3795 = vsub.f32 %v3440, %v3697
    %v3796 = vsub.f32 %v3445, %v3702
    %v3797 = vsub.f32 %v3450, %v3707
    %v3798 = vsub.f32 %v3455, %v3712
    %v3799 = vsub.f32 %v3460, %v3717
    %v3800 = vsub.f32 %v3465, %v3722
    %v3801 = vsub.f32 %v3470, %v3727
    %v3802 = vsub.f32 %v3475, %v3732
    %v3803 = vsub.f32 %v3480, %v3737
    %v3804 = vsub.f32 %v3485, %v3742
    %v3805 = vsub.f32 %v3490, %v3747
    %v3806 = vsub.f32 %v3495, %v3752
    %v3807 = vsub.f32 %v3500, %v3757
    %v3808 = vsub.f32 %v3505, %v3762
    %v3809 = vsub.f32 %v3510, %v3767
    %v3810 = vsub.f32 %v3515, %v3772
    %v3811 = vsub.f32 %v3520, %v3777
    %v3812 = vsub.f32 %v3525, %v3782
    %v3813 = vsub.f32 %v3530, %v3787
    %v3814 = vmul.f32 %v3790, 0.0009765625
    %v3815 = vmul.f32 %v3791, 0.0009765625
    %v3816 = vmul.f32 %v3792, 0.0009765625
    %v3817 = vmul.f32 %v3793, 0.0009765625
    %v3818 = vmul.f32 %v3794, 0.0009765625
    %v3819 = vmul.f32 %v3795, 0.0009765625
    %v3820 = vmul.f32 %v3796, 0.0009765625
    %v3821 = vmul.f32 %v3797, 0.0009765625
    %v3822 = vmul.f32 %v3798, 0.0009765625
    %v3823 = vmul.f32 %v3799, 0.0009765625
    %v3824 = vmul.f32 %v3800, 0.0009765625
    %v3825 = vmul.f32 %v3801, 0.0009765625
    %v3826 = vmul.f32 %v3802, 0.0009765625
    %v3827 = vmul.f32 %v3803, 0.0009765625
    %v3828 = vmul.f32 %v3804, 0.0009765625
    %v3829 = vmul.f32 %v3805, 0.0009765625
    %v3830 = vmul.f32 %v3806, 0.0009765625
    %v3831 = vmul.f32 %v3807, 0.0009765625
    %v3832 = vmul.f32 %v3808, 0.0009765625
    %v3833 = vmul.f32 %v3809, 0.0009765625
    %v3834 = vmul.f32 %v3810, 0.0009765625
    %v3835 = vmul.f32 %v3811, 0.0009765625
    %v3836 = vmul.f32 %v3812, 0.0009765625
    %v3837 = vmul.f32 %v3813, 0.0009765625
    %3838 = vst.msk [vmem:[#allocation10] sm:$0xff] %vm129, %v3814
    %3839 = vst.msk [vmem:[#allocation10 + $0x8] sm:$0xff] %vm129, %v3815
    %3840 = vst.msk [vmem:[#allocation10 + $0x10] sm:$0xff] %vm129, %v3816
    %3841 = vst.msk [vmem:[#allocation10 + $0x18] sm:$0xff] %vm129, %v3817
    %3842 = vst.msk [vmem:[#allocation10 + $0x20] sm:$0xff] %vm129, %v3818
    %3843 = vst.msk [vmem:[#allocation10 + $0x28] sm:$0xff] %vm129, %v3819
    %3844 = vst.msk [vmem:[#allocation10 + $0x30] sm:$0xff] %vm129, %v3820
    %3845 = vst.msk [vmem:[#allocation10 + $0x38] sm:$0xff] %vm129, %v3821
    %3846 = vst.msk [vmem:[#allocation10 + $0x40] sm:$0xff] %vm129, %v3822
    %3847 = vst.msk [vmem:[#allocation10 + $0x48] sm:$0xff] %vm129, %v3823
    %3848 = vst.msk [vmem:[#allocation10 + $0x50] sm:$0xff] %vm129, %v3824
    %3849 = vst.msk [vmem:[#allocation10 + $0x58] sm:$0xff] %vm129, %v3825
    %3850 = vst.msk [vmem:[#allocation10 + $0x60] sm:$0xff] %vm129, %v3826
    %3851 = vst.msk [vmem:[#allocation10 + $0x68] sm:$0xff] %vm129, %v3827
    %3852 = vst.msk [vmem:[#allocation10 + $0x70] sm:$0xff] %vm129, %v3828
    %3853 = vst.msk [vmem:[#allocation10 + $0x78] sm:$0xff] %vm129, %v3829
    %3854 = vst.msk [vmem:[#allocation10 + $0x80] sm:$0xff] %vm129, %v3830
    %3855 = vst.msk [vmem:[#allocation10 + $0x88] sm:$0xff] %vm129, %v3831
    %3856 = vst.msk [vmem:[#allocation10 + $0x90] sm:$0xff] %vm129, %v3832
    %3857 = vst.msk [vmem:[#allocation10 + $0x98] sm:$0xff] %vm129, %v3833
    %3858 = vst.msk [vmem:[#allocation10 + $0xa0] sm:$0xff] %vm129, %v3834
    %3859 = vst.msk [vmem:[#allocation10 + $0xa8] sm:$0xff] %vm129, %v3835
    %3860 = vst.msk [vmem:[#allocation10 + $0xb0] sm:$0xff] %vm129, %v3836
    %3861 = vst.msk [vmem:[#allocation10 + $0xb8] sm:$0xff] %vm129, %v3837
    // Predicated region
    $region34: #{tpu_custom_call.1} parent=1 // pred_check
      _
    $region35: #{tpu_custom_call.1} parent=1 // pred_check_branch
      %3863 = sbr.rel (0) target = $region37
    $region36: #{tpu_custom_call.1} parent=1 // pred_region
      %s3865 = ssub.s32 3072, 3072
      %3866 = vsyncadd [#allocation4], %s3865
      %s3867 = sshll.u32 [#allocation10], 4
      %s3868 = int_to_ptr.vmem [resolvable:$true] %s3867
      %3873 = dma.vmem_to_hbm [thread:$0]  %s3868, 3072, %s4, [#allocation4], 128, 128, 8
    $region37: #{tpu_custom_call.1} parent=1 // pred_fallthru
      _
    // Predicated region
    $region38: #{tpu_custom_call.1} parent=1 // pred_check
      _
    $region39: #{tpu_custom_call.1} parent=1 // pred_check_branch
      %3875 = sbr.rel (0) target = $region41
    $region40: #{tpu_custom_call.1} parent=1 // pred_region
      %3876 = dma.done [#allocation4], 3072
    $region41: #{tpu_custom_call.1} parent=1 // pred_fallthru
      _
    %3877 = vsyncpa [#allocation3], 1
    %3878 = vsyncpa [#allocation6], 1
    %3879 = vsyncpa [#allocation9], 1
    %3880 = vsyncpa [#allocation4], 1

</llo_original>
